<compile_context>
chip_gen: v6e
topology: v6e:2x2x1
jax: 0.10.0
libtpu: 0.0.40
codegen_flags: <defaults>
</compile_context>

<pallas_src>
import math
from functools import partial

import jax
import jax.numpy as jnp
from jax.experimental import pallas as pl
from jax.experimental.pallas import tpu as pltpu


_VMEM_LIMIT = 48 * 1024 * 1024   # <= v7x physical (64 MiB), > default for v5e/v6e
_MAX_BATCH_TILE = 128            # rows per batch tile (sublane-dense, MXU-friendly)
_MAX_T_CHUNK = 32                # time steps processed per grid point


def _round_up(x, m):
    return ((x + m - 1) // m) * m


# ----------------------------------------------------------------------------
# in-kernel helpers
# ----------------------------------------------------------------------------
def _gelu(x):
    c = 0.7978845608028654  # sqrt(2/pi)
    return 0.5 * x * (1.0 + jnp.tanh(c * (x + 0.044715 * x * x * x)))


def _slstm_step(gx_t, whh, h, c, H):
    """One sLSTM step. gx_t: (tb,4H) f32; whh: (H,4H) bf16; h,c: (tb,H) f32."""
    z = gx_t + jnp.dot(h.astype(jnp.bfloat16), whh,
                       preferred_element_type=jnp.float32)
    # fused gate pre-activations -> static lane slices (order: i, f, g, o)
    i_g = jnp.exp(z[:, 0 * H:1 * H])
    f_g = jnp.exp(z[:, 1 * H:2 * H])
    g_g = jnp.tanh(z[:, 2 * H:3 * H])
    o_g = jax.nn.sigmoid(z[:, 3 * H:4 * H])
    c_new = f_g * c + i_g * g_g
    h_new = o_g * jnp.tanh(c_new)
    return h_new, c_new


def _block_post_rows(h, x_res, pw, pb, g, b):
    """proj -> GELU -> residual add -> LayerNorm (eps=1e-5) on (tb,*) rows."""
    proj = jnp.dot(h.astype(jnp.bfloat16), pw,
                   preferred_element_type=jnp.float32) + pb
    y = _gelu(proj) + x_res
    mean = jnp.mean(y, axis=-1, keepdims=True)
    var = jnp.mean(jnp.square(y - mean), axis=-1, keepdims=True)
    y = (y - mean) * jax.lax.rsqrt(var + 1e-5)
    return y * g + b


def _init_state(h_ref, c_ref):
    @pl.when(pl.program_id(1) == 0)
    def _():
        h_ref[...] = jnp.zeros_like(h_ref)
        c_ref[...] = jnp.zeros_like(c_ref)


# ----------------------------------------------------------------------------
# Pallas kernels
# ----------------------------------------------------------------------------
def _matmul_bias_kernel(x_ref, w_ref, b_ref, out_ref):
    out_ref[...] = (
        jnp.dot(x_ref[...].astype(jnp.bfloat16),
                w_ref[...].astype(jnp.bfloat16),
                preferred_element_type=jnp.float32)
        + b_ref[...]
    )


def _slstm_plain_kernel(T, gx_ref, whh_ref, hseq_ref, h_ref, c_ref):
    # plain sLSTM layer: emits the hidden sequence for the next layer.
    Tc = gx_ref.shape[0]
    H = whh_ref.shape[0]
    _init_state(h_ref, c_ref)
    valid = jnp.minimum(Tc, T - pl.program_id(1) * Tc)
    whh = whh_ref[...]

    def body(t, carry):
        h, c = carry
        h_new, c_new = _slstm_step(gx_ref[t], whh, h, c, H)
        hseq_ref[t] = h_new.astype(hseq_ref.dtype)
        keep = t < valid                 # mask padded time steps (last chunk)
        return jnp.where(keep, h_new, h), jnp.where(keep, c_new, c)

    h, c = jax.lax.fori_loop(0, Tc, body, (h_ref[...], c_ref[...]),
                             unroll=(Tc <= 16))
    h_ref[...] = h
    c_ref[...] = c


def _slstm_post_kernel(T, gx_ref, whh_ref, xres_ref, pw_ref, pb_ref, g_ref,
                       b_ref, out_ref, h_ref, c_ref):
    # last layer of a (non-final) block: fuse proj/GELU/residual/LayerNorm.
    Tc = gx_ref.shape[0]
    H = whh_ref.shape[0]
    _init_state(h_ref, c_ref)
    valid = jnp.minimum(Tc, T - pl.program_id(1) * Tc)
    whh = whh_ref[...]
    pw, pb = pw_ref[...], pb_ref[...]
    ln_g, ln_b = g_ref[...], b_ref[...]

    def body(t, carry):
        h, c = carry
        h_new, c_new = _slstm_step(gx_ref[t], whh, h, c, H)
        out_ref[t] = _block_post_rows(h_new, xres_ref[t], pw, pb,
                                      ln_g, ln_b).astype(out_ref.dtype)
        keep = t < valid
        return jnp.where(keep, h_new, h), jnp.where(keep, c_new, c)

    h, c = jax.lax.fori_loop(0, Tc, body, (h_ref[...], c_ref[...]),
                             unroll=(Tc <= 16))
    h_ref[...] = h
    c_ref[...] = c


def _slstm_head_kernel(T, gx_ref, whh_ref, xlast_ref, pw_ref, pb_ref, g_ref,
                       b_ref, hw_ref, hb_ref, prob_ref, h_ref, c_ref):
    # last layer of the FINAL block: block_post + head, evaluated only once
    # on the final state (the model only consumes output_seq[:, -1, :]).
    Tc = gx_ref.shape[0]
    H = whh_ref.shape[0]
    _init_state(h_ref, c_ref)
    valid = jnp.minimum(Tc, T - pl.program_id(1) * Tc)
    whh = whh_ref[...]

    def body(t, carry):
        h, c = carry
        h_new, c_new = _slstm_step(gx_ref[t], whh, h, c, H)
        keep = t < valid
        return jnp.where(keep, h_new, h), jnp.where(keep, c_new, c)

    h, c = jax.lax.fori_loop(0, Tc, body, (h_ref[...], c_ref[...]),
                             unroll=(Tc <= 16))
    h_ref[...] = h
    c_ref[...] = c

    @pl.when(pl.program_id(1) == pl.num_programs(1) - 1)
    def _():
        y = _block_post_rows(h, xlast_ref[0], pw_ref[...], pb_ref[...],
                             g_ref[...], b_ref[...])
        a = _gelu(y)
        z = jnp.dot(a.astype(jnp.bfloat16), hw_ref[...],
                    preferred_element_type=jnp.float32) + hb_ref[...]
        prob_ref[...] = jax.nn.sigmoid(z)


# ----------------------------------------------------------------------------
# wrappers around pallas_call
# ----------------------------------------------------------------------------
def _matmul_bias(x, w, b, tile_m=512):
    """Row-tiled (M,K)@(K,N)+b — conv front-end and hoisted gate projections."""
    M, K = x.shape
    N = w.shape[1]
    tm = min(tile_m, M)
    Mp = _round_up(M, tm)
    if Mp != M:
        x = jnp.pad(x, ((0, Mp - M), (0, 0)))
    out = pl.pallas_call(
        _matmul_bias_kernel,
        out_shape=jax.ShapeDtypeStruct((Mp, N), jnp.float32),
        grid=(Mp // tm,),
        in_specs=[
            pl.BlockSpec((tm, K), lambda i: (i, 0)),
            pl.BlockSpec((K, N), lambda i: (0, 0)),
            pl.BlockSpec((1, N), lambda i: (0, 0)),
        ],
        out_specs=pl.BlockSpec((tm, N), lambda i: (i, 0)),
        compiler_params=pltpu.CompilerParams(
            dimension_semantics=("parallel",),
            vmem_limit_bytes=_VMEM_LIMIT),
    )(x, w, b)
    return out[:M] if Mp != M else out


def _recurrent_compiler_params():
    return pltpu.CompilerParams(
        dimension_semantics=("parallel", "arbitrary"),
        vmem_limit_bytes=_VMEM_LIMIT)


def _slstm_plain(gx, whh, T, Tc, tb):
    # gx: (Tp, Bp, 4H) precomputed x@Wih + bias (f32); whh: (H, 4H) bf16
    Tp, Bp, G = gx.shape
    H = whh.shape[0]
    nb, nc = Bp // tb, Tp // Tc
    out_shapes = (jax.ShapeDtypeStruct((Tp, Bp, H), jnp.float32),
                  jax.ShapeDtypeStruct((Bp, H), jnp.float32),
                  jax.ShapeDtypeStruct((Bp, H), jnp.float32))
    return pl.pallas_call(
        partial(_slstm_plain_kernel, T),
        out_shape=out_shapes,
        grid=(nb, nc),
        in_specs=[
            pl.BlockSpec((Tc, tb, G), lambda bi, ch: (ch, bi, 0)),
            pl.BlockSpec((H, G), lambda bi, ch: (0, 0)),
        ],
        out_specs=(
            pl.BlockSpec((Tc, tb, H), lambda bi, ch: (ch, bi, 0)),
            pl.BlockSpec((tb, H), lambda bi, ch: (bi, 0)),
            pl.BlockSpec((tb, H), lambda bi, ch: (bi, 0)),
        ),
        compiler_params=_recurrent_compiler_params(),
    )(gx, whh)


def _slstm_post(gx, whh, x_res, proj_w, proj_b, ln_g, ln_b, T, Tc, tb):
    Tp, Bp, G = gx.shape
    H = whh.shape[0]
    C = proj_w.shape[1]
    nb, nc = Bp // tb, Tp // Tc
    out_shapes = (jax.ShapeDtypeStruct((Tp, Bp, C), jnp.float32),
                  jax.ShapeDtypeStruct((Bp, H), jnp.float32),
                  jax.ShapeDtypeStruct((Bp, H), jnp.float32))
    return pl.pallas_call(
        partial(_slstm_post_kernel, T),
        out_shape=out_shapes,
        grid=(nb, nc),
        in_specs=[
            pl.BlockSpec((Tc, tb, G), lambda bi, ch: (ch, bi, 0)),
            pl.BlockSpec((H, G), lambda bi, ch: (0, 0)),
            pl.BlockSpec((Tc, tb, C), lambda bi, ch: (ch, bi, 0)),
            pl.BlockSpec((H, C), lambda bi, ch: (0, 0)),
            pl.BlockSpec((1, C), lambda bi, ch: (0, 0)),
            pl.BlockSpec((1, C), lambda bi, ch: (0, 0)),
            pl.BlockSpec((1, C), lambda bi, ch: (0, 0)),
        ],
        out_specs=(
            pl.BlockSpec((Tc, tb, C), lambda bi, ch: (ch, bi, 0)),
            pl.BlockSpec((tb, H), lambda bi, ch: (bi, 0)),
            pl.BlockSpec((tb, H), lambda bi, ch: (bi, 0)),
        ),
        compiler_params=_recurrent_compiler_params(),
    )(gx, whh, x_res, proj_w, proj_b, ln_g, ln_b)


def _slstm_head(gx, whh, x_res, proj_w, proj_b, ln_g, ln_b, head_w, head_b,
                T, Tc, tb):
    Tp, Bp, G = gx.shape
    H = whh.shape[0]
    C = proj_w.shape[1]
    nb, nc = Bp // tb, Tp // Tc
    t_last = T - 1                       # only the last step's residual is used
    out_shapes = (jax.ShapeDtypeStruct((Bp, 1), jnp.float32),
                  jax.ShapeDtypeStruct((Bp, H), jnp.float32),
                  jax.ShapeDtypeStruct((Bp, H), jnp.float32))
    return pl.pallas_call(
        partial(_slstm_head_kernel, T),
        out_shape=out_shapes,
        grid=(nb, nc),
        in_specs=[
            pl.BlockSpec((Tc, tb, G), lambda bi, ch: (ch, bi, 0)),
            pl.BlockSpec((H, G), lambda bi, ch: (0, 0)),
            pl.BlockSpec((1, tb, C), lambda bi, ch: (t_last, bi, 0)),
            pl.BlockSpec((H, C), lambda bi, ch: (0, 0)),
            pl.BlockSpec((1, C), lambda bi, ch: (0, 0)),
            pl.BlockSpec((1, C), lambda bi, ch: (0, 0)),
            pl.BlockSpec((1, C), lambda bi, ch: (0, 0)),
            pl.BlockSpec((C, 1), lambda bi, ch: (0, 0)),
            pl.BlockSpec((1, 1), lambda bi, ch: (0, 0)),
        ],
        out_specs=(
            pl.BlockSpec((tb, 1), lambda bi, ch: (bi, 0)),
            pl.BlockSpec((tb, H), lambda bi, ch: (bi, 0)),
            pl.BlockSpec((tb, H), lambda bi, ch: (bi, 0)),
        ),
        compiler_params=_recurrent_compiler_params(),
    )(gx, whh, x_res, proj_w, proj_b, ln_g, ln_b, head_w, head_b)


# ----------------------------------------------------------------------------
# full forward pass
# ----------------------------------------------------------------------------
def cnn_xlstm_forward(params, x):
    """x: (B, L, input_size) float32 -> (prob (B,1), hidden_states)."""
    B, L, Cin = x.shape
    conv_w = params["conv_w"]                    # (Cout, Cin, K) - PyTorch layout
    Cout, _, K = conv_w.shape
    pad, stride = K // 2, 2
    T = (L + 2 * pad - K) // stride + 1

    # pad batch so the batch tile divides it; padded rows are dropped at the end
    tb = min(_MAX_BATCH_TILE, _round_up(B, 8))
    Bp = _round_up(B, tb)
    if Bp != B:
        x = jnp.pad(x, ((0, Bp - B), (0, 0), (0, 0)))

    # time-chunking for the recurrent kernels (T loop runs inside the kernel)
    Tc = min(T, _MAX_T_CHUNK)
    Tp = _round_up(T, Tc)

    # --- Conv1d(stride=2, pad=K//2) as im2col (glue) + tiled Pallas matmul ---
    # TODO(synk): im2col materializes K shifted copies in HBM; fine for K=3,
    #             a strided-read Pallas conv would avoid the extra traffic.
    x_pad = jnp.pad(x, ((0, 0), (pad, pad), (0, 0)))
    cols = [x_pad[:, k:k + stride * (T - 1) + 1:stride, :] for k in range(K)]
    patches = jnp.stack(cols, axis=2)                       # (Bp, T, K, Cin)
    patches = patches.transpose(1, 0, 2, 3).reshape(T * Bp, K * Cin)
    w_col = jnp.transpose(conv_w, (2, 1, 0)).reshape(K * Cin, Cout)
    conv_out = _matmul_bias(patches, w_col.astype(jnp.bfloat16),
                            params["conv_b"].reshape(1, Cout))
    seq = conv_out.reshape(T, Bp, Cout)                     # time-major
    if Tp != T:
        seq = jnp.pad(seq, ((0, Tp - T), (0, 0), (0, 0)))   # padded steps masked

    hidden_states = []
    prob = None
    n_blocks = len(params["blocks"])
    for bidx, blk in enumerate(params["blocks"]):
        x_in = seq                                          # block residual input
        layer_in = seq
        layer_states = []
        n_layers = len(blk["layers"])
        for li, lyr in enumerate(blk["layers"]):
            D = layer_in.shape[-1]
            H = lyr["whh"].shape[0]
            # hoisted input projection: one big lane-dense matmul, gx stays in
            # (Tp, Bp, 4H) fused-gate layout (no HBM transpose).
            gx = _matmul_bias(layer_in.reshape(Tp * Bp, D), lyr["wih"], lyr["b"])
            gx = gx.reshape(Tp, Bp, 4 * H)

            if li < n_layers - 1:
                h_seq, h_fin, c_fin = _slstm_plain(gx, lyr["whh"], T, Tc, tb)
                layer_in = h_seq
            elif bidx < n_blocks - 1:
                out_seq, h_fin, c_fin = _slstm_post(
                    gx, lyr["whh"], x_in,
                    blk["proj_w"], blk["proj_b"], blk["ln_g"], blk["ln_b"],
                    T, Tc, tb)
                seq = out_seq
            else:
                prob_p, h_fin, c_fin = _slstm_head(
                    gx, lyr["whh"], x_in,
                    blk["proj_w"], blk["proj_b"], blk["ln_g"], blk["ln_b"],
                    params["out_w"], params["out_b"], T, Tc, tb)
                prob = prob_p[:B]
            layer_states.append((h_fin[:B], c_fin[:B]))
        hidden_states.append(layer_states)

    return prob, hidden_states


# ----------------------------------------------------------------------------
# deterministic parameter init (PyTorch-style uniform bounds)
# ----------------------------------------------------------------------------
def init_params(key, input_size, hidden_size, num_layers, num_blocks,
                num_channels, kernel_size):
    n_keys = 2 + num_blocks * (num_layers * 4 + 2) + 2
    keys = iter(jax.random.split(key, n_keys))

    def u(shape, bound):
        return jax.random.uniform(next(keys), shape, jnp.float32, -bound, bound)

    p = {}
    cb = 1.0 / math.sqrt(input_size * kernel_size)
    p["conv_w"] = u((num_channels, input_size, kernel_size), cb)
    p["conv_b"] = u((num_channels,), cb)

    blocks = []
    for _ in range(num_blocks):
        layers = []
        for l in range(num_layers):
            d_in = num_channels if l == 0 else hidden_size
            bi, bh = 1.0 / math.sqrt(d_in), 1.0 / math.sqrt(hidden_size)
            wih = u((d_in, 4 * hidden_size), bi)
            bih = u((4 * hidden_size,), bi)
            whh = u((hidden_size, 4 * hidden_size), bh)
            bhh = u((4 * hidden_size,), bh)
            # weights stored bf16 for MXU-native matmuls; biases kept f32 so the
            # gate bias-add + exp/tanh/sigmoid path stays in f32.
            layers.append({"wih": wih.astype(jnp.bfloat16),
                           "whh": whh.astype(jnp.bfloat16),
                           "b": (bih + bhh).reshape(1, 4 * hidden_size)})
        bp = 1.0 / math.sqrt(hidden_size)
        blocks.append({
            "layers": layers,
            "proj_w": u((hidden_size, num_channels), bp).astype(jnp.bfloat16),
            "proj_b": u((num_channels,), bp).reshape(1, num_channels),
            "ln_g": jnp.ones((1, num_channels), jnp.float32),
            "ln_b": jnp.zeros((1, num_channels), jnp.float32),
        })
    p["blocks"] = blocks

    bo = 1.0 / math.sqrt(num_channels)
    p["out_w"] = u((num_channels, 1), bo).astype(jnp.bfloat16)
    p["out_b"] = u((1,), bo).reshape(1, 1)
    return p


# ----------------------------------------------------------------------------
if __name__ == "__main__":
    B, L = 2, 16
    input_size, hidden_size = 16, 32
    num_layers, num_blocks = 2, 2
    num_channels, kernel_size = 32, 3

    key = jax.random.PRNGKey(0)
    k_param, k_x = jax.random.split(key)
    params = init_params(k_param, input_size, hidden_size, num_layers,
                         num_blocks, num_channels, kernel_size)
    x = jax.random.normal(k_x, (B, L, input_size), jnp.float32)

    forward = jax.jit(cnn_xlstm_forward)
    prob, hidden_states = forward(params, x)
    jax.block_until_ready(prob)
    for blk_states in hidden_states:
        for h, c in blk_states:
            jax.block_until_ready(h)
            jax.block_until_ready(c)

    assert prob.shape == (B, 1)
    assert bool(jnp.all(jnp.isfinite(prob)))
    print("KERNEL_OK")
</pallas_src>

<mosaic_0001>
module attributes {stable_mosaic.version = 11 : i64} {
  func.func @_matmul_bias_kernel(%arg0: i32, %arg1: memref<64x32xf32, #tpu.memory_space<vmem>>, %arg2: memref<32x128xbf16, #tpu.memory_space<vmem>>, %arg3: memref<1x128xf32, #tpu.memory_space<vmem>>, %arg4: memref<64x128xf32, #tpu.memory_space<vmem>>) attributes {dimension_semantics = [#tpu.dimension_semantics<parallel>], iteration_bounds = array<i64: 1>, scalar_prefetch = 0 : i64, scratch_operands = 0 : i64, tpu.core_type = #tpu.core_type<tc>, window_params = [{transform_indices = @transform_0, window_bounds = array<i64: 64, 32>}, {pipeline_mode = #tpu.pipeline_mode<synchronous>, transform_indices = @transform_1, window_bounds = array<i64: 32, 128>}, {pipeline_mode = #tpu.pipeline_mode<synchronous>, transform_indices = @transform_2, window_bounds = array<i64: 1, 128>}, {transform_indices = @transform_3, window_bounds = array<i64: 64, 128>}]} {
    %c0 = arith.constant 0 : index
    %c0_0 = arith.constant 0 : index
    %0 = vector.load %arg1[%c0, %c0_0] : memref<64x32xf32, #tpu.memory_space<vmem>>, vector<64x32xf32>
    %1 = arith.truncf %0 : vector<64x32xf32> to vector<64x32xbf16>
    %c0_1 = arith.constant 0 : index
    %c0_2 = arith.constant 0 : index
    %2 = vector.load %arg2[%c0_1, %c0_2] : memref<32x128xbf16, #tpu.memory_space<vmem>>, vector<32x128xbf16>
    %cst = arith.constant dense<0.000000e+00> : vector<64x128xf32>
    %3 = tpu.matmul %1, %2, %cst {dimension_numbers = #tpu.dot_dimension_numbers<[1], [0], [0], [1], [0, 0, 1, 1], [], []>} : vector<64x32xbf16>, vector<32x128xbf16>, vector<64x128xf32> -> vector<64x128xf32>
    %c0_3 = arith.constant 0 : index
    %c0_4 = arith.constant 0 : index
    %4 = vector.load %arg3[%c0_3, %c0_4] : memref<1x128xf32, #tpu.memory_space<vmem>>, vector<1x128xf32>
    %5 = vector.broadcast %4 : vector<1x128xf32> to vector<64x128xf32>
    %6 = arith.addf %3, %5 : vector<64x128xf32>
    %c0_5 = arith.constant 0 : index
    %c0_6 = arith.constant 0 : index
    %7 = vector.load %arg4[%c0_5, %c0_6] : memref<64x128xf32, #tpu.memory_space<vmem>>, vector<64x128xf32>
    tpu.vector_store %arg4[%c0_5, %c0_6], %6 {strides = array<i32>} : memref<64x128xf32, #tpu.memory_space<vmem>>, vector<64x128xf32>,
    return
  }
  func.func @transform_0(%arg0: i32) -> (i32, i32) {
    %c0_i32 = arith.constant 0 : i32
    %c0_i32_0 = arith.constant 0 : i32
    return %arg0, %c0_i32 : i32, i32
  }
  func.func @transform_1(%arg0: i32) -> (i32, i32) {
    %c0_i32 = arith.constant 0 : i32
    %c0_i32_0 = arith.constant 0 : i32
    %c0_i32_1 = arith.constant 0 : i32
    return %c0_i32, %c0_i32_0 : i32, i32
  }
  func.func @transform_2(%arg0: i32) -> (i32, i32) {
    %c0_i32 = arith.constant 0 : i32
    %c0_i32_0 = arith.constant 0 : i32
    %c0_i32_1 = arith.constant 0 : i32
    return %c0_i32, %c0_i32_0 : i32, i32
  }
  func.func @transform_3(%arg0: i32) -> (i32, i32) {
    %c0_i32 = arith.constant 0 : i32
    %c0_i32_0 = arith.constant 0 : i32
    return %arg0, %c0_i32 : i32, i32
  }
}

module attributes {stable_mosaic.version = 11 : i64} {
  func.func @_matmul_bias_kernel(%arg0: i32, %arg1: memref<64x48xf32, #tpu.memory_space<vmem>>, %arg2: memref<48x32xbf16, #tpu.memory_space<vmem>>, %arg3: memref<1x32xf32, #tpu.memory_space<vmem>>, %arg4: memref<64x32xf32, #tpu.memory_space<vmem>>) attributes {dimension_semantics = [#tpu.dimension_semantics<parallel>], iteration_bounds = array<i64: 1>, scalar_prefetch = 0 : i64, scratch_operands = 0 : i64, tpu.core_type = #tpu.core_type<tc>, window_params = [{transform_indices = @transform_0, window_bounds = array<i64: 64, 48>}, {pipeline_mode = #tpu.pipeline_mode<synchronous>, transform_indices = @transform_1, window_bounds = array<i64: 48, 32>}, {pipeline_mode = #tpu.pipeline_mode<synchronous>, transform_indices = @transform_2, window_bounds = array<i64: 1, 32>}, {transform_indices = @transform_3, window_bounds = array<i64: 64, 32>}]} {
    %c0 = arith.constant 0 : index
    %c0_0 = arith.constant 0 : index
    %0 = vector.load %arg1[%c0, %c0_0] : memref<64x48xf32, #tpu.memory_space<vmem>>, vector<64x48xf32>
    %1 = arith.truncf %0 : vector<64x48xf32> to vector<64x48xbf16>
    %c0_1 = arith.constant 0 : index
    %c0_2 = arith.constant 0 : index
    %2 = vector.load %arg2[%c0_1, %c0_2] : memref<48x32xbf16, #tpu.memory_space<vmem>>, vector<48x32xbf16>
    %cst = arith.constant dense<0.000000e+00> : vector<64x32xf32>
    %3 = tpu.matmul %1, %2, %cst {dimension_numbers = #tpu.dot_dimension_numbers<[1], [0], [0], [1], [0, 0, 1, 1], [], []>} : vector<64x48xbf16>, vector<48x32xbf16>, vector<64x32xf32> -> vector<64x32xf32>
    %c0_3 = arith.constant 0 : index
    %c0_4 = arith.constant 0 : index
    %4 = vector.load %arg3[%c0_3, %c0_4] : memref<1x32xf32, #tpu.memory_space<vmem>>, vector<1x32xf32>
    %5 = vector.broadcast %4 : vector<1x32xf32> to vector<64x32xf32>
    %6 = arith.addf %3, %5 : vector<64x32xf32>
    %c0_5 = arith.constant 0 : index
    %c0_6 = arith.constant 0 : index
    %7 = vector.load %arg4[%c0_5, %c0_6] : memref<64x32xf32, #tpu.memory_space<vmem>>, vector<64x32xf32>
    tpu.vector_store %arg4[%c0_5, %c0_6], %6 {strides = array<i32>} : memref<64x32xf32, #tpu.memory_space<vmem>>, vector<64x32xf32>,
    return
  }
  func.func @transform_0(%arg0: i32) -> (i32, i32) {
    %c0_i32 = arith.constant 0 : i32
    %c0_i32_0 = arith.constant 0 : i32
    return %arg0, %c0_i32 : i32, i32
  }
  func.func @transform_1(%arg0: i32) -> (i32, i32) {
    %c0_i32 = arith.constant 0 : i32
    %c0_i32_0 = arith.constant 0 : i32
    %c0_i32_1 = arith.constant 0 : i32
    return %c0_i32, %c0_i32_0 : i32, i32
  }
  func.func @transform_2(%arg0: i32) -> (i32, i32) {
    %c0_i32 = arith.constant 0 : i32
    %c0_i32_0 = arith.constant 0 : i32
    %c0_i32_1 = arith.constant 0 : i32
    return %c0_i32, %c0_i32_0 : i32, i32
  }
  func.func @transform_3(%arg0: i32) -> (i32, i32) {
    %c0_i32 = arith.constant 0 : i32
    %c0_i32_0 = arith.constant 0 : i32
    return %arg0, %c0_i32 : i32, i32
  }
}

module attributes {stable_mosaic.version = 11 : i64} {
  func.func @_slstm_plain_kernel(%arg0: i32, %arg1: i32, %arg2: memref<8x8x128xf32, #tpu.memory_space<vmem>>, %arg3: memref<32x128xbf16, #tpu.memory_space<vmem>>, %arg4: memref<8x8x32xf32, #tpu.memory_space<vmem>>, %arg5: memref<8x32xf32, #tpu.memory_space<vmem>>, %arg6: memref<8x32xf32, #tpu.memory_space<vmem>>) attributes {dimension_semantics = [#tpu.dimension_semantics<parallel>, #tpu.dimension_semantics<arbitrary>], iteration_bounds = array<i64: 1, 1>, scalar_prefetch = 0 : i64, scratch_operands = 0 : i64, tpu.core_type = #tpu.core_type<tc>, window_params = [{transform_indices = @transform_0, window_bounds = array<i64: 8, 8, 128>}, {pipeline_mode = #tpu.pipeline_mode<synchronous>, transform_indices = @transform_1, window_bounds = array<i64: 32, 128>}, {transform_indices = @transform_2, window_bounds = array<i64: 8, 8, 32>}, {transform_indices = @transform_3, window_bounds = array<i64: 8, 32>}, {transform_indices = @transform_4, window_bounds = array<i64: 8, 32>}]} {
    %c0_i32 = arith.constant 0 : i32
    %0 = arith.cmpi eq, %arg1, %c0_i32 : i32
    %1 = arith.extui %0 : i1 to i32
    %c0_i32_0 = arith.constant 0 : i32
    %2 = arith.cmpi ne, %1, %c0_i32_0 : i32
    scf.if %2 {
      %cst_61 = arith.constant 0.000000e+00 : f32
      %251 = vector.broadcast %cst_61 : f32 to vector<8x32xf32>
      %c0_62 = arith.constant 0 : index
      %c0_63 = arith.constant 0 : index
      %252 = vector.load %arg5[%c0_62, %c0_63] : memref<8x32xf32, #tpu.memory_space<vmem>>, vector<8x32xf32>
      tpu.vector_store %arg5[%c0_62, %c0_63], %251 {strides = array<i32>} : memref<8x32xf32, #tpu.memory_space<vmem>>, vector<8x32xf32>,
      %cst_64 = arith.constant 0.000000e+00 : f32
      %253 = vector.broadcast %cst_64 : f32 to vector<8x32xf32>
      %c0_65 = arith.constant 0 : index
      %c0_66 = arith.constant 0 : index
      %254 = vector.load %arg6[%c0_65, %c0_66] : memref<8x32xf32, #tpu.memory_space<vmem>>, vector<8x32xf32>
      tpu.vector_store %arg6[%c0_65, %c0_66], %253 {strides = array<i32>} : memref<8x32xf32, #tpu.memory_space<vmem>>, vector<8x32xf32>,
    } else {
    }
    %c8_i32 = arith.constant 8 : i32
    %3 = arith.muli %arg1, %c8_i32 : i32
    %c8_i32_1 = arith.constant 8 : i32
    %4 = arith.subi %c8_i32_1, %3 : i32
    %c8_i32_2 = arith.constant 8 : i32
    %5 = arith.minsi %c8_i32_2, %4 : i32
    %c0 = arith.constant 0 : index
    %c0_3 = arith.constant 0 : index
    %6 = vector.load %arg3[%c0, %c0_3] : memref<32x128xbf16, #tpu.memory_space<vmem>>, vector<32x128xbf16>
    %c0_4 = arith.constant 0 : index
    %c0_5 = arith.constant 0 : index
    %7 = vector.load %arg5[%c0_4, %c0_5] : memref<8x32xf32, #tpu.memory_space<vmem>>, vector<8x32xf32>
    %c0_6 = arith.constant 0 : index
    %c0_7 = arith.constant 0 : index
    %8 = vector.load %arg6[%c0_6, %c0_7] : memref<8x32xf32, #tpu.memory_space<vmem>>, vector<8x32xf32>
    %c0_i32_8 = arith.constant 0 : i32
    %9 = arith.index_cast %c0_i32_8 : i32 to index
    %c0_9 = arith.constant 0 : index
    %c0_10 = arith.constant 0 : index
    %10 = vector.load %arg2[%9, %c0_9, %c0_10] : memref<8x8x128xf32, #tpu.memory_space<vmem>>, vector<1x8x128xf32>
    %11 = vector.shape_cast %10 : vector<1x8x128xf32> to vector<8x128xf32>
    %12 = arith.truncf %7 : vector<8x32xf32> to vector<8x32xbf16>
    %cst = arith.constant dense<0.000000e+00> : vector<8x128xf32>
    %13 = tpu.matmul %12, %6, %cst {dimension_numbers = #tpu.dot_dimension_numbers<[1], [0], [0], [1], [0, 0, 1, 1], [], []>} : vector<8x32xbf16>, vector<32x128xbf16>, vector<8x128xf32> -> vector<8x128xf32>
    %14 = arith.addf %11, %13 : vector<8x128xf32>
    %15 = vector.extract_strided_slice %14 {offsets = [0, 0], sizes = [8, 32], strides = [1, 1]} : vector<8x128xf32> to vector<8x32xf32>
    %16 = math.exp %15 : vector<8x32xf32>
    %17 = vector.extract_strided_slice %14 {offsets = [0, 32], sizes = [8, 32], strides = [1, 1]} : vector<8x128xf32> to vector<8x32xf32>
    %18 = math.exp %17 : vector<8x32xf32>
    %19 = vector.extract_strided_slice %14 {offsets = [0, 64], sizes = [8, 32], strides = [1, 1]} : vector<8x128xf32> to vector<8x32xf32>
    %20 = math.tanh %19 : vector<8x32xf32>
    %21 = vector.extract_strided_slice %14 {offsets = [0, 96], sizes = [8, 32], strides = [1, 1]} : vector<8x128xf32> to vector<8x32xf32>
    %22 = arith.negf %21 : vector<8x32xf32>
    %23 = math.exp %22 : vector<8x32xf32>
    %cst_11 = arith.constant 1.000000e+00 : f32
    %24 = vector.broadcast %cst_11 : f32 to vector<8x32xf32>
    %25 = arith.addf %24, %23 : vector<8x32xf32>
    %26 = arith.divf %24, %25 : vector<8x32xf32>
    %27 = arith.mulf %18, %8 : vector<8x32xf32>
    %28 = arith.mulf %16, %20 : vector<8x32xf32>
    %29 = arith.addf %27, %28 : vector<8x32xf32>
    %30 = math.tanh %29 : vector<8x32xf32>
    %31 = arith.mulf %26, %30 : vector<8x32xf32>
    %32 = arith.index_cast %c0_i32_8 : i32 to index
    %c0_12 = arith.constant 0 : index
    %c0_13 = arith.constant 0 : index
    %33 = vector.load %arg4[%32, %c0_12, %c0_13] : memref<8x8x32xf32, #tpu.memory_space<vmem>>, vector<1x8x32xf32>
    %34 = vector.shape_cast %33 : vector<1x8x32xf32> to vector<8x32xf32>
    %35 = vector.shape_cast %31 : vector<8x32xf32> to vector<1x8x32xf32>
    tpu.vector_store %arg4[%32, %c0_12, %c0_13], %35 {strides = array<i32>} : memref<8x8x32xf32, #tpu.memory_space<vmem>>, vector<1x8x32xf32>,
    %36 = arith.cmpi slt, %c0_i32_8, %5 : i32
    %37 = arith.select %36, %31, %7 : vector<8x32xf32>
    %38 = arith.select %36, %29, %8 : vector<8x32xf32>
    %c1_i32 = arith.constant 1 : i32
    %39 = arith.index_cast %c1_i32 : i32 to index
    %c0_14 = arith.constant 0 : index
    %c0_15 = arith.constant 0 : index
    %40 = vector.load %arg2[%39, %c0_14, %c0_15] : memref<8x8x128xf32, #tpu.memory_space<vmem>>, vector<1x8x128xf32>
    %41 = vector.shape_cast %40 : vector<1x8x128xf32> to vector<8x128xf32>
    %42 = arith.truncf %37 : vector<8x32xf32> to vector<8x32xbf16>
    %cst_16 = arith.constant dense<0.000000e+00> : vector<8x128xf32>
    %43 = tpu.matmul %42, %6, %cst_16 {dimension_numbers = #tpu.dot_dimension_numbers<[1], [0], [0], [1], [0, 0, 1, 1], [], []>} : vector<8x32xbf16>, vector<32x128xbf16>, vector<8x128xf32> -> vector<8x128xf32>
    %44 = arith.addf %41, %43 : vector<8x128xf32>
    %45 = vector.extract_strided_slice %44 {offsets = [0, 0], sizes = [8, 32], strides = [1, 1]} : vector<8x128xf32> to vector<8x32xf32>
    %46 = math.exp %45 : vector<8x32xf32>
    %47 = vector.extract_strided_slice %44 {offsets = [0, 32], sizes = [8, 32], strides = [1, 1]} : vector<8x128xf32> to vector<8x32xf32>
    %48 = math.exp %47 : vector<8x32xf32>
    %49 = vector.extract_strided_slice %44 {offsets = [0, 64], sizes = [8, 32], strides = [1, 1]} : vector<8x128xf32> to vector<8x32xf32>
    %50 = math.tanh %49 : vector<8x32xf32>
    %51 = vector.extract_strided_slice %44 {offsets = [0, 96], sizes = [8, 32], strides = [1, 1]} : vector<8x128xf32> to vector<8x32xf32>
    %52 = arith.negf %51 : vector<8x32xf32>
    %53 = math.exp %52 : vector<8x32xf32>
    %cst_17 = arith.constant 1.000000e+00 : f32
    %54 = vector.broadcast %cst_17 : f32 to vector<8x32xf32>
    %55 = arith.addf %54, %53 : vector<8x32xf32>
    %56 = arith.divf %54, %55 : vector<8x32xf32>
    %57 = arith.mulf %48, %38 : vector<8x32xf32>
    %58 = arith.mulf %46, %50 : vector<8x32xf32>
    %59 = arith.addf %57, %58 : vector<8x32xf32>
    %60 = math.tanh %59 : vector<8x32xf32>
    %61 = arith.mulf %56, %60 : vector<8x32xf32>
    %62 = arith.index_cast %c1_i32 : i32 to index
    %c0_18 = arith.constant 0 : index
    %c0_19 = arith.constant 0 : index
    %63 = vector.load %arg4[%62, %c0_18, %c0_19] : memref<8x8x32xf32, #tpu.memory_space<vmem>>, vector<1x8x32xf32>
    %64 = vector.shape_cast %63 : vector<1x8x32xf32> to vector<8x32xf32>
    %65 = vector.shape_cast %61 : vector<8x32xf32> to vector<1x8x32xf32>
    tpu.vector_store %arg4[%62, %c0_18, %c0_19], %65 {strides = array<i32>} : memref<8x8x32xf32, #tpu.memory_space<vmem>>, vector<1x8x32xf32>,
    %66 = arith.cmpi slt, %c1_i32, %5 : i32
    %67 = arith.select %66, %61, %37 : vector<8x32xf32>
    %68 = arith.select %66, %59, %38 : vector<8x32xf32>
    %c2_i32 = arith.constant 2 : i32
    %69 = arith.index_cast %c2_i32 : i32 to index
    %c0_20 = arith.constant 0 : index
    %c0_21 = arith.constant 0 : index
    %70 = vector.load %arg2[%69, %c0_20, %c0_21] : memref<8x8x128xf32, #tpu.memory_space<vmem>>, vector<1x8x128xf32>
    %71 = vector.shape_cast %70 : vector<1x8x128xf32> to vector<8x128xf32>
    %72 = arith.truncf %67 : vector<8x32xf32> to vector<8x32xbf16>
    %cst_22 = arith.constant dense<0.000000e+00> : vector<8x128xf32>
    %73 = tpu.matmul %72, %6, %cst_22 {dimension_numbers = #tpu.dot_dimension_numbers<[1], [0], [0], [1], [0, 0, 1, 1], [], []>} : vector<8x32xbf16>, vector<32x128xbf16>, vector<8x128xf32> -> vector<8x128xf32>
    %74 = arith.addf %71, %73 : vector<8x128xf32>
    %75 = vector.extract_strided_slice %74 {offsets = [0, 0], sizes = [8, 32], strides = [1, 1]} : vector<8x128xf32> to vector<8x32xf32>
    %76 = math.exp %75 : vector<8x32xf32>
    %77 = vector.extract_strided_slice %74 {offsets = [0, 32], sizes = [8, 32], strides = [1, 1]} : vector<8x128xf32> to vector<8x32xf32>
    %78 = math.exp %77 : vector<8x32xf32>
    %79 = vector.extract_strided_slice %74 {offsets = [0, 64], sizes = [8, 32], strides = [1, 1]} : vector<8x128xf32> to vector<8x32xf32>
    %80 = math.tanh %79 : vector<8x32xf32>
    %81 = vector.extract_strided_slice %74 {offsets = [0, 96], sizes = [8, 32], strides = [1, 1]} : vector<8x128xf32> to vector<8x32xf32>
    %82 = arith.negf %81 : vector<8x32xf32>
    %83 = math.exp %82 : vector<8x32xf32>
    %cst_23 = arith.constant 1.000000e+00 : f32
    %84 = vector.broadcast %cst_23 : f32 to vector<8x32xf32>
    %85 = arith.addf %84, %83 : vector<8x32xf32>
    %86 = arith.divf %84, %85 : vector<8x32xf32>
    %87 = arith.mulf %78, %68 : vector<8x32xf32>
    %88 = arith.mulf %76, %80 : vector<8x32xf32>
    %89 = arith.addf %87, %88 : vector<8x32xf32>
    %90 = math.tanh %89 : vector<8x32xf32>
    %91 = arith.mulf %86, %90 : vector<8x32xf32>
    %92 = arith.index_cast %c2_i32 : i32 to index
    %c0_24 = arith.constant 0 : index
    %c0_25 = arith.constant 0 : index
    %93 = vector.load %arg4[%92, %c0_24, %c0_25] : memref<8x8x32xf32, #tpu.memory_space<vmem>>, vector<1x8x32xf32>
    %94 = vector.shape_cast %93 : vector<1x8x32xf32> to vector<8x32xf32>
    %95 = vector.shape_cast %91 : vector<8x32xf32> to vector<1x8x32xf32>
    tpu.vector_store %arg4[%92, %c0_24, %c0_25], %95 {strides = array<i32>} : memref<8x8x32xf32, #tpu.memory_space<vmem>>, vector<1x8x32xf32>,
    %96 = arith.cmpi slt, %c2_i32, %5 : i32
    %97 = arith.select %96, %91, %67 : vector<8x32xf32>
    %98 = arith.select %96, %89, %68 : vector<8x32xf32>
    %c3_i32 = arith.constant 3 : i32
    %99 = arith.index_cast %c3_i32 : i32 to index
    %c0_26 = arith.constant 0 : index
    %c0_27 = arith.constant 0 : index
    %100 = vector.load %arg2[%99, %c0_26, %c0_27] : memref<8x8x128xf32, #tpu.memory_space<vmem>>, vector<1x8x128xf32>
    %101 = vector.shape_cast %100 : vector<1x8x128xf32> to vector<8x128xf32>
    %102 = arith.truncf %97 : vector<8x32xf32> to vector<8x32xbf16>
    %cst_28 = arith.constant dense<0.000000e+00> : vector<8x128xf32>
    %103 = tpu.matmul %102, %6, %cst_28 {dimension_numbers = #tpu.dot_dimension_numbers<[1], [0], [0], [1], [0, 0, 1, 1], [], []>} : vector<8x32xbf16>, vector<32x128xbf16>, vector<8x128xf32> -> vector<8x128xf32>
    %104 = arith.addf %101, %103 : vector<8x128xf32>
    %105 = vector.extract_strided_slice %104 {offsets = [0, 0], sizes = [8, 32], strides = [1, 1]} : vector<8x128xf32> to vector<8x32xf32>
    %106 = math.exp %105 : vector<8x32xf32>
    %107 = vector.extract_strided_slice %104 {offsets = [0, 32], sizes = [8, 32], strides = [1, 1]} : vector<8x128xf32> to vector<8x32xf32>
    %108 = math.exp %107 : vector<8x32xf32>
    %109 = vector.extract_strided_slice %104 {offsets = [0, 64], sizes = [8, 32], strides = [1, 1]} : vector<8x128xf32> to vector<8x32xf32>
    %110 = math.tanh %109 : vector<8x32xf32>
    %111 = vector.extract_strided_slice %104 {offsets = [0, 96], sizes = [8, 32], strides = [1, 1]} : vector<8x128xf32> to vector<8x32xf32>
    %112 = arith.negf %111 : vector<8x32xf32>
    %113 = math.exp %112 : vector<8x32xf32>
    %cst_29 = arith.constant 1.000000e+00 : f32
    %114 = vector.broadcast %cst_29 : f32 to vector<8x32xf32>
    %115 = arith.addf %114, %113 : vector<8x32xf32>
    %116 = arith.divf %114, %115 : vector<8x32xf32>
    %117 = arith.mulf %108, %98 : vector<8x32xf32>
    %118 = arith.mulf %106, %110 : vector<8x32xf32>
    %119 = arith.addf %117, %118 : vector<8x32xf32>
    %120 = math.tanh %119 : vector<8x32xf32>
    %121 = arith.mulf %116, %120 : vector<8x32xf32>
    %122 = arith.index_cast %c3_i32 : i32 to index
    %c0_30 = arith.constant 0 : index
    %c0_31 = arith.constant 0 : index
    %123 = vector.load %arg4[%122, %c0_30, %c0_31] : memref<8x8x32xf32, #tpu.memory_space<vmem>>, vector<1x8x32xf32>
    %124 = vector.shape_cast %123 : vector<1x8x32xf32> to vector<8x32xf32>
    %125 = vector.shape_cast %121 : vector<8x32xf32> to vector<1x8x32xf32>
    tpu.vector_store %arg4[%122, %c0_30, %c0_31], %125 {strides = array<i32>} : memref<8x8x32xf32, #tpu.memory_space<vmem>>, vector<1x8x32xf32>,
    %126 = arith.cmpi slt, %c3_i32, %5 : i32
    %127 = arith.select %126, %121, %97 : vector<8x32xf32>
    %128 = arith.select %126, %119, %98 : vector<8x32xf32>
    %c4_i32 = arith.constant 4 : i32
    %129 = arith.index_cast %c4_i32 : i32 to index
    %c0_32 = arith.constant 0 : index
    %c0_33 = arith.constant 0 : index
    %130 = vector.load %arg2[%129, %c0_32, %c0_33] : memref<8x8x128xf32, #tpu.memory_space<vmem>>, vector<1x8x128xf32>
    %131 = vector.shape_cast %130 : vector<1x8x128xf32> to vector<8x128xf32>
    %132 = arith.truncf %127 : vector<8x32xf32> to vector<8x32xbf16>
    %cst_34 = arith.constant dense<0.000000e+00> : vector<8x128xf32>
    %133 = tpu.matmul %132, %6, %cst_34 {dimension_numbers = #tpu.dot_dimension_numbers<[1], [0], [0], [1], [0, 0, 1, 1], [], []>} : vector<8x32xbf16>, vector<32x128xbf16>, vector<8x128xf32> -> vector<8x128xf32>
    %134 = arith.addf %131, %133 : vector<8x128xf32>
    %135 = vector.extract_strided_slice %134 {offsets = [0, 0], sizes = [8, 32], strides = [1, 1]} : vector<8x128xf32> to vector<8x32xf32>
    %136 = math.exp %135 : vector<8x32xf32>
    %137 = vector.extract_strided_slice %134 {offsets = [0, 32], sizes = [8, 32], strides = [1, 1]} : vector<8x128xf32> to vector<8x32xf32>
    %138 = math.exp %137 : vector<8x32xf32>
    %139 = vector.extract_strided_slice %134 {offsets = [0, 64], sizes = [8, 32], strides = [1, 1]} : vector<8x128xf32> to vector<8x32xf32>
    %140 = math.tanh %139 : vector<8x32xf32>
    %141 = vector.extract_strided_slice %134 {offsets = [0, 96], sizes = [8, 32], strides = [1, 1]} : vector<8x128xf32> to vector<8x32xf32>
    %142 = arith.negf %141 : vector<8x32xf32>
    %143 = math.exp %142 : vector<8x32xf32>
    %cst_35 = arith.constant 1.000000e+00 : f32
    %144 = vector.broadcast %cst_35 : f32 to vector<8x32xf32>
    %145 = arith.addf %144, %143 : vector<8x32xf32>
    %146 = arith.divf %144, %145 : vector<8x32xf32>
    %147 = arith.mulf %138, %128 : vector<8x32xf32>
    %148 = arith.mulf %136, %140 : vector<8x32xf32>
    %149 = arith.addf %147, %148 : vector<8x32xf32>
    %150 = math.tanh %149 : vector<8x32xf32>
    %151 = arith.mulf %146, %150 : vector<8x32xf32>
    %152 = arith.index_cast %c4_i32 : i32 to index
    %c0_36 = arith.constant 0 : index
    %c0_37 = arith.constant 0 : index
    %153 = vector.load %arg4[%152, %c0_36, %c0_37] : memref<8x8x32xf32, #tpu.memory_space<vmem>>, vector<1x8x32xf32>
    %154 = vector.shape_cast %153 : vector<1x8x32xf32> to vector<8x32xf32>
    %155 = vector.shape_cast %151 : vector<8x32xf32> to vector<1x8x32xf32>
    tpu.vector_store %arg4[%152, %c0_36, %c0_37], %155 {strides = array<i32>} : memref<8x8x32xf32, #tpu.memory_space<vmem>>, vector<1x8x32xf32>,
    %156 = arith.cmpi slt, %c4_i32, %5 : i32
    %157 = arith.select %156, %151, %127 : vector<8x32xf32>
    %158 = arith.select %156, %149, %128 : vector<8x32xf32>
    %c5_i32 = arith.constant 5 : i32
    %159 = arith.index_cast %c5_i32 : i32 to index
    %c0_38 = arith.constant 0 : index
    %c0_39 = arith.constant 0 : index
    %160 = vector.load %arg2[%159, %c0_38, %c0_39] : memref<8x8x128xf32, #tpu.memory_space<vmem>>, vector<1x8x128xf32>
    %161 = vector.shape_cast %160 : vector<1x8x128xf32> to vector<8x128xf32>
    %162 = arith.truncf %157 : vector<8x32xf32> to vector<8x32xbf16>
    %cst_40 = arith.constant dense<0.000000e+00> : vector<8x128xf32>
    %163 = tpu.matmul %162, %6, %cst_40 {dimension_numbers = #tpu.dot_dimension_numbers<[1], [0], [0], [1], [0, 0, 1, 1], [], []>} : vector<8x32xbf16>, vector<32x128xbf16>, vector<8x128xf32> -> vector<8x128xf32>
    %164 = arith.addf %161, %163 : vector<8x128xf32>
    %165 = vector.extract_strided_slice %164 {offsets = [0, 0], sizes = [8, 32], strides = [1, 1]} : vector<8x128xf32> to vector<8x32xf32>
    %166 = math.exp %165 : vector<8x32xf32>
    %167 = vector.extract_strided_slice %164 {offsets = [0, 32], sizes = [8, 32], strides = [1, 1]} : vector<8x128xf32> to vector<8x32xf32>
    %168 = math.exp %167 : vector<8x32xf32>
    %169 = vector.extract_strided_slice %164 {offsets = [0, 64], sizes = [8, 32], strides = [1, 1]} : vector<8x128xf32> to vector<8x32xf32>
    %170 = math.tanh %169 : vector<8x32xf32>
    %171 = vector.extract_strided_slice %164 {offsets = [0, 96], sizes = [8, 32], strides = [1, 1]} : vector<8x128xf32> to vector<8x32xf32>
    %172 = arith.negf %171 : vector<8x32xf32>
    %173 = math.exp %172 : vector<8x32xf32>
    %cst_41 = arith.constant 1.000000e+00 : f32
    %174 = vector.broadcast %cst_41 : f32 to vector<8x32xf32>
    %175 = arith.addf %174, %173 : vector<8x32xf32>
    %176 = arith.divf %174, %175 : vector<8x32xf32>
    %177 = arith.mulf %168, %158 : vector<8x32xf32>
    %178 = arith.mulf %166, %170 : vector<8x32xf32>
    %179 = arith.addf %177, %178 : vector<8x32xf32>
    %180 = math.tanh %179 : vector<8x32xf32>
    %181 = arith.mulf %176, %180 : vector<8x32xf32>
    %182 = arith.index_cast %c5_i32 : i32 to index
    %c0_42 = arith.constant 0 : index
    %c0_43 = arith.constant 0 : index
    %183 = vector.load %arg4[%182, %c0_42, %c0_43] : memref<8x8x32xf32, #tpu.memory_space<vmem>>, vector<1x8x32xf32>
    %184 = vector.shape_cast %183 : vector<1x8x32xf32> to vector<8x32xf32>
    %185 = vector.shape_cast %181 : vector<8x32xf32> to vector<1x8x32xf32>
    tpu.vector_store %arg4[%182, %c0_42, %c0_43], %185 {strides = array<i32>} : memref<8x8x32xf32, #tpu.memory_space<vmem>>, vector<1x8x32xf32>,
    %186 = arith.cmpi slt, %c5_i32, %5 : i32
    %187 = arith.select %186, %181, %157 : vector<8x32xf32>
    %188 = arith.select %186, %179, %158 : vector<8x32xf32>
    %c6_i32 = arith.constant 6 : i32
    %189 = arith.index_cast %c6_i32 : i32 to index
    %c0_44 = arith.constant 0 : index
    %c0_45 = arith.constant 0 : index
    %190 = vector.load %arg2[%189, %c0_44, %c0_45] : memref<8x8x128xf32, #tpu.memory_space<vmem>>, vector<1x8x128xf32>
    %191 = vector.shape_cast %190 : vector<1x8x128xf32> to vector<8x128xf32>
    %192 = arith.truncf %187 : vector<8x32xf32> to vector<8x32xbf16>
    %cst_46 = arith.constant dense<0.000000e+00> : vector<8x128xf32>
    %193 = tpu.matmul %192, %6, %cst_46 {dimension_numbers = #tpu.dot_dimension_numbers<[1], [0], [0], [1], [0, 0, 1, 1], [], []>} : vector<8x32xbf16>, vector<32x128xbf16>, vector<8x128xf32> -> vector<8x128xf32>
    %194 = arith.addf %191, %193 : vector<8x128xf32>
    %195 = vector.extract_strided_slice %194 {offsets = [0, 0], sizes = [8, 32], strides = [1, 1]} : vector<8x128xf32> to vector<8x32xf32>
    %196 = math.exp %195 : vector<8x32xf32>
    %197 = vector.extract_strided_slice %194 {offsets = [0, 32], sizes = [8, 32], strides = [1, 1]} : vector<8x128xf32> to vector<8x32xf32>
    %198 = math.exp %197 : vector<8x32xf32>
    %199 = vector.extract_strided_slice %194 {offsets = [0, 64], sizes = [8, 32], strides = [1, 1]} : vector<8x128xf32> to vector<8x32xf32>
    %200 = math.tanh %199 : vector<8x32xf32>
    %201 = vector.extract_strided_slice %194 {offsets = [0, 96], sizes = [8, 32], strides = [1, 1]} : vector<8x128xf32> to vector<8x32xf32>
    %202 = arith.negf %201 : vector<8x32xf32>
    %203 = math.exp %202 : vector<8x32xf32>
    %cst_47 = arith.constant 1.000000e+00 : f32
    %204 = vector.broadcast %cst_47 : f32 to vector<8x32xf32>
    %205 = arith.addf %204, %203 : vector<8x32xf32>
    %206 = arith.divf %204, %205 : vector<8x32xf32>
    %207 = arith.mulf %198, %188 : vector<8x32xf32>
    %208 = arith.mulf %196, %200 : vector<8x32xf32>
    %209 = arith.addf %207, %208 : vector<8x32xf32>
    %210 = math.tanh %209 : vector<8x32xf32>
    %211 = arith.mulf %206, %210 : vector<8x32xf32>
    %212 = arith.index_cast %c6_i32 : i32 to index
    %c0_48 = arith.constant 0 : index
    %c0_49 = arith.constant 0 : index
    %213 = vector.load %arg4[%212, %c0_48, %c0_49] : memref<8x8x32xf32, #tpu.memory_space<vmem>>, vector<1x8x32xf32>
    %214 = vector.shape_cast %213 : vector<1x8x32xf32> to vector<8x32xf32>
    %215 = vector.shape_cast %211 : vector<8x32xf32> to vector<1x8x32xf32>
    tpu.vector_store %arg4[%212, %c0_48, %c0_49], %215 {strides = array<i32>} : memref<8x8x32xf32, #tpu.memory_space<vmem>>, vector<1x8x32xf32>,
    %216 = arith.cmpi slt, %c6_i32, %5 : i32
    %217 = arith.select %216, %211, %187 : vector<8x32xf32>
    %218 = arith.select %216, %209, %188 : vector<8x32xf32>
    %c7_i32 = arith.constant 7 : i32
    %219 = arith.index_cast %c7_i32 : i32 to index
    %c0_50 = arith.constant 0 : index
    %c0_51 = arith.constant 0 : index
    %220 = vector.load %arg2[%219, %c0_50, %c0_51] : memref<8x8x128xf32, #tpu.memory_space<vmem>>, vector<1x8x128xf32>
    %221 = vector.shape_cast %220 : vector<1x8x128xf32> to vector<8x128xf32>
    %222 = arith.truncf %217 : vector<8x32xf32> to vector<8x32xbf16>
    %cst_52 = arith.constant dense<0.000000e+00> : vector<8x128xf32>
    %223 = tpu.matmul %222, %6, %cst_52 {dimension_numbers = #tpu.dot_dimension_numbers<[1], [0], [0], [1], [0, 0, 1, 1], [], []>} : vector<8x32xbf16>, vector<32x128xbf16>, vector<8x128xf32> -> vector<8x128xf32>
    %224 = arith.addf %221, %223 : vector<8x128xf32>
    %225 = vector.extract_strided_slice %224 {offsets = [0, 0], sizes = [8, 32], strides = [1, 1]} : vector<8x128xf32> to vector<8x32xf32>
    %226 = math.exp %225 : vector<8x32xf32>
    %227 = vector.extract_strided_slice %224 {offsets = [0, 32], sizes = [8, 32], strides = [1, 1]} : vector<8x128xf32> to vector<8x32xf32>
    %228 = math.exp %227 : vector<8x32xf32>
    %229 = vector.extract_strided_slice %224 {offsets = [0, 64], sizes = [8, 32], strides = [1, 1]} : vector<8x128xf32> to vector<8x32xf32>
    %230 = math.tanh %229 : vector<8x32xf32>
    %231 = vector.extract_strided_slice %224 {offsets = [0, 96], sizes = [8, 32], strides = [1, 1]} : vector<8x128xf32> to vector<8x32xf32>
    %232 = arith.negf %231 : vector<8x32xf32>
    %233 = math.exp %232 : vector<8x32xf32>
    %cst_53 = arith.constant 1.000000e+00 : f32
    %234 = vector.broadcast %cst_53 : f32 to vector<8x32xf32>
    %235 = arith.addf %234, %233 : vector<8x32xf32>
    %236 = arith.divf %234, %235 : vector<8x32xf32>
    %237 = arith.mulf %228, %218 : vector<8x32xf32>
    %238 = arith.mulf %226, %230 : vector<8x32xf32>
    %239 = arith.addf %237, %238 : vector<8x32xf32>
    %240 = math.tanh %239 : vector<8x32xf32>
    %241 = arith.mulf %236, %240 : vector<8x32xf32>
    %242 = arith.index_cast %c7_i32 : i32 to index
    %c0_54 = arith.constant 0 : index
    %c0_55 = arith.constant 0 : index
    %243 = vector.load %arg4[%242, %c0_54, %c0_55] : memref<8x8x32xf32, #tpu.memory_space<vmem>>, vector<1x8x32xf32>
    %244 = vector.shape_cast %243 : vector<1x8x32xf32> to vector<8x32xf32>
    %245 = vector.shape_cast %241 : vector<8x32xf32> to vector<1x8x32xf32>
    tpu.vector_store %arg4[%242, %c0_54, %c0_55], %245 {strides = array<i32>} : memref<8x8x32xf32, #tpu.memory_space<vmem>>, vector<1x8x32xf32>,
    %246 = arith.cmpi slt, %c7_i32, %5 : i32
    %247 = arith.select %246, %241, %217 : vector<8x32xf32>
    %248 = arith.select %246, %239, %218 : vector<8x32xf32>
    %c8_i32_56 = arith.constant 8 : i32
    %c0_57 = arith.constant 0 : index
    %c0_58 = arith.constant 0 : index
    %249 = vector.load %arg5[%c0_57, %c0_58] : memref<8x32xf32, #tpu.memory_space<vmem>>, vector<8x32xf32>
    tpu.vector_store %arg5[%c0_57, %c0_58], %247 {strides = array<i32>} : memref<8x32xf32, #tpu.memory_space<vmem>>, vector<8x32xf32>,
    %c0_59 = arith.constant 0 : index
    %c0_60 = arith.constant 0 : index
    %250 = vector.load %arg6[%c0_59, %c0_60] : memref<8x32xf32, #tpu.memory_space<vmem>>, vector<8x32xf32>
    tpu.vector_store %arg6[%c0_59, %c0_60], %248 {strides = array<i32>} : memref<8x32xf32, #tpu.memory_space<vmem>>, vector<8x32xf32>,
    return
  }
  func.func @transform_0(%arg0: i32, %arg1: i32) -> (i32, i32, i32) {
    %c0_i32 = arith.constant 0 : i32
    %c0_i32_0 = arith.constant 0 : i32
    return %arg1, %arg0, %c0_i32 : i32, i32, i32
  }
  func.func @transform_1(%arg0: i32, %arg1: i32) -> (i32, i32) {
    %c0_i32 = arith.constant 0 : i32
    %c0_i32_0 = arith.constant 0 : i32
    %c0_i32_1 = arith.constant 0 : i32
    return %c0_i32, %c0_i32_0 : i32, i32
  }
  func.func @transform_2(%arg0: i32, %arg1: i32) -> (i32, i32, i32) {
    %c0_i32 = arith.constant 0 : i32
    %c0_i32_0 = arith.constant 0 : i32
    return %arg1, %arg0, %c0_i32 : i32, i32, i32
  }
  func.func @transform_3(%arg0: i32, %arg1: i32) -> (i32, i32) {
    %c0_i32 = arith.constant 0 : i32
    %c0_i32_0 = arith.constant 0 : i32
    return %arg0, %c0_i32 : i32, i32
  }
  func.func @transform_4(%arg0: i32, %arg1: i32) -> (i32, i32) {
    %c0_i32 = arith.constant 0 : i32
    %c0_i32_0 = arith.constant 0 : i32
    return %arg0, %c0_i32 : i32, i32
  }
}

module attributes {stable_mosaic.version = 11 : i64} {
  func.func @_slstm_post_kernel(%arg0: i32, %arg1: i32, %arg2: memref<8x8x128xf32, #tpu.memory_space<vmem>>, %arg3: memref<32x128xbf16, #tpu.memory_space<vmem>>, %arg4: memref<8x8x32xf32, #tpu.memory_space<vmem>>, %arg5: memref<32x32xbf16, #tpu.memory_space<vmem>>, %arg6: memref<1x32xf32, #tpu.memory_space<vmem>>, %arg7: memref<1x32xf32, #tpu.memory_space<vmem>>, %arg8: memref<1x32xf32, #tpu.memory_space<vmem>>, %arg9: memref<8x8x32xf32, #tpu.memory_space<vmem>>, %arg10: memref<8x32xf32, #tpu.memory_space<vmem>>, %arg11: memref<8x32xf32, #tpu.memory_space<vmem>>) attributes {dimension_semantics = [#tpu.dimension_semantics<parallel>, #tpu.dimension_semantics<arbitrary>], iteration_bounds = array<i64: 1, 1>, scalar_prefetch = 0 : i64, scratch_operands = 0 : i64, tpu.core_type = #tpu.core_type<tc>, window_params = [{transform_indices = @transform_0, window_bounds = array<i64: 8, 8, 128>}, {pipeline_mode = #tpu.pipeline_mode<synchronous>, transform_indices = @transform_1, window_bounds = array<i64: 32, 128>}, {transform_indices = @transform_2, window_bounds = array<i64: 8, 8, 32>}, {pipeline_mode = #tpu.pipeline_mode<synchronous>, transform_indices = @transform_3, window_bounds = array<i64: 32, 32>}, {pipeline_mode = #tpu.pipeline_mode<synchronous>, transform_indices = @transform_4, window_bounds = array<i64: 1, 32>}, {pipeline_mode = #tpu.pipeline_mode<synchronous>, transform_indices = @transform_5, window_bounds = array<i64: 1, 32>}, {pipeline_mode = #tpu.pipeline_mode<synchronous>, transform_indices = @transform_6, window_bounds = array<i64: 1, 32>}, {transform_indices = @transform_7, window_bounds = array<i64: 8, 8, 32>}, {transform_indices = @transform_8, window_bounds = array<i64: 8, 32>}, {transform_indices = @transform_9, window_bounds = array<i64: 8, 32>}]} {
    %c0_i32 = arith.constant 0 : i32
    %0 = arith.cmpi eq, %arg1, %c0_i32 : i32
    %1 = arith.extui %0 : i1 to i32
    %c0_i32_0 = arith.constant 0 : i32
    %2 = arith.cmpi ne, %1, %c0_i32_0 : i32
    scf.if %2 {
      %cst_165 = arith.constant 0.000000e+00 : f32
      %599 = vector.broadcast %cst_165 : f32 to vector<8x32xf32>
      %c0_166 = arith.constant 0 : index
      %c0_167 = arith.constant 0 : index
      %600 = vector.load %arg10[%c0_166, %c0_167] : memref<8x32xf32, #tpu.memory_space<vmem>>, vector<8x32xf32>
      tpu.vector_store %arg10[%c0_166, %c0_167], %599 {strides = array<i32>} : memref<8x32xf32, #tpu.memory_space<vmem>>, vector<8x32xf32>,
      %cst_168 = arith.constant 0.000000e+00 : f32
      %601 = vector.broadcast %cst_168 : f32 to vector<8x32xf32>
      %c0_169 = arith.constant 0 : index
      %c0_170 = arith.constant 0 : index
      %602 = vector.load %arg11[%c0_169, %c0_170] : memref<8x32xf32, #tpu.memory_space<vmem>>, vector<8x32xf32>
      tpu.vector_store %arg11[%c0_169, %c0_170], %601 {strides = array<i32>} : memref<8x32xf32, #tpu.memory_space<vmem>>, vector<8x32xf32>,
    } else {
    }
    %c8_i32 = arith.constant 8 : i32
    %3 = arith.muli %arg1, %c8_i32 : i32
    %c8_i32_1 = arith.constant 8 : i32
    %4 = arith.subi %c8_i32_1, %3 : i32
    %c8_i32_2 = arith.constant 8 : i32
    %5 = arith.minsi %c8_i32_2, %4 : i32
    %c0 = arith.constant 0 : index
    %c0_3 = arith.constant 0 : index
    %6 = vector.load %arg3[%c0, %c0_3] : memref<32x128xbf16, #tpu.memory_space<vmem>>, vector<32x128xbf16>
    %c0_4 = arith.constant 0 : index
    %c0_5 = arith.constant 0 : index
    %7 = vector.load %arg5[%c0_4, %c0_5] : memref<32x32xbf16, #tpu.memory_space<vmem>>, vector<32x32xbf16>
    %c0_6 = arith.constant 0 : index
    %c0_7 = arith.constant 0 : index
    %8 = vector.load %arg6[%c0_6, %c0_7] : memref<1x32xf32, #tpu.memory_space<vmem>>, vector<1x32xf32>
    %c0_8 = arith.constant 0 : index
    %c0_9 = arith.constant 0 : index
    %9 = vector.load %arg7[%c0_8, %c0_9] : memref<1x32xf32, #tpu.memory_space<vmem>>, vector<1x32xf32>
    %c0_10 = arith.constant 0 : index
    %c0_11 = arith.constant 0 : index
    %10 = vector.load %arg8[%c0_10, %c0_11] : memref<1x32xf32, #tpu.memory_space<vmem>>, vector<1x32xf32>
    %c0_12 = arith.constant 0 : index
    %c0_13 = arith.constant 0 : index
    %11 = vector.load %arg10[%c0_12, %c0_13] : memref<8x32xf32, #tpu.memory_space<vmem>>, vector<8x32xf32>
    %c0_14 = arith.constant 0 : index
    %c0_15 = arith.constant 0 : index
    %12 = vector.load %arg11[%c0_14, %c0_15] : memref<8x32xf32, #tpu.memory_space<vmem>>, vector<8x32xf32>
    %c0_i32_16 = arith.constant 0 : i32
    %13 = arith.index_cast %c0_i32_16 : i32 to index
    %c0_17 = arith.constant 0 : index
    %c0_18 = arith.constant 0 : index
    %14 = vector.load %arg2[%13, %c0_17, %c0_18] : memref<8x8x128xf32, #tpu.memory_space<vmem>>, vector<1x8x128xf32>
    %15 = vector.shape_cast %14 : vector<1x8x128xf32> to vector<8x128xf32>
    %16 = arith.truncf %11 : vector<8x32xf32> to vector<8x32xbf16>
    %cst = arith.constant dense<0.000000e+00> : vector<8x128xf32>
    %17 = tpu.matmul %16, %6, %cst {dimension_numbers = #tpu.dot_dimension_numbers<[1], [0], [0], [1], [0, 0, 1, 1], [], []>} : vector<8x32xbf16>, vector<32x128xbf16>, vector<8x128xf32> -> vector<8x128xf32>
    %18 = arith.addf %15, %17 : vector<8x128xf32>
    %19 = vector.extract_strided_slice %18 {offsets = [0, 0], sizes = [8, 32], strides = [1, 1]} : vector<8x128xf32> to vector<8x32xf32>
    %20 = math.exp %19 : vector<8x32xf32>
    %21 = vector.extract_strided_slice %18 {offsets = [0, 32], sizes = [8, 32], strides = [1, 1]} : vector<8x128xf32> to vector<8x32xf32>
    %22 = math.exp %21 : vector<8x32xf32>
    %23 = vector.extract_strided_slice %18 {offsets = [0, 64], sizes = [8, 32], strides = [1, 1]} : vector<8x128xf32> to vector<8x32xf32>
    %24 = math.tanh %23 : vector<8x32xf32>
    %25 = vector.extract_strided_slice %18 {offsets = [0, 96], sizes = [8, 32], strides = [1, 1]} : vector<8x128xf32> to vector<8x32xf32>
    %26 = arith.negf %25 : vector<8x32xf32>
    %27 = math.exp %26 : vector<8x32xf32>
    %cst_19 = arith.constant 1.000000e+00 : f32
    %28 = vector.broadcast %cst_19 : f32 to vector<8x32xf32>
    %29 = arith.addf %28, %27 : vector<8x32xf32>
    %30 = arith.divf %28, %29 : vector<8x32xf32>
    %31 = arith.mulf %22, %12 : vector<8x32xf32>
    %32 = arith.mulf %20, %24 : vector<8x32xf32>
    %33 = arith.addf %31, %32 : vector<8x32xf32>
    %34 = math.tanh %33 : vector<8x32xf32>
    %35 = arith.mulf %30, %34 : vector<8x32xf32>
    %36 = arith.index_cast %c0_i32_16 : i32 to index
    %c0_20 = arith.constant 0 : index
    %c0_21 = arith.constant 0 : index
    %37 = vector.load %arg4[%36, %c0_20, %c0_21] : memref<8x8x32xf32, #tpu.memory_space<vmem>>, vector<1x8x32xf32>
    %38 = vector.shape_cast %37 : vector<1x8x32xf32> to vector<8x32xf32>
    %39 = arith.truncf %35 : vector<8x32xf32> to vector<8x32xbf16>
    %cst_22 = arith.constant dense<0.000000e+00> : vector<8x32xf32>
    %40 = tpu.matmul %39, %7, %cst_22 {dimension_numbers = #tpu.dot_dimension_numbers<[1], [0], [0], [1], [0, 0, 1, 1], [], []>} : vector<8x32xbf16>, vector<32x32xbf16>, vector<8x32xf32> -> vector<8x32xf32>
    %41 = vector.broadcast %8 : vector<1x32xf32> to vector<8x32xf32>
    %42 = arith.addf %40, %41 : vector<8x32xf32>
    %cst_23 = arith.constant 5.000000e-01 : f32
    %43 = vector.broadcast %cst_23 : f32 to vector<8x32xf32>
    %44 = arith.mulf %43, %42 : vector<8x32xf32>
    %cst_24 = arith.constant 4.471500e-02 : f32
    %45 = vector.broadcast %cst_24 : f32 to vector<8x32xf32>
    %46 = arith.mulf %45, %42 : vector<8x32xf32>
    %47 = arith.mulf %46, %42 : vector<8x32xf32>
    %48 = arith.mulf %47, %42 : vector<8x32xf32>
    %49 = arith.addf %42, %48 : vector<8x32xf32>
    %cst_25 = arith.constant 0.797884583 : f32
    %50 = vector.broadcast %cst_25 : f32 to vector<8x32xf32>
    %51 = arith.mulf %50, %49 : vector<8x32xf32>
    %52 = math.tanh %51 : vector<8x32xf32>
    %cst_26 = arith.constant 1.000000e+00 : f32
    %53 = vector.broadcast %cst_26 : f32 to vector<8x32xf32>
    %54 = arith.addf %53, %52 : vector<8x32xf32>
    %55 = arith.mulf %44, %54 : vector<8x32xf32>
    %56 = arith.addf %55, %38 : vector<8x32xf32>
    %cst_27 = arith.constant dense<0.000000e+00> : vector<8xf32>
    %57 = vector.multi_reduction <add>, %56, %cst_27 [1] : vector<8x32xf32> to vector<8xf32>
    %58 = vector.shape_cast %57 : vector<8xf32> to vector<8x1xf32>
    %cst_28 = arith.constant 3.200000e+01 : f32
    %59 = vector.broadcast %cst_28 : f32 to vector<8x1xf32>
    %60 = arith.divf %58, %59 : vector<8x1xf32>
    %61 = vector.broadcast %60 : vector<8x1xf32> to vector<8x32xf32>
    %62 = arith.subf %56, %61 : vector<8x32xf32>
    %63 = arith.mulf %62, %62 : vector<8x32xf32>
    %cst_29 = arith.constant dense<0.000000e+00> : vector<8xf32>
    %64 = vector.multi_reduction <add>, %63, %cst_29 [1] : vector<8x32xf32> to vector<8xf32>
    %65 = vector.shape_cast %64 : vector<8xf32> to vector<8x1xf32>
    %cst_30 = arith.constant 3.200000e+01 : f32
    %66 = vector.broadcast %cst_30 : f32 to vector<8x1xf32>
    %67 = arith.divf %65, %66 : vector<8x1xf32>
    %68 = vector.broadcast %60 : vector<8x1xf32> to vector<8x32xf32>
    %69 = arith.subf %56, %68 : vector<8x32xf32>
    %cst_31 = arith.constant 9.99999974E-6 : f32
    %70 = vector.broadcast %cst_31 : f32 to vector<8x1xf32>
    %71 = arith.addf %67, %70 : vector<8x1xf32>
    %72 = math.rsqrt %71 : vector<8x1xf32>
    %73 = vector.broadcast %72 : vector<8x1xf32> to vector<8x32xf32>
    %74 = arith.mulf %69, %73 : vector<8x32xf32>
    %75 = vector.broadcast %9 : vector<1x32xf32> to vector<8x32xf32>
    %76 = arith.mulf %74, %75 : vector<8x32xf32>
    %77 = vector.broadcast %10 : vector<1x32xf32> to vector<8x32xf32>
    %78 = arith.addf %76, %77 : vector<8x32xf32>
    %79 = arith.index_cast %c0_i32_16 : i32 to index
    %c0_32 = arith.constant 0 : index
    %c0_33 = arith.constant 0 : index
    %80 = vector.load %arg9[%79, %c0_32, %c0_33] : memref<8x8x32xf32, #tpu.memory_space<vmem>>, vector<1x8x32xf32>
    %81 = vector.shape_cast %80 : vector<1x8x32xf32> to vector<8x32xf32>
    %82 = vector.shape_cast %78 : vector<8x32xf32> to vector<1x8x32xf32>
    tpu.vector_store %arg9[%79, %c0_32, %c0_33], %82 {strides = array<i32>} : memref<8x8x32xf32, #tpu.memory_space<vmem>>, vector<1x8x32xf32>,
    %83 = arith.cmpi slt, %c0_i32_16, %5 : i32
    %84 = arith.select %83, %35, %11 : vector<8x32xf32>
    %85 = arith.select %83, %33, %12 : vector<8x32xf32>
    %c1_i32 = arith.constant 1 : i32
    %86 = arith.index_cast %c1_i32 : i32 to index
    %c0_34 = arith.constant 0 : index
    %c0_35 = arith.constant 0 : index
    %87 = vector.load %arg2[%86, %c0_34, %c0_35] : memref<8x8x128xf32, #tpu.memory_space<vmem>>, vector<1x8x128xf32>
    %88 = vector.shape_cast %87 : vector<1x8x128xf32> to vector<8x128xf32>
    %89 = arith.truncf %84 : vector<8x32xf32> to vector<8x32xbf16>
    %cst_36 = arith.constant dense<0.000000e+00> : vector<8x128xf32>
    %90 = tpu.matmul %89, %6, %cst_36 {dimension_numbers = #tpu.dot_dimension_numbers<[1], [0], [0], [1], [0, 0, 1, 1], [], []>} : vector<8x32xbf16>, vector<32x128xbf16>, vector<8x128xf32> -> vector<8x128xf32>
    %91 = arith.addf %88, %90 : vector<8x128xf32>
    %92 = vector.extract_strided_slice %91 {offsets = [0, 0], sizes = [8, 32], strides = [1, 1]} : vector<8x128xf32> to vector<8x32xf32>
    %93 = math.exp %92 : vector<8x32xf32>
    %94 = vector.extract_strided_slice %91 {offsets = [0, 32], sizes = [8, 32], strides = [1, 1]} : vector<8x128xf32> to vector<8x32xf32>
    %95 = math.exp %94 : vector<8x32xf32>
    %96 = vector.extract_strided_slice %91 {offsets = [0, 64], sizes = [8, 32], strides = [1, 1]} : vector<8x128xf32> to vector<8x32xf32>
    %97 = math.tanh %96 : vector<8x32xf32>
    %98 = vector.extract_strided_slice %91 {offsets = [0, 96], sizes = [8, 32], strides = [1, 1]} : vector<8x128xf32> to vector<8x32xf32>
    %99 = arith.negf %98 : vector<8x32xf32>
    %100 = math.exp %99 : vector<8x32xf32>
    %cst_37 = arith.constant 1.000000e+00 : f32
    %101 = vector.broadcast %cst_37 : f32 to vector<8x32xf32>
    %102 = arith.addf %101, %100 : vector<8x32xf32>
    %103 = arith.divf %101, %102 : vector<8x32xf32>
    %104 = arith.mulf %95, %85 : vector<8x32xf32>
    %105 = arith.mulf %93, %97 : vector<8x32xf32>
    %106 = arith.addf %104, %105 : vector<8x32xf32>
    %107 = math.tanh %106 : vector<8x32xf32>
    %108 = arith.mulf %103, %107 : vector<8x32xf32>
    %109 = arith.index_cast %c1_i32 : i32 to index
    %c0_38 = arith.constant 0 : index
    %c0_39 = arith.constant 0 : index
    %110 = vector.load %arg4[%109, %c0_38, %c0_39] : memref<8x8x32xf32, #tpu.memory_space<vmem>>, vector<1x8x32xf32>
    %111 = vector.shape_cast %110 : vector<1x8x32xf32> to vector<8x32xf32>
    %112 = arith.truncf %108 : vector<8x32xf32> to vector<8x32xbf16>
    %cst_40 = arith.constant dense<0.000000e+00> : vector<8x32xf32>
    %113 = tpu.matmul %112, %7, %cst_40 {dimension_numbers = #tpu.dot_dimension_numbers<[1], [0], [0], [1], [0, 0, 1, 1], [], []>} : vector<8x32xbf16>, vector<32x32xbf16>, vector<8x32xf32> -> vector<8x32xf32>
    %114 = vector.broadcast %8 : vector<1x32xf32> to vector<8x32xf32>
    %115 = arith.addf %113, %114 : vector<8x32xf32>
    %cst_41 = arith.constant 5.000000e-01 : f32
    %116 = vector.broadcast %cst_41 : f32 to vector<8x32xf32>
    %117 = arith.mulf %116, %115 : vector<8x32xf32>
    %cst_42 = arith.constant 4.471500e-02 : f32
    %118 = vector.broadcast %cst_42 : f32 to vector<8x32xf32>
    %119 = arith.mulf %118, %115 : vector<8x32xf32>
    %120 = arith.mulf %119, %115 : vector<8x32xf32>
    %121 = arith.mulf %120, %115 : vector<8x32xf32>
    %122 = arith.addf %115, %121 : vector<8x32xf32>
    %cst_43 = arith.constant 0.797884583 : f32
    %123 = vector.broadcast %cst_43 : f32 to vector<8x32xf32>
    %124 = arith.mulf %123, %122 : vector<8x32xf32>
    %125 = math.tanh %124 : vector<8x32xf32>
    %cst_44 = arith.constant 1.000000e+00 : f32
    %126 = vector.broadcast %cst_44 : f32 to vector<8x32xf32>
    %127 = arith.addf %126, %125 : vector<8x32xf32>
    %128 = arith.mulf %117, %127 : vector<8x32xf32>
    %129 = arith.addf %128, %111 : vector<8x32xf32>
    %cst_45 = arith.constant dense<0.000000e+00> : vector<8xf32>
    %130 = vector.multi_reduction <add>, %129, %cst_45 [1] : vector<8x32xf32> to vector<8xf32>
    %131 = vector.shape_cast %130 : vector<8xf32> to vector<8x1xf32>
    %cst_46 = arith.constant 3.200000e+01 : f32
    %132 = vector.broadcast %cst_46 : f32 to vector<8x1xf32>
    %133 = arith.divf %131, %132 : vector<8x1xf32>
    %134 = vector.broadcast %133 : vector<8x1xf32> to vector<8x32xf32>
    %135 = arith.subf %129, %134 : vector<8x32xf32>
    %136 = arith.mulf %135, %135 : vector<8x32xf32>
    %cst_47 = arith.constant dense<0.000000e+00> : vector<8xf32>
    %137 = vector.multi_reduction <add>, %136, %cst_47 [1] : vector<8x32xf32> to vector<8xf32>
    %138 = vector.shape_cast %137 : vector<8xf32> to vector<8x1xf32>
    %cst_48 = arith.constant 3.200000e+01 : f32
    %139 = vector.broadcast %cst_48 : f32 to vector<8x1xf32>
    %140 = arith.divf %138, %139 : vector<8x1xf32>
    %141 = vector.broadcast %133 : vector<8x1xf32> to vector<8x32xf32>
    %142 = arith.subf %129, %141 : vector<8x32xf32>
    %cst_49 = arith.constant 9.99999974E-6 : f32
    %143 = vector.broadcast %cst_49 : f32 to vector<8x1xf32>
    %144 = arith.addf %140, %143 : vector<8x1xf32>
    %145 = math.rsqrt %144 : vector<8x1xf32>
    %146 = vector.broadcast %145 : vector<8x1xf32> to vector<8x32xf32>
    %147 = arith.mulf %142, %146 : vector<8x32xf32>
    %148 = vector.broadcast %9 : vector<1x32xf32> to vector<8x32xf32>
    %149 = arith.mulf %147, %148 : vector<8x32xf32>
    %150 = vector.broadcast %10 : vector<1x32xf32> to vector<8x32xf32>
    %151 = arith.addf %149, %150 : vector<8x32xf32>
    %152 = arith.index_cast %c1_i32 : i32 to index
    %c0_50 = arith.constant 0 : index
    %c0_51 = arith.constant 0 : index
    %153 = vector.load %arg9[%152, %c0_50, %c0_51] : memref<8x8x32xf32, #tpu.memory_space<vmem>>, vector<1x8x32xf32>
    %154 = vector.shape_cast %153 : vector<1x8x32xf32> to vector<8x32xf32>
    %155 = vector.shape_cast %151 : vector<8x32xf32> to vector<1x8x32xf32>
    tpu.vector_store %arg9[%152, %c0_50, %c0_51], %155 {strides = array<i32>} : memref<8x8x32xf32, #tpu.memory_space<vmem>>, vector<1x8x32xf32>,
    %156 = arith.cmpi slt, %c1_i32, %5 : i32
    %157 = arith.select %156, %108, %84 : vector<8x32xf32>
    %158 = arith.select %156, %106, %85 : vector<8x32xf32>
    %c2_i32 = arith.constant 2 : i32
    %159 = arith.index_cast %c2_i32 : i32 to index
    %c0_52 = arith.constant 0 : index
    %c0_53 = arith.constant 0 : index
    %160 = vector.load %arg2[%159, %c0_52, %c0_53] : memref<8x8x128xf32, #tpu.memory_space<vmem>>, vector<1x8x128xf32>
    %161 = vector.shape_cast %160 : vector<1x8x128xf32> to vector<8x128xf32>
    %162 = arith.truncf %157 : vector<8x32xf32> to vector<8x32xbf16>
    %cst_54 = arith.constant dense<0.000000e+00> : vector<8x128xf32>
    %163 = tpu.matmul %162, %6, %cst_54 {dimension_numbers = #tpu.dot_dimension_numbers<[1], [0], [0], [1], [0, 0, 1, 1], [], []>} : vector<8x32xbf16>, vector<32x128xbf16>, vector<8x128xf32> -> vector<8x128xf32>
    %164 = arith.addf %161, %163 : vector<8x128xf32>
    %165 = vector.extract_strided_slice %164 {offsets = [0, 0], sizes = [8, 32], strides = [1, 1]} : vector<8x128xf32> to vector<8x32xf32>
    %166 = math.exp %165 : vector<8x32xf32>
    %167 = vector.extract_strided_slice %164 {offsets = [0, 32], sizes = [8, 32], strides = [1, 1]} : vector<8x128xf32> to vector<8x32xf32>
    %168 = math.exp %167 : vector<8x32xf32>
    %169 = vector.extract_strided_slice %164 {offsets = [0, 64], sizes = [8, 32], strides = [1, 1]} : vector<8x128xf32> to vector<8x32xf32>
    %170 = math.tanh %169 : vector<8x32xf32>
    %171 = vector.extract_strided_slice %164 {offsets = [0, 96], sizes = [8, 32], strides = [1, 1]} : vector<8x128xf32> to vector<8x32xf32>
    %172 = arith.negf %171 : vector<8x32xf32>
    %173 = math.exp %172 : vector<8x32xf32>
    %cst_55 = arith.constant 1.000000e+00 : f32
    %174 = vector.broadcast %cst_55 : f32 to vector<8x32xf32>
    %175 = arith.addf %174, %173 : vector<8x32xf32>
    %176 = arith.divf %174, %175 : vector<8x32xf32>
    %177 = arith.mulf %168, %158 : vector<8x32xf32>
    %178 = arith.mulf %166, %170 : vector<8x32xf32>
    %179 = arith.addf %177, %178 : vector<8x32xf32>
    %180 = math.tanh %179 : vector<8x32xf32>
    %181 = arith.mulf %176, %180 : vector<8x32xf32>
    %182 = arith.index_cast %c2_i32 : i32 to index
    %c0_56 = arith.constant 0 : index
    %c0_57 = arith.constant 0 : index
    %183 = vector.load %arg4[%182, %c0_56, %c0_57] : memref<8x8x32xf32, #tpu.memory_space<vmem>>, vector<1x8x32xf32>
    %184 = vector.shape_cast %183 : vector<1x8x32xf32> to vector<8x32xf32>
    %185 = arith.truncf %181 : vector<8x32xf32> to vector<8x32xbf16>
    %cst_58 = arith.constant dense<0.000000e+00> : vector<8x32xf32>
    %186 = tpu.matmul %185, %7, %cst_58 {dimension_numbers = #tpu.dot_dimension_numbers<[1], [0], [0], [1], [0, 0, 1, 1], [], []>} : vector<8x32xbf16>, vector<32x32xbf16>, vector<8x32xf32> -> vector<8x32xf32>
    %187 = vector.broadcast %8 : vector<1x32xf32> to vector<8x32xf32>
    %188 = arith.addf %186, %187 : vector<8x32xf32>
    %cst_59 = arith.constant 5.000000e-01 : f32
    %189 = vector.broadcast %cst_59 : f32 to vector<8x32xf32>
    %190 = arith.mulf %189, %188 : vector<8x32xf32>
    %cst_60 = arith.constant 4.471500e-02 : f32
    %191 = vector.broadcast %cst_60 : f32 to vector<8x32xf32>
    %192 = arith.mulf %191, %188 : vector<8x32xf32>
    %193 = arith.mulf %192, %188 : vector<8x32xf32>
    %194 = arith.mulf %193, %188 : vector<8x32xf32>
    %195 = arith.addf %188, %194 : vector<8x32xf32>
    %cst_61 = arith.constant 0.797884583 : f32
    %196 = vector.broadcast %cst_61 : f32 to vector<8x32xf32>
    %197 = arith.mulf %196, %195 : vector<8x32xf32>
    %198 = math.tanh %197 : vector<8x32xf32>
    %cst_62 = arith.constant 1.000000e+00 : f32
    %199 = vector.broadcast %cst_62 : f32 to vector<8x32xf32>
    %200 = arith.addf %199, %198 : vector<8x32xf32>
    %201 = arith.mulf %190, %200 : vector<8x32xf32>
    %202 = arith.addf %201, %184 : vector<8x32xf32>
    %cst_63 = arith.constant dense<0.000000e+00> : vector<8xf32>
    %203 = vector.multi_reduction <add>, %202, %cst_63 [1] : vector<8x32xf32> to vector<8xf32>
    %204 = vector.shape_cast %203 : vector<8xf32> to vector<8x1xf32>
    %cst_64 = arith.constant 3.200000e+01 : f32
    %205 = vector.broadcast %cst_64 : f32 to vector<8x1xf32>
    %206 = arith.divf %204, %205 : vector<8x1xf32>
    %207 = vector.broadcast %206 : vector<8x1xf32> to vector<8x32xf32>
    %208 = arith.subf %202, %207 : vector<8x32xf32>
    %209 = arith.mulf %208, %208 : vector<8x32xf32>
    %cst_65 = arith.constant dense<0.000000e+00> : vector<8xf32>
    %210 = vector.multi_reduction <add>, %209, %cst_65 [1] : vector<8x32xf32> to vector<8xf32>
    %211 = vector.shape_cast %210 : vector<8xf32> to vector<8x1xf32>
    %cst_66 = arith.constant 3.200000e+01 : f32
    %212 = vector.broadcast %cst_66 : f32 to vector<8x1xf32>
    %213 = arith.divf %211, %212 : vector<8x1xf32>
    %214 = vector.broadcast %206 : vector<8x1xf32> to vector<8x32xf32>
    %215 = arith.subf %202, %214 : vector<8x32xf32>
    %cst_67 = arith.constant 9.99999974E-6 : f32
    %216 = vector.broadcast %cst_67 : f32 to vector<8x1xf32>
    %217 = arith.addf %213, %216 : vector<8x1xf32>
    %218 = math.rsqrt %217 : vector<8x1xf32>
    %219 = vector.broadcast %218 : vector<8x1xf32> to vector<8x32xf32>
    %220 = arith.mulf %215, %219 : vector<8x32xf32>
    %221 = vector.broadcast %9 : vector<1x32xf32> to vector<8x32xf32>
    %222 = arith.mulf %220, %221 : vector<8x32xf32>
    %223 = vector.broadcast %10 : vector<1x32xf32> to vector<8x32xf32>
    %224 = arith.addf %222, %223 : vector<8x32xf32>
    %225 = arith.index_cast %c2_i32 : i32 to index
    %c0_68 = arith.constant 0 : index
    %c0_69 = arith.constant 0 : index
    %226 = vector.load %arg9[%225, %c0_68, %c0_69] : memref<8x8x32xf32, #tpu.memory_space<vmem>>, vector<1x8x32xf32>
    %227 = vector.shape_cast %226 : vector<1x8x32xf32> to vector<8x32xf32>
    %228 = vector.shape_cast %224 : vector<8x32xf32> to vector<1x8x32xf32>
    tpu.vector_store %arg9[%225, %c0_68, %c0_69], %228 {strides = array<i32>} : memref<8x8x32xf32, #tpu.memory_space<vmem>>, vector<1x8x32xf32>,
    %229 = arith.cmpi slt, %c2_i32, %5 : i32
    %230 = arith.select %229, %181, %157 : vector<8x32xf32>
    %231 = arith.select %229, %179, %158 : vector<8x32xf32>
    %c3_i32 = arith.constant 3 : i32
    %232 = arith.index_cast %c3_i32 : i32 to index
    %c0_70 = arith.constant 0 : index
    %c0_71 = arith.constant 0 : index
    %233 = vector.load %arg2[%232, %c0_70, %c0_71] : memref<8x8x128xf32, #tpu.memory_space<vmem>>, vector<1x8x128xf32>
    %234 = vector.shape_cast %233 : vector<1x8x128xf32> to vector<8x128xf32>
    %235 = arith.truncf %230 : vector<8x32xf32> to vector<8x32xbf16>
    %cst_72 = arith.constant dense<0.000000e+00> : vector<8x128xf32>
    %236 = tpu.matmul %235, %6, %cst_72 {dimension_numbers = #tpu.dot_dimension_numbers<[1], [0], [0], [1], [0, 0, 1, 1], [], []>} : vector<8x32xbf16>, vector<32x128xbf16>, vector<8x128xf32> -> vector<8x128xf32>
    %237 = arith.addf %234, %236 : vector<8x128xf32>
    %238 = vector.extract_strided_slice %237 {offsets = [0, 0], sizes = [8, 32], strides = [1, 1]} : vector<8x128xf32> to vector<8x32xf32>
    %239 = math.exp %238 : vector<8x32xf32>
    %240 = vector.extract_strided_slice %237 {offsets = [0, 32], sizes = [8, 32], strides = [1, 1]} : vector<8x128xf32> to vector<8x32xf32>
    %241 = math.exp %240 : vector<8x32xf32>
    %242 = vector.extract_strided_slice %237 {offsets = [0, 64], sizes = [8, 32], strides = [1, 1]} : vector<8x128xf32> to vector<8x32xf32>
    %243 = math.tanh %242 : vector<8x32xf32>
    %244 = vector.extract_strided_slice %237 {offsets = [0, 96], sizes = [8, 32], strides = [1, 1]} : vector<8x128xf32> to vector<8x32xf32>
    %245 = arith.negf %244 : vector<8x32xf32>
    %246 = math.exp %245 : vector<8x32xf32>
    %cst_73 = arith.constant 1.000000e+00 : f32
    %247 = vector.broadcast %cst_73 : f32 to vector<8x32xf32>
    %248 = arith.addf %247, %246 : vector<8x32xf32>
    %249 = arith.divf %247, %248 : vector<8x32xf32>
    %250 = arith.mulf %241, %231 : vector<8x32xf32>
    %251 = arith.mulf %239, %243 : vector<8x32xf32>
    %252 = arith.addf %250, %251 : vector<8x32xf32>
    %253 = math.tanh %252 : vector<8x32xf32>
    %254 = arith.mulf %249, %253 : vector<8x32xf32>
    %255 = arith.index_cast %c3_i32 : i32 to index
    %c0_74 = arith.constant 0 : index
    %c0_75 = arith.constant 0 : index
    %256 = vector.load %arg4[%255, %c0_74, %c0_75] : memref<8x8x32xf32, #tpu.memory_space<vmem>>, vector<1x8x32xf32>
    %257 = vector.shape_cast %256 : vector<1x8x32xf32> to vector<8x32xf32>
    %258 = arith.truncf %254 : vector<8x32xf32> to vector<8x32xbf16>
    %cst_76 = arith.constant dense<0.000000e+00> : vector<8x32xf32>
    %259 = tpu.matmul %258, %7, %cst_76 {dimension_numbers = #tpu.dot_dimension_numbers<[1], [0], [0], [1], [0, 0, 1, 1], [], []>} : vector<8x32xbf16>, vector<32x32xbf16>, vector<8x32xf32> -> vector<8x32xf32>
    %260 = vector.broadcast %8 : vector<1x32xf32> to vector<8x32xf32>
    %261 = arith.addf %259, %260 : vector<8x32xf32>
    %cst_77 = arith.constant 5.000000e-01 : f32
    %262 = vector.broadcast %cst_77 : f32 to vector<8x32xf32>
    %263 = arith.mulf %262, %261 : vector<8x32xf32>
    %cst_78 = arith.constant 4.471500e-02 : f32
    %264 = vector.broadcast %cst_78 : f32 to vector<8x32xf32>
    %265 = arith.mulf %264, %261 : vector<8x32xf32>
    %266 = arith.mulf %265, %261 : vector<8x32xf32>
    %267 = arith.mulf %266, %261 : vector<8x32xf32>
    %268 = arith.addf %261, %267 : vector<8x32xf32>
    %cst_79 = arith.constant 0.797884583 : f32
    %269 = vector.broadcast %cst_79 : f32 to vector<8x32xf32>
    %270 = arith.mulf %269, %268 : vector<8x32xf32>
    %271 = math.tanh %270 : vector<8x32xf32>
    %cst_80 = arith.constant 1.000000e+00 : f32
    %272 = vector.broadcast %cst_80 : f32 to vector<8x32xf32>
    %273 = arith.addf %272, %271 : vector<8x32xf32>
    %274 = arith.mulf %263, %273 : vector<8x32xf32>
    %275 = arith.addf %274, %257 : vector<8x32xf32>
    %cst_81 = arith.constant dense<0.000000e+00> : vector<8xf32>
    %276 = vector.multi_reduction <add>, %275, %cst_81 [1] : vector<8x32xf32> to vector<8xf32>
    %277 = vector.shape_cast %276 : vector<8xf32> to vector<8x1xf32>
    %cst_82 = arith.constant 3.200000e+01 : f32
    %278 = vector.broadcast %cst_82 : f32 to vector<8x1xf32>
    %279 = arith.divf %277, %278 : vector<8x1xf32>
    %280 = vector.broadcast %279 : vector<8x1xf32> to vector<8x32xf32>
    %281 = arith.subf %275, %280 : vector<8x32xf32>
    %282 = arith.mulf %281, %281 : vector<8x32xf32>
    %cst_83 = arith.constant dense<0.000000e+00> : vector<8xf32>
    %283 = vector.multi_reduction <add>, %282, %cst_83 [1] : vector<8x32xf32> to vector<8xf32>
    %284 = vector.shape_cast %283 : vector<8xf32> to vector<8x1xf32>
    %cst_84 = arith.constant 3.200000e+01 : f32
    %285 = vector.broadcast %cst_84 : f32 to vector<8x1xf32>
    %286 = arith.divf %284, %285 : vector<8x1xf32>
    %287 = vector.broadcast %279 : vector<8x1xf32> to vector<8x32xf32>
    %288 = arith.subf %275, %287 : vector<8x32xf32>
    %cst_85 = arith.constant 9.99999974E-6 : f32
    %289 = vector.broadcast %cst_85 : f32 to vector<8x1xf32>
    %290 = arith.addf %286, %289 : vector<8x1xf32>
    %291 = math.rsqrt %290 : vector<8x1xf32>
    %292 = vector.broadcast %291 : vector<8x1xf32> to vector<8x32xf32>
    %293 = arith.mulf %288, %292 : vector<8x32xf32>
    %294 = vector.broadcast %9 : vector<1x32xf32> to vector<8x32xf32>
    %295 = arith.mulf %293, %294 : vector<8x32xf32>
    %296 = vector.broadcast %10 : vector<1x32xf32> to vector<8x32xf32>
    %297 = arith.addf %295, %296 : vector<8x32xf32>
    %298 = arith.index_cast %c3_i32 : i32 to index
    %c0_86 = arith.constant 0 : index
    %c0_87 = arith.constant 0 : index
    %299 = vector.load %arg9[%298, %c0_86, %c0_87] : memref<8x8x32xf32, #tpu.memory_space<vmem>>, vector<1x8x32xf32>
    %300 = vector.shape_cast %299 : vector<1x8x32xf32> to vector<8x32xf32>
    %301 = vector.shape_cast %297 : vector<8x32xf32> to vector<1x8x32xf32>
    tpu.vector_store %arg9[%298, %c0_86, %c0_87], %301 {strides = array<i32>} : memref<8x8x32xf32, #tpu.memory_space<vmem>>, vector<1x8x32xf32>,
    %302 = arith.cmpi slt, %c3_i32, %5 : i32
    %303 = arith.select %302, %254, %230 : vector<8x32xf32>
    %304 = arith.select %302, %252, %231 : vector<8x32xf32>
    %c4_i32 = arith.constant 4 : i32
    %305 = arith.index_cast %c4_i32 : i32 to index
    %c0_88 = arith.constant 0 : index
    %c0_89 = arith.constant 0 : index
    %306 = vector.load %arg2[%305, %c0_88, %c0_89] : memref<8x8x128xf32, #tpu.memory_space<vmem>>, vector<1x8x128xf32>
    %307 = vector.shape_cast %306 : vector<1x8x128xf32> to vector<8x128xf32>
    %308 = arith.truncf %303 : vector<8x32xf32> to vector<8x32xbf16>
    %cst_90 = arith.constant dense<0.000000e+00> : vector<8x128xf32>
    %309 = tpu.matmul %308, %6, %cst_90 {dimension_numbers = #tpu.dot_dimension_numbers<[1], [0], [0], [1], [0, 0, 1, 1], [], []>} : vector<8x32xbf16>, vector<32x128xbf16>, vector<8x128xf32> -> vector<8x128xf32>
    %310 = arith.addf %307, %309 : vector<8x128xf32>
    %311 = vector.extract_strided_slice %310 {offsets = [0, 0], sizes = [8, 32], strides = [1, 1]} : vector<8x128xf32> to vector<8x32xf32>
    %312 = math.exp %311 : vector<8x32xf32>
    %313 = vector.extract_strided_slice %310 {offsets = [0, 32], sizes = [8, 32], strides = [1, 1]} : vector<8x128xf32> to vector<8x32xf32>
    %314 = math.exp %313 : vector<8x32xf32>
    %315 = vector.extract_strided_slice %310 {offsets = [0, 64], sizes = [8, 32], strides = [1, 1]} : vector<8x128xf32> to vector<8x32xf32>
    %316 = math.tanh %315 : vector<8x32xf32>
    %317 = vector.extract_strided_slice %310 {offsets = [0, 96], sizes = [8, 32], strides = [1, 1]} : vector<8x128xf32> to vector<8x32xf32>
    %318 = arith.negf %317 : vector<8x32xf32>
    %319 = math.exp %318 : vector<8x32xf32>
    %cst_91 = arith.constant 1.000000e+00 : f32
    %320 = vector.broadcast %cst_91 : f32 to vector<8x32xf32>
    %321 = arith.addf %320, %319 : vector<8x32xf32>
    %322 = arith.divf %320, %321 : vector<8x32xf32>
    %323 = arith.mulf %314, %304 : vector<8x32xf32>
    %324 = arith.mulf %312, %316 : vector<8x32xf32>
    %325 = arith.addf %323, %324 : vector<8x32xf32>
    %326 = math.tanh %325 : vector<8x32xf32>
    %327 = arith.mulf %322, %326 : vector<8x32xf32>
    %328 = arith.index_cast %c4_i32 : i32 to index
    %c0_92 = arith.constant 0 : index
    %c0_93 = arith.constant 0 : index
    %329 = vector.load %arg4[%328, %c0_92, %c0_93] : memref<8x8x32xf32, #tpu.memory_space<vmem>>, vector<1x8x32xf32>
    %330 = vector.shape_cast %329 : vector<1x8x32xf32> to vector<8x32xf32>
    %331 = arith.truncf %327 : vector<8x32xf32> to vector<8x32xbf16>
    %cst_94 = arith.constant dense<0.000000e+00> : vector<8x32xf32>
    %332 = tpu.matmul %331, %7, %cst_94 {dimension_numbers = #tpu.dot_dimension_numbers<[1], [0], [0], [1], [0, 0, 1, 1], [], []>} : vector<8x32xbf16>, vector<32x32xbf16>, vector<8x32xf32> -> vector<8x32xf32>
    %333 = vector.broadcast %8 : vector<1x32xf32> to vector<8x32xf32>
    %334 = arith.addf %332, %333 : vector<8x32xf32>
    %cst_95 = arith.constant 5.000000e-01 : f32
    %335 = vector.broadcast %cst_95 : f32 to vector<8x32xf32>
    %336 = arith.mulf %335, %334 : vector<8x32xf32>
    %cst_96 = arith.constant 4.471500e-02 : f32
    %337 = vector.broadcast %cst_96 : f32 to vector<8x32xf32>
    %338 = arith.mulf %337, %334 : vector<8x32xf32>
    %339 = arith.mulf %338, %334 : vector<8x32xf32>
    %340 = arith.mulf %339, %334 : vector<8x32xf32>
    %341 = arith.addf %334, %340 : vector<8x32xf32>
    %cst_97 = arith.constant 0.797884583 : f32
    %342 = vector.broadcast %cst_97 : f32 to vector<8x32xf32>
    %343 = arith.mulf %342, %341 : vector<8x32xf32>
    %344 = math.tanh %343 : vector<8x32xf32>
    %cst_98 = arith.constant 1.000000e+00 : f32
    %345 = vector.broadcast %cst_98 : f32 to vector<8x32xf32>
    %346 = arith.addf %345, %344 : vector<8x32xf32>
    %347 = arith.mulf %336, %346 : vector<8x32xf32>
    %348 = arith.addf %347, %330 : vector<8x32xf32>
    %cst_99 = arith.constant dense<0.000000e+00> : vector<8xf32>
    %349 = vector.multi_reduction <add>, %348, %cst_99 [1] : vector<8x32xf32> to vector<8xf32>
    %350 = vector.shape_cast %349 : vector<8xf32> to vector<8x1xf32>
    %cst_100 = arith.constant 3.200000e+01 : f32
    %351 = vector.broadcast %cst_100 : f32 to vector<8x1xf32>
    %352 = arith.divf %350, %351 : vector<8x1xf32>
    %353 = vector.broadcast %352 : vector<8x1xf32> to vector<8x32xf32>
    %354 = arith.subf %348, %353 : vector<8x32xf32>
    %355 = arith.mulf %354, %354 : vector<8x32xf32>
    %cst_101 = arith.constant dense<0.000000e+00> : vector<8xf32>
    %356 = vector.multi_reduction <add>, %355, %cst_101 [1] : vector<8x32xf32> to vector<8xf32>
    %357 = vector.shape_cast %356 : vector<8xf32> to vector<8x1xf32>
    %cst_102 = arith.constant 3.200000e+01 : f32
    %358 = vector.broadcast %cst_102 : f32 to vector<8x1xf32>
    %359 = arith.divf %357, %358 : vector<8x1xf32>
    %360 = vector.broadcast %352 : vector<8x1xf32> to vector<8x32xf32>
    %361 = arith.subf %348, %360 : vector<8x32xf32>
    %cst_103 = arith.constant 9.99999974E-6 : f32
    %362 = vector.broadcast %cst_103 : f32 to vector<8x1xf32>
    %363 = arith.addf %359, %362 : vector<8x1xf32>
    %364 = math.rsqrt %363 : vector<8x1xf32>
    %365 = vector.broadcast %364 : vector<8x1xf32> to vector<8x32xf32>
    %366 = arith.mulf %361, %365 : vector<8x32xf32>
    %367 = vector.broadcast %9 : vector<1x32xf32> to vector<8x32xf32>
    %368 = arith.mulf %366, %367 : vector<8x32xf32>
    %369 = vector.broadcast %10 : vector<1x32xf32> to vector<8x32xf32>
    %370 = arith.addf %368, %369 : vector<8x32xf32>
    %371 = arith.index_cast %c4_i32 : i32 to index
    %c0_104 = arith.constant 0 : index
    %c0_105 = arith.constant 0 : index
    %372 = vector.load %arg9[%371, %c0_104, %c0_105] : memref<8x8x32xf32, #tpu.memory_space<vmem>>, vector<1x8x32xf32>
    %373 = vector.shape_cast %372 : vector<1x8x32xf32> to vector<8x32xf32>
    %374 = vector.shape_cast %370 : vector<8x32xf32> to vector<1x8x32xf32>
    tpu.vector_store %arg9[%371, %c0_104, %c0_105], %374 {strides = array<i32>} : memref<8x8x32xf32, #tpu.memory_space<vmem>>, vector<1x8x32xf32>,
    %375 = arith.cmpi slt, %c4_i32, %5 : i32
    %376 = arith.select %375, %327, %303 : vector<8x32xf32>
    %377 = arith.select %375, %325, %304 : vector<8x32xf32>
    %c5_i32 = arith.constant 5 : i32
    %378 = arith.index_cast %c5_i32 : i32 to index
    %c0_106 = arith.constant 0 : index
    %c0_107 = arith.constant 0 : index
    %379 = vector.load %arg2[%378, %c0_106, %c0_107] : memref<8x8x128xf32, #tpu.memory_space<vmem>>, vector<1x8x128xf32>
    %380 = vector.shape_cast %379 : vector<1x8x128xf32> to vector<8x128xf32>
    %381 = arith.truncf %376 : vector<8x32xf32> to vector<8x32xbf16>
    %cst_108 = arith.constant dense<0.000000e+00> : vector<8x128xf32>
    %382 = tpu.matmul %381, %6, %cst_108 {dimension_numbers = #tpu.dot_dimension_numbers<[1], [0], [0], [1], [0, 0, 1, 1], [], []>} : vector<8x32xbf16>, vector<32x128xbf16>, vector<8x128xf32> -> vector<8x128xf32>
    %383 = arith.addf %380, %382 : vector<8x128xf32>
    %384 = vector.extract_strided_slice %383 {offsets = [0, 0], sizes = [8, 32], strides = [1, 1]} : vector<8x128xf32> to vector<8x32xf32>
    %385 = math.exp %384 : vector<8x32xf32>
    %386 = vector.extract_strided_slice %383 {offsets = [0, 32], sizes = [8, 32], strides = [1, 1]} : vector<8x128xf32> to vector<8x32xf32>
    %387 = math.exp %386 : vector<8x32xf32>
    %388 = vector.extract_strided_slice %383 {offsets = [0, 64], sizes = [8, 32], strides = [1, 1]} : vector<8x128xf32> to vector<8x32xf32>
    %389 = math.tanh %388 : vector<8x32xf32>
    %390 = vector.extract_strided_slice %383 {offsets = [0, 96], sizes = [8, 32], strides = [1, 1]} : vector<8x128xf32> to vector<8x32xf32>
    %391 = arith.negf %390 : vector<8x32xf32>
    %392 = math.exp %391 : vector<8x32xf32>
    %cst_109 = arith.constant 1.000000e+00 : f32
    %393 = vector.broadcast %cst_109 : f32 to vector<8x32xf32>
    %394 = arith.addf %393, %392 : vector<8x32xf32>
    %395 = arith.divf %393, %394 : vector<8x32xf32>
    %396 = arith.mulf %387, %377 : vector<8x32xf32>
    %397 = arith.mulf %385, %389 : vector<8x32xf32>
    %398 = arith.addf %396, %397 : vector<8x32xf32>
    %399 = math.tanh %398 : vector<8x32xf32>
    %400 = arith.mulf %395, %399 : vector<8x32xf32>
    %401 = arith.index_cast %c5_i32 : i32 to index
    %c0_110 = arith.constant 0 : index
    %c0_111 = arith.constant 0 : index
    %402 = vector.load %arg4[%401, %c0_110, %c0_111] : memref<8x8x32xf32, #tpu.memory_space<vmem>>, vector<1x8x32xf32>
    %403 = vector.shape_cast %402 : vector<1x8x32xf32> to vector<8x32xf32>
    %404 = arith.truncf %400 : vector<8x32xf32> to vector<8x32xbf16>
    %cst_112 = arith.constant dense<0.000000e+00> : vector<8x32xf32>
    %405 = tpu.matmul %404, %7, %cst_112 {dimension_numbers = #tpu.dot_dimension_numbers<[1], [0], [0], [1], [0, 0, 1, 1], [], []>} : vector<8x32xbf16>, vector<32x32xbf16>, vector<8x32xf32> -> vector<8x32xf32>
    %406 = vector.broadcast %8 : vector<1x32xf32> to vector<8x32xf32>
    %407 = arith.addf %405, %406 : vector<8x32xf32>
    %cst_113 = arith.constant 5.000000e-01 : f32
    %408 = vector.broadcast %cst_113 : f32 to vector<8x32xf32>
    %409 = arith.mulf %408, %407 : vector<8x32xf32>
    %cst_114 = arith.constant 4.471500e-02 : f32
    %410 = vector.broadcast %cst_114 : f32 to vector<8x32xf32>
    %411 = arith.mulf %410, %407 : vector<8x32xf32>
    %412 = arith.mulf %411, %407 : vector<8x32xf32>
    %413 = arith.mulf %412, %407 : vector<8x32xf32>
    %414 = arith.addf %407, %413 : vector<8x32xf32>
    %cst_115 = arith.constant 0.797884583 : f32
    %415 = vector.broadcast %cst_115 : f32 to vector<8x32xf32>
    %416 = arith.mulf %415, %414 : vector<8x32xf32>
    %417 = math.tanh %416 : vector<8x32xf32>
    %cst_116 = arith.constant 1.000000e+00 : f32
    %418 = vector.broadcast %cst_116 : f32 to vector<8x32xf32>
    %419 = arith.addf %418, %417 : vector<8x32xf32>
    %420 = arith.mulf %409, %419 : vector<8x32xf32>
    %421 = arith.addf %420, %403 : vector<8x32xf32>
    %cst_117 = arith.constant dense<0.000000e+00> : vector<8xf32>
    %422 = vector.multi_reduction <add>, %421, %cst_117 [1] : vector<8x32xf32> to vector<8xf32>
    %423 = vector.shape_cast %422 : vector<8xf32> to vector<8x1xf32>
    %cst_118 = arith.constant 3.200000e+01 : f32
    %424 = vector.broadcast %cst_118 : f32 to vector<8x1xf32>
    %425 = arith.divf %423, %424 : vector<8x1xf32>
    %426 = vector.broadcast %425 : vector<8x1xf32> to vector<8x32xf32>
    %427 = arith.subf %421, %426 : vector<8x32xf32>
    %428 = arith.mulf %427, %427 : vector<8x32xf32>
    %cst_119 = arith.constant dense<0.000000e+00> : vector<8xf32>
    %429 = vector.multi_reduction <add>, %428, %cst_119 [1] : vector<8x32xf32> to vector<8xf32>
    %430 = vector.shape_cast %429 : vector<8xf32> to vector<8x1xf32>
    %cst_120 = arith.constant 3.200000e+01 : f32
    %431 = vector.broadcast %cst_120 : f32 to vector<8x1xf32>
    %432 = arith.divf %430, %431 : vector<8x1xf32>
    %433 = vector.broadcast %425 : vector<8x1xf32> to vector<8x32xf32>
    %434 = arith.subf %421, %433 : vector<8x32xf32>
    %cst_121 = arith.constant 9.99999974E-6 : f32
    %435 = vector.broadcast %cst_121 : f32 to vector<8x1xf32>
    %436 = arith.addf %432, %435 : vector<8x1xf32>
    %437 = math.rsqrt %436 : vector<8x1xf32>
    %438 = vector.broadcast %437 : vector<8x1xf32> to vector<8x32xf32>
    %439 = arith.mulf %434, %438 : vector<8x32xf32>
    %440 = vector.broadcast %9 : vector<1x32xf32> to vector<8x32xf32>
    %441 = arith.mulf %439, %440 : vector<8x32xf32>
    %442 = vector.broadcast %10 : vector<1x32xf32> to vector<8x32xf32>
    %443 = arith.addf %441, %442 : vector<8x32xf32>
    %444 = arith.index_cast %c5_i32 : i32 to index
    %c0_122 = arith.constant 0 : index
    %c0_123 = arith.constant 0 : index
    %445 = vector.load %arg9[%444, %c0_122, %c0_123] : memref<8x8x32xf32, #tpu.memory_space<vmem>>, vector<1x8x32xf32>
    %446 = vector.shape_cast %445 : vector<1x8x32xf32> to vector<8x32xf32>
    %447 = vector.shape_cast %443 : vector<8x32xf32> to vector<1x8x32xf32>
    tpu.vector_store %arg9[%444, %c0_122, %c0_123], %447 {strides = array<i32>} : memref<8x8x32xf32, #tpu.memory_space<vmem>>, vector<1x8x32xf32>,
    %448 = arith.cmpi slt, %c5_i32, %5 : i32
    %449 = arith.select %448, %400, %376 : vector<8x32xf32>
    %450 = arith.select %448, %398, %377 : vector<8x32xf32>
    %c6_i32 = arith.constant 6 : i32
    %451 = arith.index_cast %c6_i32 : i32 to index
    %c0_124 = arith.constant 0 : index
    %c0_125 = arith.constant 0 : index
    %452 = vector.load %arg2[%451, %c0_124, %c0_125] : memref<8x8x128xf32, #tpu.memory_space<vmem>>, vector<1x8x128xf32>
    %453 = vector.shape_cast %452 : vector<1x8x128xf32> to vector<8x128xf32>
    %454 = arith.truncf %449 : vector<8x32xf32> to vector<8x32xbf16>
    %cst_126 = arith.constant dense<0.000000e+00> : vector<8x128xf32>
    %455 = tpu.matmul %454, %6, %cst_126 {dimension_numbers = #tpu.dot_dimension_numbers<[1], [0], [0], [1], [0, 0, 1, 1], [], []>} : vector<8x32xbf16>, vector<32x128xbf16>, vector<8x128xf32> -> vector<8x128xf32>
    %456 = arith.addf %453, %455 : vector<8x128xf32>
    %457 = vector.extract_strided_slice %456 {offsets = [0, 0], sizes = [8, 32], strides = [1, 1]} : vector<8x128xf32> to vector<8x32xf32>
    %458 = math.exp %457 : vector<8x32xf32>
    %459 = vector.extract_strided_slice %456 {offsets = [0, 32], sizes = [8, 32], strides = [1, 1]} : vector<8x128xf32> to vector<8x32xf32>
    %460 = math.exp %459 : vector<8x32xf32>
    %461 = vector.extract_strided_slice %456 {offsets = [0, 64], sizes = [8, 32], strides = [1, 1]} : vector<8x128xf32> to vector<8x32xf32>
    %462 = math.tanh %461 : vector<8x32xf32>
    %463 = vector.extract_strided_slice %456 {offsets = [0, 96], sizes = [8, 32], strides = [1, 1]} : vector<8x128xf32> to vector<8x32xf32>
    %464 = arith.negf %463 : vector<8x32xf32>
    %465 = math.exp %464 : vector<8x32xf32>
    %cst_127 = arith.constant 1.000000e+00 : f32
    %466 = vector.broadcast %cst_127 : f32 to vector<8x32xf32>
    %467 = arith.addf %466, %465 : vector<8x32xf32>
    %468 = arith.divf %466, %467 : vector<8x32xf32>
    %469 = arith.mulf %460, %450 : vector<8x32xf32>
    %470 = arith.mulf %458, %462 : vector<8x32xf32>
    %471 = arith.addf %469, %470 : vector<8x32xf32>
    %472 = math.tanh %471 : vector<8x32xf32>
    %473 = arith.mulf %468, %472 : vector<8x32xf32>
    %474 = arith.index_cast %c6_i32 : i32 to index
    %c0_128 = arith.constant 0 : index
    %c0_129 = arith.constant 0 : index
    %475 = vector.load %arg4[%474, %c0_128, %c0_129] : memref<8x8x32xf32, #tpu.memory_space<vmem>>, vector<1x8x32xf32>
    %476 = vector.shape_cast %475 : vector<1x8x32xf32> to vector<8x32xf32>
    %477 = arith.truncf %473 : vector<8x32xf32> to vector<8x32xbf16>
    %cst_130 = arith.constant dense<0.000000e+00> : vector<8x32xf32>
    %478 = tpu.matmul %477, %7, %cst_130 {dimension_numbers = #tpu.dot_dimension_numbers<[1], [0], [0], [1], [0, 0, 1, 1], [], []>} : vector<8x32xbf16>, vector<32x32xbf16>, vector<8x32xf32> -> vector<8x32xf32>
    %479 = vector.broadcast %8 : vector<1x32xf32> to vector<8x32xf32>
    %480 = arith.addf %478, %479 : vector<8x32xf32>
    %cst_131 = arith.constant 5.000000e-01 : f32
    %481 = vector.broadcast %cst_131 : f32 to vector<8x32xf32>
    %482 = arith.mulf %481, %480 : vector<8x32xf32>
    %cst_132 = arith.constant 4.471500e-02 : f32
    %483 = vector.broadcast %cst_132 : f32 to vector<8x32xf32>
    %484 = arith.mulf %483, %480 : vector<8x32xf32>
    %485 = arith.mulf %484, %480 : vector<8x32xf32>
    %486 = arith.mulf %485, %480 : vector<8x32xf32>
    %487 = arith.addf %480, %486 : vector<8x32xf32>
    %cst_133 = arith.constant 0.797884583 : f32
    %488 = vector.broadcast %cst_133 : f32 to vector<8x32xf32>
    %489 = arith.mulf %488, %487 : vector<8x32xf32>
    %490 = math.tanh %489 : vector<8x32xf32>
    %cst_134 = arith.constant 1.000000e+00 : f32
    %491 = vector.broadcast %cst_134 : f32 to vector<8x32xf32>
    %492 = arith.addf %491, %490 : vector<8x32xf32>
    %493 = arith.mulf %482, %492 : vector<8x32xf32>
    %494 = arith.addf %493, %476 : vector<8x32xf32>
    %cst_135 = arith.constant dense<0.000000e+00> : vector<8xf32>
    %495 = vector.multi_reduction <add>, %494, %cst_135 [1] : vector<8x32xf32> to vector<8xf32>
    %496 = vector.shape_cast %495 : vector<8xf32> to vector<8x1xf32>
    %cst_136 = arith.constant 3.200000e+01 : f32
    %497 = vector.broadcast %cst_136 : f32 to vector<8x1xf32>
    %498 = arith.divf %496, %497 : vector<8x1xf32>
    %499 = vector.broadcast %498 : vector<8x1xf32> to vector<8x32xf32>
    %500 = arith.subf %494, %499 : vector<8x32xf32>
    %501 = arith.mulf %500, %500 : vector<8x32xf32>
    %cst_137 = arith.constant dense<0.000000e+00> : vector<8xf32>
    %502 = vector.multi_reduction <add>, %501, %cst_137 [1] : vector<8x32xf32> to vector<8xf32>
    %503 = vector.shape_cast %502 : vector<8xf32> to vector<8x1xf32>
    %cst_138 = arith.constant 3.200000e+01 : f32
    %504 = vector.broadcast %cst_138 : f32 to vector<8x1xf32>
    %505 = arith.divf %503, %504 : vector<8x1xf32>
    %506 = vector.broadcast %498 : vector<8x1xf32> to vector<8x32xf32>
    %507 = arith.subf %494, %506 : vector<8x32xf32>
    %cst_139 = arith.constant 9.99999974E-6 : f32
    %508 = vector.broadcast %cst_139 : f32 to vector<8x1xf32>
    %509 = arith.addf %505, %508 : vector<8x1xf32>
    %510 = math.rsqrt %509 : vector<8x1xf32>
    %511 = vector.broadcast %510 : vector<8x1xf32> to vector<8x32xf32>
    %512 = arith.mulf %507, %511 : vector<8x32xf32>
    %513 = vector.broadcast %9 : vector<1x32xf32> to vector<8x32xf32>
    %514 = arith.mulf %512, %513 : vector<8x32xf32>
    %515 = vector.broadcast %10 : vector<1x32xf32> to vector<8x32xf32>
    %516 = arith.addf %514, %515 : vector<8x32xf32>
    %517 = arith.index_cast %c6_i32 : i32 to index
    %c0_140 = arith.constant 0 : index
    %c0_141 = arith.constant 0 : index
    %518 = vector.load %arg9[%517, %c0_140, %c0_141] : memref<8x8x32xf32, #tpu.memory_space<vmem>>, vector<1x8x32xf32>
    %519 = vector.shape_cast %518 : vector<1x8x32xf32> to vector<8x32xf32>
    %520 = vector.shape_cast %516 : vector<8x32xf32> to vector<1x8x32xf32>
    tpu.vector_store %arg9[%517, %c0_140, %c0_141], %520 {strides = array<i32>} : memref<8x8x32xf32, #tpu.memory_space<vmem>>, vector<1x8x32xf32>,
    %521 = arith.cmpi slt, %c6_i32, %5 : i32
    %522 = arith.select %521, %473, %449 : vector<8x32xf32>
    %523 = arith.select %521, %471, %450 : vector<8x32xf32>
    %c7_i32 = arith.constant 7 : i32
    %524 = arith.index_cast %c7_i32 : i32 to index
    %c0_142 = arith.constant 0 : index
    %c0_143 = arith.constant 0 : index
    %525 = vector.load %arg2[%524, %c0_142, %c0_143] : memref<8x8x128xf32, #tpu.memory_space<vmem>>, vector<1x8x128xf32>
    %526 = vector.shape_cast %525 : vector<1x8x128xf32> to vector<8x128xf32>
    %527 = arith.truncf %522 : vector<8x32xf32> to vector<8x32xbf16>
    %cst_144 = arith.constant dense<0.000000e+00> : vector<8x128xf32>
    %528 = tpu.matmul %527, %6, %cst_144 {dimension_numbers = #tpu.dot_dimension_numbers<[1], [0], [0], [1], [0, 0, 1, 1], [], []>} : vector<8x32xbf16>, vector<32x128xbf16>, vector<8x128xf32> -> vector<8x128xf32>
    %529 = arith.addf %526, %528 : vector<8x128xf32>
    %530 = vector.extract_strided_slice %529 {offsets = [0, 0], sizes = [8, 32], strides = [1, 1]} : vector<8x128xf32> to vector<8x32xf32>
    %531 = math.exp %530 : vector<8x32xf32>
    %532 = vector.extract_strided_slice %529 {offsets = [0, 32], sizes = [8, 32], strides = [1, 1]} : vector<8x128xf32> to vector<8x32xf32>
    %533 = math.exp %532 : vector<8x32xf32>
    %534 = vector.extract_strided_slice %529 {offsets = [0, 64], sizes = [8, 32], strides = [1, 1]} : vector<8x128xf32> to vector<8x32xf32>
    %535 = math.tanh %534 : vector<8x32xf32>
    %536 = vector.extract_strided_slice %529 {offsets = [0, 96], sizes = [8, 32], strides = [1, 1]} : vector<8x128xf32> to vector<8x32xf32>
    %537 = arith.negf %536 : vector<8x32xf32>
    %538 = math.exp %537 : vector<8x32xf32>
    %cst_145 = arith.constant 1.000000e+00 : f32
    %539 = vector.broadcast %cst_145 : f32 to vector<8x32xf32>
    %540 = arith.addf %539, %538 : vector<8x32xf32>
    %541 = arith.divf %539, %540 : vector<8x32xf32>
    %542 = arith.mulf %533, %523 : vector<8x32xf32>
    %543 = arith.mulf %531, %535 : vector<8x32xf32>
    %544 = arith.addf %542, %543 : vector<8x32xf32>
    %545 = math.tanh %544 : vector<8x32xf32>
    %546 = arith.mulf %541, %545 : vector<8x32xf32>
    %547 = arith.index_cast %c7_i32 : i32 to index
    %c0_146 = arith.constant 0 : index
    %c0_147 = arith.constant 0 : index
    %548 = vector.load %arg4[%547, %c0_146, %c0_147] : memref<8x8x32xf32, #tpu.memory_space<vmem>>, vector<1x8x32xf32>
    %549 = vector.shape_cast %548 : vector<1x8x32xf32> to vector<8x32xf32>
    %550 = arith.truncf %546 : vector<8x32xf32> to vector<8x32xbf16>
    %cst_148 = arith.constant dense<0.000000e+00> : vector<8x32xf32>
    %551 = tpu.matmul %550, %7, %cst_148 {dimension_numbers = #tpu.dot_dimension_numbers<[1], [0], [0], [1], [0, 0, 1, 1], [], []>} : vector<8x32xbf16>, vector<32x32xbf16>, vector<8x32xf32> -> vector<8x32xf32>
    %552 = vector.broadcast %8 : vector<1x32xf32> to vector<8x32xf32>
    %553 = arith.addf %551, %552 : vector<8x32xf32>
    %cst_149 = arith.constant 5.000000e-01 : f32
    %554 = vector.broadcast %cst_149 : f32 to vector<8x32xf32>
    %555 = arith.mulf %554, %553 : vector<8x32xf32>
    %cst_150 = arith.constant 4.471500e-02 : f32
    %556 = vector.broadcast %cst_150 : f32 to vector<8x32xf32>
    %557 = arith.mulf %556, %553 : vector<8x32xf32>
    %558 = arith.mulf %557, %553 : vector<8x32xf32>
    %559 = arith.mulf %558, %553 : vector<8x32xf32>
    %560 = arith.addf %553, %559 : vector<8x32xf32>
    %cst_151 = arith.constant 0.797884583 : f32
    %561 = vector.broadcast %cst_151 : f32 to vector<8x32xf32>
    %562 = arith.mulf %561, %560 : vector<8x32xf32>
    %563 = math.tanh %562 : vector<8x32xf32>
    %cst_152 = arith.constant 1.000000e+00 : f32
    %564 = vector.broadcast %cst_152 : f32 to vector<8x32xf32>
    %565 = arith.addf %564, %563 : vector<8x32xf32>
    %566 = arith.mulf %555, %565 : vector<8x32xf32>
    %567 = arith.addf %566, %549 : vector<8x32xf32>
    %cst_153 = arith.constant dense<0.000000e+00> : vector<8xf32>
    %568 = vector.multi_reduction <add>, %567, %cst_153 [1] : vector<8x32xf32> to vector<8xf32>
    %569 = vector.shape_cast %568 : vector<8xf32> to vector<8x1xf32>
    %cst_154 = arith.constant 3.200000e+01 : f32
    %570 = vector.broadcast %cst_154 : f32 to vector<8x1xf32>
    %571 = arith.divf %569, %570 : vector<8x1xf32>
    %572 = vector.broadcast %571 : vector<8x1xf32> to vector<8x32xf32>
    %573 = arith.subf %567, %572 : vector<8x32xf32>
    %574 = arith.mulf %573, %573 : vector<8x32xf32>
    %cst_155 = arith.constant dense<0.000000e+00> : vector<8xf32>
    %575 = vector.multi_reduction <add>, %574, %cst_155 [1] : vector<8x32xf32> to vector<8xf32>
    %576 = vector.shape_cast %575 : vector<8xf32> to vector<8x1xf32>
    %cst_156 = arith.constant 3.200000e+01 : f32
    %577 = vector.broadcast %cst_156 : f32 to vector<8x1xf32>
    %578 = arith.divf %576, %577 : vector<8x1xf32>
    %579 = vector.broadcast %571 : vector<8x1xf32> to vector<8x32xf32>
    %580 = arith.subf %567, %579 : vector<8x32xf32>
    %cst_157 = arith.constant 9.99999974E-6 : f32
    %581 = vector.broadcast %cst_157 : f32 to vector<8x1xf32>
    %582 = arith.addf %578, %581 : vector<8x1xf32>
    %583 = math.rsqrt %582 : vector<8x1xf32>
    %584 = vector.broadcast %583 : vector<8x1xf32> to vector<8x32xf32>
    %585 = arith.mulf %580, %584 : vector<8x32xf32>
    %586 = vector.broadcast %9 : vector<1x32xf32> to vector<8x32xf32>
    %587 = arith.mulf %585, %586 : vector<8x32xf32>
    %588 = vector.broadcast %10 : vector<1x32xf32> to vector<8x32xf32>
    %589 = arith.addf %587, %588 : vector<8x32xf32>
    %590 = arith.index_cast %c7_i32 : i32 to index
    %c0_158 = arith.constant 0 : index
    %c0_159 = arith.constant 0 : index
    %591 = vector.load %arg9[%590, %c0_158, %c0_159] : memref<8x8x32xf32, #tpu.memory_space<vmem>>, vector<1x8x32xf32>
    %592 = vector.shape_cast %591 : vector<1x8x32xf32> to vector<8x32xf32>
    %593 = vector.shape_cast %589 : vector<8x32xf32> to vector<1x8x32xf32>
    tpu.vector_store %arg9[%590, %c0_158, %c0_159], %593 {strides = array<i32>} : memref<8x8x32xf32, #tpu.memory_space<vmem>>, vector<1x8x32xf32>,
    %594 = arith.cmpi slt, %c7_i32, %5 : i32
    %595 = arith.select %594, %546, %522 : vector<8x32xf32>
    %596 = arith.select %594, %544, %523 : vector<8x32xf32>
    %c8_i32_160 = arith.constant 8 : i32
    %c0_161 = arith.constant 0 : index
    %c0_162 = arith.constant 0 : index
    %597 = vector.load %arg10[%c0_161, %c0_162] : memref<8x32xf32, #tpu.memory_space<vmem>>, vector<8x32xf32>
    tpu.vector_store %arg10[%c0_161, %c0_162], %595 {strides = array<i32>} : memref<8x32xf32, #tpu.memory_space<vmem>>, vector<8x32xf32>,
    %c0_163 = arith.constant 0 : index
    %c0_164 = arith.constant 0 : index
    %598 = vector.load %arg11[%c0_163, %c0_164] : memref<8x32xf32, #tpu.memory_space<vmem>>, vector<8x32xf32>
    tpu.vector_store %arg11[%c0_163, %c0_164], %596 {strides = array<i32>} : memref<8x32xf32, #tpu.memory_space<vmem>>, vector<8x32xf32>,
    return
  }
  func.func @transform_0(%arg0: i32, %arg1: i32) -> (i32, i32, i32) {
    %c0_i32 = arith.constant 0 : i32
    %c0_i32_0 = arith.constant 0 : i32
    return %arg1, %arg0, %c0_i32 : i32, i32, i32
  }
  func.func @transform_1(%arg0: i32, %arg1: i32) -> (i32, i32) {
    %c0_i32 = arith.constant 0 : i32
    %c0_i32_0 = arith.constant 0 : i32
    %c0_i32_1 = arith.constant 0 : i32
    return %c0_i32, %c0_i32_0 : i32, i32
  }
  func.func @transform_2(%arg0: i32, %arg1: i32) -> (i32, i32, i32) {
    %c0_i32 = arith.constant 0 : i32
    %c0_i32_0 = arith.constant 0 : i32
    return %arg1, %arg0, %c0_i32 : i32, i32, i32
  }
  func.func @transform_3(%arg0: i32, %arg1: i32) -> (i32, i32) {
    %c0_i32 = arith.constant 0 : i32
    %c0_i32_0 = arith.constant 0 : i32
    %c0_i32_1 = arith.constant 0 : i32
    return %c0_i32, %c0_i32_0 : i32, i32
  }
  func.func @transform_4(%arg0: i32, %arg1: i32) -> (i32, i32) {
    %c0_i32 = arith.constant 0 : i32
    %c0_i32_0 = arith.constant 0 : i32
    %c0_i32_1 = arith.constant 0 : i32
    return %c0_i32, %c0_i32_0 : i32, i32
  }
  func.func @transform_5(%arg0: i32, %arg1: i32) -> (i32, i32) {
    %c0_i32 = arith.constant 0 : i32
    %c0_i32_0 = arith.constant 0 : i32
    %c0_i32_1 = arith.constant 0 : i32
    return %c0_i32, %c0_i32_0 : i32, i32
  }
  func.func @transform_6(%arg0: i32, %arg1: i32) -> (i32, i32) {
    %c0_i32 = arith.constant 0 : i32
    %c0_i32_0 = arith.constant 0 : i32
    %c0_i32_1 = arith.constant 0 : i32
    return %c0_i32, %c0_i32_0 : i32, i32
  }
  func.func @transform_7(%arg0: i32, %arg1: i32) -> (i32, i32, i32) {
    %c0_i32 = arith.constant 0 : i32
    %c0_i32_0 = arith.constant 0 : i32
    return %arg1, %arg0, %c0_i32 : i32, i32, i32
  }
  func.func @transform_8(%arg0: i32, %arg1: i32) -> (i32, i32) {
    %c0_i32 = arith.constant 0 : i32
    %c0_i32_0 = arith.constant 0 : i32
    return %arg0, %c0_i32 : i32, i32
  }
  func.func @transform_9(%arg0: i32, %arg1: i32) -> (i32, i32) {
    %c0_i32 = arith.constant 0 : i32
    %c0_i32_0 = arith.constant 0 : i32
    return %arg0, %c0_i32 : i32, i32
  }
}

module attributes {stable_mosaic.version = 11 : i64} {
  func.func @_slstm_head_kernel(%arg0: i32, %arg1: i32, %arg2: memref<8x8x128xf32, #tpu.memory_space<vmem>>, %arg3: memref<32x128xbf16, #tpu.memory_space<vmem>>, %arg4: memref<1x8x32xf32, #tpu.memory_space<vmem>>, %arg5: memref<32x32xbf16, #tpu.memory_space<vmem>>, %arg6: memref<1x32xf32, #tpu.memory_space<vmem>>, %arg7: memref<1x32xf32, #tpu.memory_space<vmem>>, %arg8: memref<1x32xf32, #tpu.memory_space<vmem>>, %arg9: memref<32x1xbf16, #tpu.memory_space<vmem>>, %arg10: memref<1x1xf32, #tpu.memory_space<vmem>>, %arg11: memref<8x1xf32, #tpu.memory_space<vmem>>, %arg12: memref<8x32xf32, #tpu.memory_space<vmem>>, %arg13: memref<8x32xf32, #tpu.memory_space<vmem>>) attributes {dimension_semantics = [#tpu.dimension_semantics<parallel>, #tpu.dimension_semantics<arbitrary>], iteration_bounds = array<i64: 1, 1>, scalar_prefetch = 0 : i64, scratch_operands = 0 : i64, tpu.core_type = #tpu.core_type<tc>, window_params = [{transform_indices = @transform_0, window_bounds = array<i64: 8, 8, 128>}, {pipeline_mode = #tpu.pipeline_mode<synchronous>, transform_indices = @transform_1, window_bounds = array<i64: 32, 128>}, {transform_indices = @transform_2, window_bounds = array<i64: 1, 8, 32>}, {pipeline_mode = #tpu.pipeline_mode<synchronous>, transform_indices = @transform_3, window_bounds = array<i64: 32, 32>}, {pipeline_mode = #tpu.pipeline_mode<synchronous>, transform_indices = @transform_4, window_bounds = array<i64: 1, 32>}, {pipeline_mode = #tpu.pipeline_mode<synchronous>, transform_indices = @transform_5, window_bounds = array<i64: 1, 32>}, {pipeline_mode = #tpu.pipeline_mode<synchronous>, transform_indices = @transform_6, window_bounds = array<i64: 1, 32>}, {pipeline_mode = #tpu.pipeline_mode<synchronous>, transform_indices = @transform_7, window_bounds = array<i64: 32, 1>}, {pipeline_mode = #tpu.pipeline_mode<synchronous>, transform_indices = @transform_8, window_bounds = array<i64: 1, 1>}, {transform_indices = @transform_9, window_bounds = array<i64: 8, 1>}, {transform_indices = @transform_10, window_bounds = array<i64: 8, 32>}, {transform_indices = @transform_11, window_bounds = array<i64: 8, 32>}]} {
    %c0_i32 = arith.constant 0 : i32
    %0 = arith.cmpi eq, %arg1, %c0_i32 : i32
    %1 = arith.extui %0 : i1 to i32
    %c0_i32_0 = arith.constant 0 : i32
    %2 = arith.cmpi ne, %1, %c0_i32_0 : i32
    scf.if %2 {
      %cst_47 = arith.constant 0.000000e+00 : f32
      %222 = vector.broadcast %cst_47 : f32 to vector<8x32xf32>
      %c0_48 = arith.constant 0 : index
      %c0_49 = arith.constant 0 : index
      %223 = vector.load %arg12[%c0_48, %c0_49] : memref<8x32xf32, #tpu.memory_space<vmem>>, vector<8x32xf32>
      tpu.vector_store %arg12[%c0_48, %c0_49], %222 {strides = array<i32>} : memref<8x32xf32, #tpu.memory_space<vmem>>, vector<8x32xf32>,
      %cst_50 = arith.constant 0.000000e+00 : f32
      %224 = vector.broadcast %cst_50 : f32 to vector<8x32xf32>
      %c0_51 = arith.constant 0 : index
      %c0_52 = arith.constant 0 : index
      %225 = vector.load %arg13[%c0_51, %c0_52] : memref<8x32xf32, #tpu.memory_space<vmem>>, vector<8x32xf32>
      tpu.vector_store %arg13[%c0_51, %c0_52], %224 {strides = array<i32>} : memref<8x32xf32, #tpu.memory_space<vmem>>, vector<8x32xf32>,
    } else {
    }
    %c8_i32 = arith.constant 8 : i32
    %3 = arith.muli %arg1, %c8_i32 : i32
    %c8_i32_1 = arith.constant 8 : i32
    %4 = arith.subi %c8_i32_1, %3 : i32
    %c8_i32_2 = arith.constant 8 : i32
    %5 = arith.minsi %c8_i32_2, %4 : i32
    %c0 = arith.constant 0 : index
    %c0_3 = arith.constant 0 : index
    %6 = vector.load %arg3[%c0, %c0_3] : memref<32x128xbf16, #tpu.memory_space<vmem>>, vector<32x128xbf16>
    %c0_4 = arith.constant 0 : index
    %c0_5 = arith.constant 0 : index
    %7 = vector.load %arg12[%c0_4, %c0_5] : memref<8x32xf32, #tpu.memory_space<vmem>>, vector<8x32xf32>
    %c0_6 = arith.constant 0 : index
    %c0_7 = arith.constant 0 : index
    %8 = vector.load %arg13[%c0_6, %c0_7] : memref<8x32xf32, #tpu.memory_space<vmem>>, vector<8x32xf32>
    %c0_i32_8 = arith.constant 0 : i32
    %9 = arith.index_cast %c0_i32_8 : i32 to index
    %c0_9 = arith.constant 0 : index
    %c0_10 = arith.constant 0 : index
    %10 = vector.load %arg2[%9, %c0_9, %c0_10] : memref<8x8x128xf32, #tpu.memory_space<vmem>>, vector<1x8x128xf32>
    %11 = vector.shape_cast %10 : vector<1x8x128xf32> to vector<8x128xf32>
    %12 = arith.truncf %7 : vector<8x32xf32> to vector<8x32xbf16>
    %cst = arith.constant dense<0.000000e+00> : vector<8x128xf32>
    %13 = tpu.matmul %12, %6, %cst {dimension_numbers = #tpu.dot_dimension_numbers<[1], [0], [0], [1], [0, 0, 1, 1], [], []>} : vector<8x32xbf16>, vector<32x128xbf16>, vector<8x128xf32> -> vector<8x128xf32>
    %14 = arith.addf %11, %13 : vector<8x128xf32>
    %15 = vector.extract_strided_slice %14 {offsets = [0, 0], sizes = [8, 32], strides = [1, 1]} : vector<8x128xf32> to vector<8x32xf32>
    %16 = math.exp %15 : vector<8x32xf32>
    %17 = vector.extract_strided_slice %14 {offsets = [0, 32], sizes = [8, 32], strides = [1, 1]} : vector<8x128xf32> to vector<8x32xf32>
    %18 = math.exp %17 : vector<8x32xf32>
    %19 = vector.extract_strided_slice %14 {offsets = [0, 64], sizes = [8, 32], strides = [1, 1]} : vector<8x128xf32> to vector<8x32xf32>
    %20 = math.tanh %19 : vector<8x32xf32>
    %21 = vector.extract_strided_slice %14 {offsets = [0, 96], sizes = [8, 32], strides = [1, 1]} : vector<8x128xf32> to vector<8x32xf32>
    %22 = arith.negf %21 : vector<8x32xf32>
    %23 = math.exp %22 : vector<8x32xf32>
    %cst_11 = arith.constant 1.000000e+00 : f32
    %24 = vector.broadcast %cst_11 : f32 to vector<8x32xf32>
    %25 = arith.addf %24, %23 : vector<8x32xf32>
    %26 = arith.divf %24, %25 : vector<8x32xf32>
    %27 = arith.mulf %18, %8 : vector<8x32xf32>
    %28 = arith.mulf %16, %20 : vector<8x32xf32>
    %29 = arith.addf %27, %28 : vector<8x32xf32>
    %30 = math.tanh %29 : vector<8x32xf32>
    %31 = arith.mulf %26, %30 : vector<8x32xf32>
    %32 = arith.cmpi slt, %c0_i32_8, %5 : i32
    %33 = arith.select %32, %31, %7 : vector<8x32xf32>
    %34 = arith.select %32, %29, %8 : vector<8x32xf32>
    %c1_i32 = arith.constant 1 : i32
    %35 = arith.index_cast %c1_i32 : i32 to index
    %c0_12 = arith.constant 0 : index
    %c0_13 = arith.constant 0 : index
    %36 = vector.load %arg2[%35, %c0_12, %c0_13] : memref<8x8x128xf32, #tpu.memory_space<vmem>>, vector<1x8x128xf32>
    %37 = vector.shape_cast %36 : vector<1x8x128xf32> to vector<8x128xf32>
    %38 = arith.truncf %33 : vector<8x32xf32> to vector<8x32xbf16>
    %cst_14 = arith.constant dense<0.000000e+00> : vector<8x128xf32>
    %39 = tpu.matmul %38, %6, %cst_14 {dimension_numbers = #tpu.dot_dimension_numbers<[1], [0], [0], [1], [0, 0, 1, 1], [], []>} : vector<8x32xbf16>, vector<32x128xbf16>, vector<8x128xf32> -> vector<8x128xf32>
    %40 = arith.addf %37, %39 : vector<8x128xf32>
    %41 = vector.extract_strided_slice %40 {offsets = [0, 0], sizes = [8, 32], strides = [1, 1]} : vector<8x128xf32> to vector<8x32xf32>
    %42 = math.exp %41 : vector<8x32xf32>
    %43 = vector.extract_strided_slice %40 {offsets = [0, 32], sizes = [8, 32], strides = [1, 1]} : vector<8x128xf32> to vector<8x32xf32>
    %44 = math.exp %43 : vector<8x32xf32>
    %45 = vector.extract_strided_slice %40 {offsets = [0, 64], sizes = [8, 32], strides = [1, 1]} : vector<8x128xf32> to vector<8x32xf32>
    %46 = math.tanh %45 : vector<8x32xf32>
    %47 = vector.extract_strided_slice %40 {offsets = [0, 96], sizes = [8, 32], strides = [1, 1]} : vector<8x128xf32> to vector<8x32xf32>
    %48 = arith.negf %47 : vector<8x32xf32>
    %49 = math.exp %48 : vector<8x32xf32>
    %cst_15 = arith.constant 1.000000e+00 : f32
    %50 = vector.broadcast %cst_15 : f32 to vector<8x32xf32>
    %51 = arith.addf %50, %49 : vector<8x32xf32>
    %52 = arith.divf %50, %51 : vector<8x32xf32>
    %53 = arith.mulf %44, %34 : vector<8x32xf32>
    %54 = arith.mulf %42, %46 : vector<8x32xf32>
    %55 = arith.addf %53, %54 : vector<8x32xf32>
    %56 = math.tanh %55 : vector<8x32xf32>
    %57 = arith.mulf %52, %56 : vector<8x32xf32>
    %58 = arith.cmpi slt, %c1_i32, %5 : i32
    %59 = arith.select %58, %57, %33 : vector<8x32xf32>
    %60 = arith.select %58, %55, %34 : vector<8x32xf32>
    %c2_i32 = arith.constant 2 : i32
    %61 = arith.index_cast %c2_i32 : i32 to index
    %c0_16 = arith.constant 0 : index
    %c0_17 = arith.constant 0 : index
    %62 = vector.load %arg2[%61, %c0_16, %c0_17] : memref<8x8x128xf32, #tpu.memory_space<vmem>>, vector<1x8x128xf32>
    %63 = vector.shape_cast %62 : vector<1x8x128xf32> to vector<8x128xf32>
    %64 = arith.truncf %59 : vector<8x32xf32> to vector<8x32xbf16>
    %cst_18 = arith.constant dense<0.000000e+00> : vector<8x128xf32>
    %65 = tpu.matmul %64, %6, %cst_18 {dimension_numbers = #tpu.dot_dimension_numbers<[1], [0], [0], [1], [0, 0, 1, 1], [], []>} : vector<8x32xbf16>, vector<32x128xbf16>, vector<8x128xf32> -> vector<8x128xf32>
    %66 = arith.addf %63, %65 : vector<8x128xf32>
    %67 = vector.extract_strided_slice %66 {offsets = [0, 0], sizes = [8, 32], strides = [1, 1]} : vector<8x128xf32> to vector<8x32xf32>
    %68 = math.exp %67 : vector<8x32xf32>
    %69 = vector.extract_strided_slice %66 {offsets = [0, 32], sizes = [8, 32], strides = [1, 1]} : vector<8x128xf32> to vector<8x32xf32>
    %70 = math.exp %69 : vector<8x32xf32>
    %71 = vector.extract_strided_slice %66 {offsets = [0, 64], sizes = [8, 32], strides = [1, 1]} : vector<8x128xf32> to vector<8x32xf32>
    %72 = math.tanh %71 : vector<8x32xf32>
    %73 = vector.extract_strided_slice %66 {offsets = [0, 96], sizes = [8, 32], strides = [1, 1]} : vector<8x128xf32> to vector<8x32xf32>
    %74 = arith.negf %73 : vector<8x32xf32>
    %75 = math.exp %74 : vector<8x32xf32>
    %cst_19 = arith.constant 1.000000e+00 : f32
    %76 = vector.broadcast %cst_19 : f32 to vector<8x32xf32>
    %77 = arith.addf %76, %75 : vector<8x32xf32>
    %78 = arith.divf %76, %77 : vector<8x32xf32>
    %79 = arith.mulf %70, %60 : vector<8x32xf32>
    %80 = arith.mulf %68, %72 : vector<8x32xf32>
    %81 = arith.addf %79, %80 : vector<8x32xf32>
    %82 = math.tanh %81 : vector<8x32xf32>
    %83 = arith.mulf %78, %82 : vector<8x32xf32>
    %84 = arith.cmpi slt, %c2_i32, %5 : i32
    %85 = arith.select %84, %83, %59 : vector<8x32xf32>
    %86 = arith.select %84, %81, %60 : vector<8x32xf32>
    %c3_i32 = arith.constant 3 : i32
    %87 = arith.index_cast %c3_i32 : i32 to index
    %c0_20 = arith.constant 0 : index
    %c0_21 = arith.constant 0 : index
    %88 = vector.load %arg2[%87, %c0_20, %c0_21] : memref<8x8x128xf32, #tpu.memory_space<vmem>>, vector<1x8x128xf32>
    %89 = vector.shape_cast %88 : vector<1x8x128xf32> to vector<8x128xf32>
    %90 = arith.truncf %85 : vector<8x32xf32> to vector<8x32xbf16>
    %cst_22 = arith.constant dense<0.000000e+00> : vector<8x128xf32>
    %91 = tpu.matmul %90, %6, %cst_22 {dimension_numbers = #tpu.dot_dimension_numbers<[1], [0], [0], [1], [0, 0, 1, 1], [], []>} : vector<8x32xbf16>, vector<32x128xbf16>, vector<8x128xf32> -> vector<8x128xf32>
    %92 = arith.addf %89, %91 : vector<8x128xf32>
    %93 = vector.extract_strided_slice %92 {offsets = [0, 0], sizes = [8, 32], strides = [1, 1]} : vector<8x128xf32> to vector<8x32xf32>
    %94 = math.exp %93 : vector<8x32xf32>
    %95 = vector.extract_strided_slice %92 {offsets = [0, 32], sizes = [8, 32], strides = [1, 1]} : vector<8x128xf32> to vector<8x32xf32>
    %96 = math.exp %95 : vector<8x32xf32>
    %97 = vector.extract_strided_slice %92 {offsets = [0, 64], sizes = [8, 32], strides = [1, 1]} : vector<8x128xf32> to vector<8x32xf32>
    %98 = math.tanh %97 : vector<8x32xf32>
    %99 = vector.extract_strided_slice %92 {offsets = [0, 96], sizes = [8, 32], strides = [1, 1]} : vector<8x128xf32> to vector<8x32xf32>
    %100 = arith.negf %99 : vector<8x32xf32>
    %101 = math.exp %100 : vector<8x32xf32>
    %cst_23 = arith.constant 1.000000e+00 : f32
    %102 = vector.broadcast %cst_23 : f32 to vector<8x32xf32>
    %103 = arith.addf %102, %101 : vector<8x32xf32>
    %104 = arith.divf %102, %103 : vector<8x32xf32>
    %105 = arith.mulf %96, %86 : vector<8x32xf32>
    %106 = arith.mulf %94, %98 : vector<8x32xf32>
    %107 = arith.addf %105, %106 : vector<8x32xf32>
    %108 = math.tanh %107 : vector<8x32xf32>
    %109 = arith.mulf %104, %108 : vector<8x32xf32>
    %110 = arith.cmpi slt, %c3_i32, %5 : i32
    %111 = arith.select %110, %109, %85 : vector<8x32xf32>
    %112 = arith.select %110, %107, %86 : vector<8x32xf32>
    %c4_i32 = arith.constant 4 : i32
    %113 = arith.index_cast %c4_i32 : i32 to index
    %c0_24 = arith.constant 0 : index
    %c0_25 = arith.constant 0 : index
    %114 = vector.load %arg2[%113, %c0_24, %c0_25] : memref<8x8x128xf32, #tpu.memory_space<vmem>>, vector<1x8x128xf32>
    %115 = vector.shape_cast %114 : vector<1x8x128xf32> to vector<8x128xf32>
    %116 = arith.truncf %111 : vector<8x32xf32> to vector<8x32xbf16>
    %cst_26 = arith.constant dense<0.000000e+00> : vector<8x128xf32>
    %117 = tpu.matmul %116, %6, %cst_26 {dimension_numbers = #tpu.dot_dimension_numbers<[1], [0], [0], [1], [0, 0, 1, 1], [], []>} : vector<8x32xbf16>, vector<32x128xbf16>, vector<8x128xf32> -> vector<8x128xf32>
    %118 = arith.addf %115, %117 : vector<8x128xf32>
    %119 = vector.extract_strided_slice %118 {offsets = [0, 0], sizes = [8, 32], strides = [1, 1]} : vector<8x128xf32> to vector<8x32xf32>
    %120 = math.exp %119 : vector<8x32xf32>
    %121 = vector.extract_strided_slice %118 {offsets = [0, 32], sizes = [8, 32], strides = [1, 1]} : vector<8x128xf32> to vector<8x32xf32>
    %122 = math.exp %121 : vector<8x32xf32>
    %123 = vector.extract_strided_slice %118 {offsets = [0, 64], sizes = [8, 32], strides = [1, 1]} : vector<8x128xf32> to vector<8x32xf32>
    %124 = math.tanh %123 : vector<8x32xf32>
    %125 = vector.extract_strided_slice %118 {offsets = [0, 96], sizes = [8, 32], strides = [1, 1]} : vector<8x128xf32> to vector<8x32xf32>
    %126 = arith.negf %125 : vector<8x32xf32>
    %127 = math.exp %126 : vector<8x32xf32>
    %cst_27 = arith.constant 1.000000e+00 : f32
    %128 = vector.broadcast %cst_27 : f32 to vector<8x32xf32>
    %129 = arith.addf %128, %127 : vector<8x32xf32>
    %130 = arith.divf %128, %129 : vector<8x32xf32>
    %131 = arith.mulf %122, %112 : vector<8x32xf32>
    %132 = arith.mulf %120, %124 : vector<8x32xf32>
    %133 = arith.addf %131, %132 : vector<8x32xf32>
    %134 = math.tanh %133 : vector<8x32xf32>
    %135 = arith.mulf %130, %134 : vector<8x32xf32>
    %136 = arith.cmpi slt, %c4_i32, %5 : i32
    %137 = arith.select %136, %135, %111 : vector<8x32xf32>
    %138 = arith.select %136, %133, %112 : vector<8x32xf32>
    %c5_i32 = arith.constant 5 : i32
    %139 = arith.index_cast %c5_i32 : i32 to index
    %c0_28 = arith.constant 0 : index
    %c0_29 = arith.constant 0 : index
    %140 = vector.load %arg2[%139, %c0_28, %c0_29] : memref<8x8x128xf32, #tpu.memory_space<vmem>>, vector<1x8x128xf32>
    %141 = vector.shape_cast %140 : vector<1x8x128xf32> to vector<8x128xf32>
    %142 = arith.truncf %137 : vector<8x32xf32> to vector<8x32xbf16>
    %cst_30 = arith.constant dense<0.000000e+00> : vector<8x128xf32>
    %143 = tpu.matmul %142, %6, %cst_30 {dimension_numbers = #tpu.dot_dimension_numbers<[1], [0], [0], [1], [0, 0, 1, 1], [], []>} : vector<8x32xbf16>, vector<32x128xbf16>, vector<8x128xf32> -> vector<8x128xf32>
    %144 = arith.addf %141, %143 : vector<8x128xf32>
    %145 = vector.extract_strided_slice %144 {offsets = [0, 0], sizes = [8, 32], strides = [1, 1]} : vector<8x128xf32> to vector<8x32xf32>
    %146 = math.exp %145 : vector<8x32xf32>
    %147 = vector.extract_strided_slice %144 {offsets = [0, 32], sizes = [8, 32], strides = [1, 1]} : vector<8x128xf32> to vector<8x32xf32>
    %148 = math.exp %147 : vector<8x32xf32>
    %149 = vector.extract_strided_slice %144 {offsets = [0, 64], sizes = [8, 32], strides = [1, 1]} : vector<8x128xf32> to vector<8x32xf32>
    %150 = math.tanh %149 : vector<8x32xf32>
    %151 = vector.extract_strided_slice %144 {offsets = [0, 96], sizes = [8, 32], strides = [1, 1]} : vector<8x128xf32> to vector<8x32xf32>
    %152 = arith.negf %151 : vector<8x32xf32>
    %153 = math.exp %152 : vector<8x32xf32>
    %cst_31 = arith.constant 1.000000e+00 : f32
    %154 = vector.broadcast %cst_31 : f32 to vector<8x32xf32>
    %155 = arith.addf %154, %153 : vector<8x32xf32>
    %156 = arith.divf %154, %155 : vector<8x32xf32>
    %157 = arith.mulf %148, %138 : vector<8x32xf32>
    %158 = arith.mulf %146, %150 : vector<8x32xf32>
    %159 = arith.addf %157, %158 : vector<8x32xf32>
    %160 = math.tanh %159 : vector<8x32xf32>
    %161 = arith.mulf %156, %160 : vector<8x32xf32>
    %162 = arith.cmpi slt, %c5_i32, %5 : i32
    %163 = arith.select %162, %161, %137 : vector<8x32xf32>
    %164 = arith.select %162, %159, %138 : vector<8x32xf32>
    %c6_i32 = arith.constant 6 : i32
    %165 = arith.index_cast %c6_i32 : i32 to index
    %c0_32 = arith.constant 0 : index
    %c0_33 = arith.constant 0 : index
    %166 = vector.load %arg2[%165, %c0_32, %c0_33] : memref<8x8x128xf32, #tpu.memory_space<vmem>>, vector<1x8x128xf32>
    %167 = vector.shape_cast %166 : vector<1x8x128xf32> to vector<8x128xf32>
    %168 = arith.truncf %163 : vector<8x32xf32> to vector<8x32xbf16>
    %cst_34 = arith.constant dense<0.000000e+00> : vector<8x128xf32>
    %169 = tpu.matmul %168, %6, %cst_34 {dimension_numbers = #tpu.dot_dimension_numbers<[1], [0], [0], [1], [0, 0, 1, 1], [], []>} : vector<8x32xbf16>, vector<32x128xbf16>, vector<8x128xf32> -> vector<8x128xf32>
    %170 = arith.addf %167, %169 : vector<8x128xf32>
    %171 = vector.extract_strided_slice %170 {offsets = [0, 0], sizes = [8, 32], strides = [1, 1]} : vector<8x128xf32> to vector<8x32xf32>
    %172 = math.exp %171 : vector<8x32xf32>
    %173 = vector.extract_strided_slice %170 {offsets = [0, 32], sizes = [8, 32], strides = [1, 1]} : vector<8x128xf32> to vector<8x32xf32>
    %174 = math.exp %173 : vector<8x32xf32>
    %175 = vector.extract_strided_slice %170 {offsets = [0, 64], sizes = [8, 32], strides = [1, 1]} : vector<8x128xf32> to vector<8x32xf32>
    %176 = math.tanh %175 : vector<8x32xf32>
    %177 = vector.extract_strided_slice %170 {offsets = [0, 96], sizes = [8, 32], strides = [1, 1]} : vector<8x128xf32> to vector<8x32xf32>
    %178 = arith.negf %177 : vector<8x32xf32>
    %179 = math.exp %178 : vector<8x32xf32>
    %cst_35 = arith.constant 1.000000e+00 : f32
    %180 = vector.broadcast %cst_35 : f32 to vector<8x32xf32>
    %181 = arith.addf %180, %179 : vector<8x32xf32>
    %182 = arith.divf %180, %181 : vector<8x32xf32>
    %183 = arith.mulf %174, %164 : vector<8x32xf32>
    %184 = arith.mulf %172, %176 : vector<8x32xf32>
    %185 = arith.addf %183, %184 : vector<8x32xf32>
    %186 = math.tanh %185 : vector<8x32xf32>
    %187 = arith.mulf %182, %186 : vector<8x32xf32>
    %188 = arith.cmpi slt, %c6_i32, %5 : i32
    %189 = arith.select %188, %187, %163 : vector<8x32xf32>
    %190 = arith.select %188, %185, %164 : vector<8x32xf32>
    %c7_i32 = arith.constant 7 : i32
    %191 = arith.index_cast %c7_i32 : i32 to index
    %c0_36 = arith.constant 0 : index
    %c0_37 = arith.constant 0 : index
    %192 = vector.load %arg2[%191, %c0_36, %c0_37] : memref<8x8x128xf32, #tpu.memory_space<vmem>>, vector<1x8x128xf32>
    %193 = vector.shape_cast %192 : vector<1x8x128xf32> to vector<8x128xf32>
    %194 = arith.truncf %189 : vector<8x32xf32> to vector<8x32xbf16>
    %cst_38 = arith.constant dense<0.000000e+00> : vector<8x128xf32>
    %195 = tpu.matmul %194, %6, %cst_38 {dimension_numbers = #tpu.dot_dimension_numbers<[1], [0], [0], [1], [0, 0, 1, 1], [], []>} : vector<8x32xbf16>, vector<32x128xbf16>, vector<8x128xf32> -> vector<8x128xf32>
    %196 = arith.addf %193, %195 : vector<8x128xf32>
    %197 = vector.extract_strided_slice %196 {offsets = [0, 0], sizes = [8, 32], strides = [1, 1]} : vector<8x128xf32> to vector<8x32xf32>
    %198 = math.exp %197 : vector<8x32xf32>
    %199 = vector.extract_strided_slice %196 {offsets = [0, 32], sizes = [8, 32], strides = [1, 1]} : vector<8x128xf32> to vector<8x32xf32>
    %200 = math.exp %199 : vector<8x32xf32>
    %201 = vector.extract_strided_slice %196 {offsets = [0, 64], sizes = [8, 32], strides = [1, 1]} : vector<8x128xf32> to vector<8x32xf32>
    %202 = math.tanh %201 : vector<8x32xf32>
    %203 = vector.extract_strided_slice %196 {offsets = [0, 96], sizes = [8, 32], strides = [1, 1]} : vector<8x128xf32> to vector<8x32xf32>
    %204 = arith.negf %203 : vector<8x32xf32>
    %205 = math.exp %204 : vector<8x32xf32>
    %cst_39 = arith.constant 1.000000e+00 : f32
    %206 = vector.broadcast %cst_39 : f32 to vector<8x32xf32>
    %207 = arith.addf %206, %205 : vector<8x32xf32>
    %208 = arith.divf %206, %207 : vector<8x32xf32>
    %209 = arith.mulf %200, %190 : vector<8x32xf32>
    %210 = arith.mulf %198, %202 : vector<8x32xf32>
    %211 = arith.addf %209, %210 : vector<8x32xf32>
    %212 = math.tanh %211 : vector<8x32xf32>
    %213 = arith.mulf %208, %212 : vector<8x32xf32>
    %214 = arith.cmpi slt, %c7_i32, %5 : i32
    %215 = arith.select %214, %213, %189 : vector<8x32xf32>
    %216 = arith.select %214, %211, %190 : vector<8x32xf32>
    %c8_i32_40 = arith.constant 8 : i32
    %c0_41 = arith.constant 0 : index
    %c0_42 = arith.constant 0 : index
    %217 = vector.load %arg12[%c0_41, %c0_42] : memref<8x32xf32, #tpu.memory_space<vmem>>, vector<8x32xf32>
    tpu.vector_store %arg12[%c0_41, %c0_42], %215 {strides = array<i32>} : memref<8x32xf32, #tpu.memory_space<vmem>>, vector<8x32xf32>,
    %c0_43 = arith.constant 0 : index
    %c0_44 = arith.constant 0 : index
    %218 = vector.load %arg13[%c0_43, %c0_44] : memref<8x32xf32, #tpu.memory_space<vmem>>, vector<8x32xf32>
    tpu.vector_store %arg13[%c0_43, %c0_44], %216 {strides = array<i32>} : memref<8x32xf32, #tpu.memory_space<vmem>>, vector<8x32xf32>,
    %c0_i32_45 = arith.constant 0 : i32
    %219 = arith.cmpi eq, %arg1, %c0_i32_45 : i32
    %220 = arith.extui %219 : i1 to i32
    %c0_i32_46 = arith.constant 0 : i32
    %221 = arith.cmpi ne, %220, %c0_i32_46 : i32
    scf.if %221 {
      %c0_47 = arith.constant 0 : index
      %c0_48 = arith.constant 0 : index
      %c0_49 = arith.constant 0 : index
      %222 = vector.load %arg4[%c0_47, %c0_48, %c0_49] : memref<1x8x32xf32, #tpu.memory_space<vmem>>, vector<1x8x32xf32>
      %223 = vector.shape_cast %222 : vector<1x8x32xf32> to vector<8x32xf32>
      %c0_50 = arith.constant 0 : index
      %c0_51 = arith.constant 0 : index
      %224 = vector.load %arg5[%c0_50, %c0_51] : memref<32x32xbf16, #tpu.memory_space<vmem>>, vector<32x32xbf16>
      %c0_52 = arith.constant 0 : index
      %c0_53 = arith.constant 0 : index
      %225 = vector.load %arg6[%c0_52, %c0_53] : memref<1x32xf32, #tpu.memory_space<vmem>>, vector<1x32xf32>
      %c0_54 = arith.constant 0 : index
      %c0_55 = arith.constant 0 : index
      %226 = vector.load %arg7[%c0_54, %c0_55] : memref<1x32xf32, #tpu.memory_space<vmem>>, vector<1x32xf32>
      %c0_56 = arith.constant 0 : index
      %c0_57 = arith.constant 0 : index
      %227 = vector.load %arg8[%c0_56, %c0_57] : memref<1x32xf32, #tpu.memory_space<vmem>>, vector<1x32xf32>
      %228 = arith.truncf %215 : vector<8x32xf32> to vector<8x32xbf16>
      %cst_58 = arith.constant dense<0.000000e+00> : vector<8x32xf32>
      %229 = tpu.matmul %228, %224, %cst_58 {dimension_numbers = #tpu.dot_dimension_numbers<[1], [0], [0], [1], [0, 0, 1, 1], [], []>} : vector<8x32xbf16>, vector<32x32xbf16>, vector<8x32xf32> -> vector<8x32xf32>
      %230 = vector.broadcast %225 : vector<1x32xf32> to vector<8x32xf32>
      %231 = arith.addf %229, %230 : vector<8x32xf32>
      %cst_59 = arith.constant 5.000000e-01 : f32
      %232 = vector.broadcast %cst_59 : f32 to vector<8x32xf32>
      %233 = arith.mulf %232, %231 : vector<8x32xf32>
      %cst_60 = arith.constant 4.471500e-02 : f32
      %234 = vector.broadcast %cst_60 : f32 to vector<8x32xf32>
      %235 = arith.mulf %234, %231 : vector<8x32xf32>
      %236 = arith.mulf %235, %231 : vector<8x32xf32>
      %237 = arith.mulf %236, %231 : vector<8x32xf32>
      %238 = arith.addf %231, %237 : vector<8x32xf32>
      %cst_61 = arith.constant 0.797884583 : f32
      %239 = vector.broadcast %cst_61 : f32 to vector<8x32xf32>
      %240 = arith.mulf %239, %238 : vector<8x32xf32>
      %241 = math.tanh %240 : vector<8x32xf32>
      %cst_62 = arith.constant 1.000000e+00 : f32
      %242 = vector.broadcast %cst_62 : f32 to vector<8x32xf32>
      %243 = arith.addf %242, %241 : vector<8x32xf32>
      %244 = arith.mulf %233, %243 : vector<8x32xf32>
      %245 = arith.addf %244, %223 : vector<8x32xf32>
      %cst_63 = arith.constant dense<0.000000e+00> : vector<8xf32>
      %246 = vector.multi_reduction <add>, %245, %cst_63 [1] : vector<8x32xf32> to vector<8xf32>
      %247 = vector.shape_cast %246 : vector<8xf32> to vector<8x1xf32>
      %cst_64 = arith.constant 3.200000e+01 : f32
      %248 = vector.broadcast %cst_64 : f32 to vector<8x1xf32>
      %249 = arith.divf %247, %248 : vector<8x1xf32>
      %250 = vector.broadcast %249 : vector<8x1xf32> to vector<8x32xf32>
      %251 = arith.subf %245, %250 : vector<8x32xf32>
      %252 = arith.mulf %251, %251 : vector<8x32xf32>
      %cst_65 = arith.constant dense<0.000000e+00> : vector<8xf32>
      %253 = vector.multi_reduction <add>, %252, %cst_65 [1] : vector<8x32xf32> to vector<8xf32>
      %254 = vector.shape_cast %253 : vector<8xf32> to vector<8x1xf32>
      %cst_66 = arith.constant 3.200000e+01 : f32
      %255 = vector.broadcast %cst_66 : f32 to vector<8x1xf32>
      %256 = arith.divf %254, %255 : vector<8x1xf32>
      %257 = vector.broadcast %249 : vector<8x1xf32> to vector<8x32xf32>
      %258 = arith.subf %245, %257 : vector<8x32xf32>
      %cst_67 = arith.constant 9.99999974E-6 : f32
      %259 = vector.broadcast %cst_67 : f32 to vector<8x1xf32>
      %260 = arith.addf %256, %259 : vector<8x1xf32>
      %261 = math.rsqrt %260 : vector<8x1xf32>
      %262 = vector.broadcast %261 : vector<8x1xf32> to vector<8x32xf32>
      %263 = arith.mulf %258, %262 : vector<8x32xf32>
      %264 = vector.broadcast %226 : vector<1x32xf32> to vector<8x32xf32>
      %265 = arith.mulf %263, %264 : vector<8x32xf32>
      %266 = vector.broadcast %227 : vector<1x32xf32> to vector<8x32xf32>
      %267 = arith.addf %265, %266 : vector<8x32xf32>
      %cst_68 = arith.constant 5.000000e-01 : f32
      %268 = vector.broadcast %cst_68 : f32 to vector<8x32xf32>
      %269 = arith.mulf %268, %267 : vector<8x32xf32>
      %cst_69 = arith.constant 4.471500e-02 : f32
      %270 = vector.broadcast %cst_69 : f32 to vector<8x32xf32>
      %271 = arith.mulf %270, %267 : vector<8x32xf32>
      %272 = arith.mulf %271, %267 : vector<8x32xf32>
      %273 = arith.mulf %272, %267 : vector<8x32xf32>
      %274 = arith.addf %267, %273 : vector<8x32xf32>
      %cst_70 = arith.constant 0.797884583 : f32
      %275 = vector.broadcast %cst_70 : f32 to vector<8x32xf32>
      %276 = arith.mulf %275, %274 : vector<8x32xf32>
      %277 = math.tanh %276 : vector<8x32xf32>
      %cst_71 = arith.constant 1.000000e+00 : f32
      %278 = vector.broadcast %cst_71 : f32 to vector<8x32xf32>
      %279 = arith.addf %278, %277 : vector<8x32xf32>
      %280 = arith.mulf %269, %279 : vector<8x32xf32>
      %281 = arith.truncf %280 : vector<8x32xf32> to vector<8x32xbf16>
      %c0_72 = arith.constant 0 : index
      %c0_73 = arith.constant 0 : index
      %282 = vector.load %arg9[%c0_72, %c0_73] : memref<32x1xbf16, #tpu.memory_space<vmem>>, vector<32x1xbf16>
      %cst_74 = arith.constant dense<0.000000e+00> : vector<8x1xf32>
      %283 = tpu.matmul %281, %282, %cst_74 {dimension_numbers = #tpu.dot_dimension_numbers<[1], [0], [0], [1], [0, 0, 1, 1], [], []>} : vector<8x32xbf16>, vector<32x1xbf16>, vector<8x1xf32> -> vector<8x1xf32>
      %c0_75 = arith.constant 0 : index
      %c0_76 = arith.constant 0 : index
      %284 = vector.load %arg10[%c0_75, %c0_76] : memref<1x1xf32, #tpu.memory_space<vmem>>, vector<1x1xf32>
      %285 = vector.broadcast %284 : vector<1x1xf32> to vector<8x1xf32>
      %286 = arith.addf %283, %285 : vector<8x1xf32>
      %287 = arith.negf %286 : vector<8x1xf32>
      %288 = math.exp %287 : vector<8x1xf32>
      %cst_77 = arith.constant 1.000000e+00 : f32
      %289 = vector.broadcast %cst_77 : f32 to vector<8x1xf32>
      %290 = arith.addf %289, %288 : vector<8x1xf32>
      %291 = arith.divf %289, %290 : vector<8x1xf32>
      %c0_78 = arith.constant 0 : index
      %c0_79 = arith.constant 0 : index
      %292 = vector.load %arg11[%c0_78, %c0_79] : memref<8x1xf32, #tpu.memory_space<vmem>>, vector<8x1xf32>
      tpu.vector_store %arg11[%c0_78, %c0_79], %291 {strides = array<i32>} : memref<8x1xf32, #tpu.memory_space<vmem>>, vector<8x1xf32>,
    } else {
    }
    return
  }
  func.func @transform_0(%arg0: i32, %arg1: i32) -> (i32, i32, i32) {
    %c0_i32 = arith.constant 0 : i32
    %c0_i32_0 = arith.constant 0 : i32
    return %arg1, %arg0, %c0_i32 : i32, i32, i32
  }
  func.func @transform_1(%arg0: i32, %arg1: i32) -> (i32, i32) {
    %c0_i32 = arith.constant 0 : i32
    %c0_i32_0 = arith.constant 0 : i32
    %c0_i32_1 = arith.constant 0 : i32
    return %c0_i32, %c0_i32_0 : i32, i32
  }
  func.func @transform_2(%arg0: i32, %arg1: i32) -> (i32, i32, i32) {
    %c7_i32 = arith.constant 7 : i32
    %c0_i32 = arith.constant 0 : i32
    %c0_i32_0 = arith.constant 0 : i32
    return %c7_i32, %arg0, %c0_i32 : i32, i32, i32
  }
  func.func @transform_3(%arg0: i32, %arg1: i32) -> (i32, i32) {
    %c0_i32 = arith.constant 0 : i32
    %c0_i32_0 = arith.constant 0 : i32
    %c0_i32_1 = arith.constant 0 : i32
    return %c0_i32, %c0_i32_0 : i32, i32
  }
  func.func @transform_4(%arg0: i32, %arg1: i32) -> (i32, i32) {
    %c0_i32 = arith.constant 0 : i32
    %c0_i32_0 = arith.constant 0 : i32
    %c0_i32_1 = arith.constant 0 : i32
    return %c0_i32, %c0_i32_0 : i32, i32
  }
  func.func @transform_5(%arg0: i32, %arg1: i32) -> (i32, i32) {
    %c0_i32 = arith.constant 0 : i32
    %c0_i32_0 = arith.constant 0 : i32
    %c0_i32_1 = arith.constant 0 : i32
    return %c0_i32, %c0_i32_0 : i32, i32
  }
  func.func @transform_6(%arg0: i32, %arg1: i32) -> (i32, i32) {
    %c0_i32 = arith.constant 0 : i32
    %c0_i32_0 = arith.constant 0 : i32
    %c0_i32_1 = arith.constant 0 : i32
    return %c0_i32, %c0_i32_0 : i32, i32
  }
  func.func @transform_7(%arg0: i32, %arg1: i32) -> (i32, i32) {
    %c0_i32 = arith.constant 0 : i32
    %c0_i32_0 = arith.constant 0 : i32
    %c0_i32_1 = arith.constant 0 : i32
    return %c0_i32, %c0_i32_0 : i32, i32
  }
  func.func @transform_8(%arg0: i32, %arg1: i32) -> (i32, i32) {
    %c0_i32 = arith.constant 0 : i32
    %c0_i32_0 = arith.constant 0 : i32
    %c0_i32_1 = arith.constant 0 : i32
    return %c0_i32, %c0_i32_0 : i32, i32
  }
  func.func @transform_9(%arg0: i32, %arg1: i32) -> (i32, i32) {
    %c0_i32 = arith.constant 0 : i32
    %c0_i32_0 = arith.constant 0 : i32
    return %arg0, %c0_i32 : i32, i32
  }
  func.func @transform_10(%arg0: i32, %arg1: i32) -> (i32, i32) {
    %c0_i32 = arith.constant 0 : i32
    %c0_i32_0 = arith.constant 0 : i32
    return %arg0, %c0_i32 : i32, i32
  }
  func.func @transform_11(%arg0: i32, %arg1: i32) -> (i32, i32) {
    %c0_i32 = arith.constant 0 : i32
    %c0_i32_0 = arith.constant 0 : i32
    return %arg0, %c0_i32 : i32, i32
  }
}

</mosaic_0001>

<llo_original>
// kernel: cnn_xlstm_forward.9
$region0: #{cnn_xlstm_forward.9}
  #allocation0 [shape = 'u32[]', space=smem, size = 0x4, offset = 0x4, fixed_abs, tag = 'smem constant byte address 0x4 - core index']
  #allocation1 [shape = 'u32[144,128]{1,0:T(1,128)}', space=vmem, size = 0x12000, scoped, tag = 'internal scratch']
  %s0 = inlined_call_operand.vmem [shape: f32[64,48], index: 0, kind: input, shape index: {}]
  %s1 = inlined_call_operand.vmem [shape: bf16[48,32], index: 1, kind: input, shape index: {}]
  %s2 = inlined_call_operand.vmem [shape: f32[1,32], index: 2, kind: input, shape index: {}]
  %s3 = inlined_call_operand.vmem [shape: f32[64,32], index: 3, kind: output, shape index: {}]
  %s4 = sld [smem:[#allocation0]]
  $region22: #{cnn_xlstm_forward.9} parent=0
    _
  %s6 = ssub.s32 1, %s4
  %s7 = scalar_select 0, %s6, %s4
  // Predicated region
  $region2: #{cnn_xlstm_forward.9} parent=0 // pred_check
    _
  $region3: #{cnn_xlstm_forward.9} parent=0 // pred_check_branch
    %9 = sbr.rel (0) target = $region5
  $region4: #{cnn_xlstm_forward.9} parent=0 // pred_region
    _
  $region5: #{cnn_xlstm_forward.9} parent=0 // pred_fallthru
    _
  // Predicated region
  $region6: #{cnn_xlstm_forward.9} parent=0 // pred_check
    _
  $region7: #{cnn_xlstm_forward.9} parent=0 // pred_check_branch
    %11 = sbr.rel (0) target = $region9
  $region8: #{cnn_xlstm_forward.9} parent=0 // pred_region
    _
  $region9: #{cnn_xlstm_forward.9} parent=0 // pred_fallthru
    _
  // Predicated region
  $region10: #{cnn_xlstm_forward.9} parent=0 // pred_check
    _
  $region11: #{cnn_xlstm_forward.9} parent=0 // pred_check_branch
    %13 = sbr.rel (0) target = $region13
  $region12: #{cnn_xlstm_forward.9} parent=0 // pred_region
    _
  $region13: #{cnn_xlstm_forward.9} parent=0 // pred_fallthru
    _
  %v15 = vld [vmem:[%s0] sm:$0xff]
  %v16 = vld [vmem:[%s0 + $0x8] sm:$0xff]
  %v17 = vld [vmem:[%s0 + $0x10] sm:$0xff]
  %v18 = vld [vmem:[%s0 + $0x18] sm:$0xff]
  %v19 = vld [vmem:[%s0 + $0x20] sm:$0xff]
  %v20 = vld [vmem:[%s0 + $0x28] sm:$0xff]
  %v21 = vld [vmem:[%s0 + $0x30] sm:$0xff]
  %v22 = vld [vmem:[%s0 + $0x38] sm:$0xff]
  %v23 = vpack.c.bf16 %v16, %v15
  %v24 = vpack.c.bf16 %v18, %v17
  %v25 = vpack.c.bf16 %v20, %v19
  %v26 = vpack.c.bf16 %v22, %v21
  %v27 = vld [vmem:[%s1] sm:$0xf]
  %v28 = vld [vmem:[%s1 + $0x4] sm:$0xf]
  %v29 = vld [vmem:[%s1 + $0x8] sm:$0xf]
  %v30 = vld [vmem:[%s1 + $0xc] sm:$0xf]
  %v31 = vld [vmem:[%s1 + $0x10] sm:$0xf]
  %v32 = vld [vmem:[%s1 + $0x14] sm:$0xf]
  %v33 = vld [vmem:[%s2] sm:$0x1]
  %v35 = vlaneseq
  %v36 = vshrl.u32 %v35, 7
  %v37 = vsub.s32 0, %v36
  %v38 = vrot.slane %v33, %v37
  %v46 = vunpack.c.l.b16 %v27
  %v47 = vunpack.c.l.b16 %v28
  %v48 = vunpack.c.l.b16 %v29
  %v49 = vunpack.c.l.b16 %v30
  %v50 = vunpack.c.l.b16 %v31
  %v51 = vunpack.c.l.b16 %v32
  %v52 = vpack.c.b16 %v47, %v46
  %v53 = vpack.c.b16 %v49, %v48
  %v54 = vpack.c.b16 %v51, %v50
  %vm58 = vcmask 392192
  %v60 = vsel %vm58, %v23, 0
  %v63 = vsel %vm58, %v24, 0
  %v66 = vsel %vm58, %v25, 0
  %v69 = vsel %vm58, %v26, 0
  %71 = vmatprep.subr.bf16.mxu0 0
  %72 = vmatpush1.bf16.msra.mxu0 0
  %73 = vmatprep.subr.bf16.mxu0 0
  %74 = vmatpush1.bf16.msra.mxu0 0
  %75 = vmatprep.subr.bf16.mxu0 0
  %76 = vmatpush1.bf16.msra.mxu0 0
  %77 = vmatprep.subr.bf16.mxu0 0
  %78 = vmatpush1.bf16.msra.mxu0 0
  %79 = vmatprep.subr.bf16.mxu0 0
  %80 = vmatpush1.bf16.msra.mxu0 0
  %81 = vmatprep.subr.bf16.mxu0 0
  %82 = vmatpush1.bf16.msra.mxu0 %v54
  %83 = vmatprep.subr.bf16.mxu0 0
  %84 = vmatpush1.bf16.msra.mxu0 %v53
  %85 = vmatprep.subr.bf16.mxu0 0
  %86 = vmatpush1.bf16.msra.mxu0 %v52
  %87 = vmatprep.subr.bf16.mxu0 0
  %88 = vmatpush2.bf16.msra.mxu0 0
  %89 = vmatprep.subr.bf16.mxu0 0
  %90 = vmatpush2.bf16.msra.mxu0 0
  %91 = vmatprep.subr.bf16.mxu0 0
  %92 = vmatpush2.bf16.msra.mxu0 0
  %93 = vmatprep.subr.bf16.mxu0 0
  %94 = vmatpush2.bf16.msra.mxu0 0
  %95 = vmatprep.subr.bf16.mxu0 0
  %96 = vmatpush2.bf16.msra.mxu0 0
  %97 = vmatprep.subr.bf16.mxu0 0
  %98 = vmatpush2.bf16.msra.mxu0 0
  %99 = vmatprep.subr.bf16.mxu0 0
  %100 = vmatpush2.bf16.msra.mxu0 0
  %101 = vmatprep.subr.bf16.mxu0 0
  %102 = vmatpush2.bf16.msra.mxu0 0
  %103 = vmatprep.mubr.bf16.mxu0 0
  %104 = vmatmul.mubr.bf16.gmra.mxu0 %v60
  %v105 = vpop.f32.mrf.mxu0
  %v106 = vadd.f32 %v38, %v105
  %v107 = vpop.f32.mrf.mxu0
  %v108 = vpop.f32.mrf.mxu0
  %v109 = vadd.f32 %v38, %v108
  %v110 = vpop.f32.mrf.mxu0
  %111 = vmatprep.mubr.bf16.mxu0 0
  %112 = vmatmul.mubr.bf16.gmra.mxu0 %v63
  %v113 = vpop.f32.mrf.mxu0
  %v114 = vadd.f32 %v38, %v113
  %v115 = vpop.f32.mrf.mxu0
  %v116 = vpop.f32.mrf.mxu0
  %v117 = vadd.f32 %v38, %v116
  %v118 = vpop.f32.mrf.mxu0
  %119 = vmatprep.mubr.bf16.mxu0 0
  %120 = vmatmul.mubr.bf16.gmra.mxu0 %v66
  %v121 = vpop.f32.mrf.mxu0
  %v122 = vadd.f32 %v38, %v121
  %v123 = vpop.f32.mrf.mxu0
  %v124 = vpop.f32.mrf.mxu0
  %v125 = vadd.f32 %v38, %v124
  %v126 = vpop.f32.mrf.mxu0
  %127 = vmatprep.mubr.bf16.mxu0 0
  %128 = vmatmul.mubr.bf16.gmra.mxu0 %v69
  %v129 = vpop.f32.mrf.mxu0
  %v130 = vadd.f32 %v38, %v129
  %v131 = vpop.f32.mrf.mxu0
  %v132 = vpop.f32.mrf.mxu0
  %v133 = vadd.f32 %v38, %v132
  %v134 = vpop.f32.mrf.mxu0
  %135 = vdwg.mxu0
  %vm136 = vcmask 261120
  %137 = vst.msk [vmem:[%s3] sm:$0xff] %vm136, %v106
  %138 = vst.msk [vmem:[%s3 + $0x8] sm:$0xff] %vm136, %v109
  %139 = vst.msk [vmem:[%s3 + $0x10] sm:$0xff] %vm136, %v114
  %140 = vst.msk [vmem:[%s3 + $0x18] sm:$0xff] %vm136, %v117
  %141 = vst.msk [vmem:[%s3 + $0x20] sm:$0xff] %vm136, %v122
  %142 = vst.msk [vmem:[%s3 + $0x28] sm:$0xff] %vm136, %v125
  %143 = vst.msk [vmem:[%s3 + $0x30] sm:$0xff] %vm136, %v130
  %144 = vst.msk [vmem:[%s3 + $0x38] sm:$0xff] %vm136, %v133
  // Predicated region
  $region14: #{cnn_xlstm_forward.9} parent=0 // pred_check
    _
  $region15: #{cnn_xlstm_forward.9} parent=0 // pred_check_branch
    %146 = sbr.rel (0) target = $region17
  $region16: #{cnn_xlstm_forward.9} parent=0 // pred_region
    _
  $region17: #{cnn_xlstm_forward.9} parent=0 // pred_fallthru
    _
  // Predicated region
  $region18: #{cnn_xlstm_forward.9} parent=0 // pred_check
    _
  $region19: #{cnn_xlstm_forward.9} parent=0 // pred_check_branch
    %148 = sbr.rel (0) target = $region21
  $region20: #{cnn_xlstm_forward.9} parent=0 // pred_region
    _
  $region21: #{cnn_xlstm_forward.9} parent=0 // pred_fallthru
    _

// kernel: cnn_xlstm_forward.10
$region0: #{cnn_xlstm_forward.10}
  #allocation0 [shape = 'u32[]', space=smem, size = 0x4, offset = 0x4, fixed_abs, tag = 'smem constant byte address 0x4 - core index']
  #allocation1 [shape = 'u32[144,128]{1,0:T(1,128)}', space=vmem, size = 0x12000, scoped, tag = 'internal scratch']
  %s0 = inlined_call_operand.vmem [shape: f32[64,32], index: 0, kind: input, shape index: {}]
  %s1 = inlined_call_operand.vmem [shape: bf16[32,128], index: 1, kind: input, shape index: {}]
  %s2 = inlined_call_operand.vmem [shape: f32[1,128], index: 2, kind: input, shape index: {}]
  %s3 = inlined_call_operand.vmem [shape: f32[64,128], index: 3, kind: output, shape index: {}]
  %s4 = sld [smem:[#allocation0]]
  $region22: #{cnn_xlstm_forward.10} parent=0
    _
  %s6 = ssub.s32 1, %s4
  %s7 = scalar_select 0, %s6, %s4
  // Predicated region
  $region2: #{cnn_xlstm_forward.10} parent=0 // pred_check
    _
  $region3: #{cnn_xlstm_forward.10} parent=0 // pred_check_branch
    %9 = sbr.rel (0) target = $region5
  $region4: #{cnn_xlstm_forward.10} parent=0 // pred_region
    _
  $region5: #{cnn_xlstm_forward.10} parent=0 // pred_fallthru
    _
  // Predicated region
  $region6: #{cnn_xlstm_forward.10} parent=0 // pred_check
    _
  $region7: #{cnn_xlstm_forward.10} parent=0 // pred_check_branch
    %11 = sbr.rel (0) target = $region9
  $region8: #{cnn_xlstm_forward.10} parent=0 // pred_region
    _
  $region9: #{cnn_xlstm_forward.10} parent=0 // pred_fallthru
    _
  // Predicated region
  $region10: #{cnn_xlstm_forward.10} parent=0 // pred_check
    _
  $region11: #{cnn_xlstm_forward.10} parent=0 // pred_check_branch
    %13 = sbr.rel (0) target = $region13
  $region12: #{cnn_xlstm_forward.10} parent=0 // pred_region
    _
  $region13: #{cnn_xlstm_forward.10} parent=0 // pred_fallthru
    _
  %v15 = vld [vmem:[%s0] sm:$0xff]
  %v16 = vld [vmem:[%s0 + $0x8] sm:$0xff]
  %v17 = vld [vmem:[%s0 + $0x10] sm:$0xff]
  %v18 = vld [vmem:[%s0 + $0x18] sm:$0xff]
  %v19 = vld [vmem:[%s0 + $0x20] sm:$0xff]
  %v20 = vld [vmem:[%s0 + $0x28] sm:$0xff]
  %v21 = vld [vmem:[%s0 + $0x30] sm:$0xff]
  %v22 = vld [vmem:[%s0 + $0x38] sm:$0xff]
  %v23 = vpack.c.bf16 %v16, %v15
  %v24 = vpack.c.bf16 %v18, %v17
  %v25 = vpack.c.bf16 %v20, %v19
  %v26 = vpack.c.bf16 %v22, %v21
  %v27 = vld [vmem:[%s1] sm:$0xf]
  %v28 = vld [vmem:[%s1 + $0x4] sm:$0xf]
  %v29 = vld [vmem:[%s1 + $0x8] sm:$0xf]
  %v30 = vld [vmem:[%s1 + $0xc] sm:$0xf]
  %v31 = vld [vmem:[%s2] sm:$0x1]
  %v33 = vlaneseq
  %v34 = vshrl.u32 %v33, 7
  %v35 = vsub.s32 0, %v34
  %v36 = vrot.slane %v31, %v35
  %v42 = vunpack.c.l.b16 %v27
  %v43 = vunpack.c.l.b16 %v28
  %v44 = vunpack.c.l.b16 %v29
  %v45 = vunpack.c.l.b16 %v30
  %v46 = vpack.c.b16 %v43, %v42
  %v47 = vpack.c.b16 %v45, %v44
  %vm50 = vcmask 261120
  %v52 = vsel %vm50, %v23, 0
  %v55 = vsel %vm50, %v24, 0
  %v58 = vsel %vm50, %v25, 0
  %v61 = vsel %vm50, %v26, 0
  %63 = vmatprep.subr.bf16.mxu0 0
  %64 = vmatpush1.bf16.msra.mxu0 0
  %65 = vmatprep.subr.bf16.mxu0 0
  %66 = vmatpush1.bf16.msra.mxu0 0
  %67 = vmatprep.subr.bf16.mxu0 0
  %68 = vmatpush1.bf16.msra.mxu0 0
  %69 = vmatprep.subr.bf16.mxu0 0
  %70 = vmatpush1.bf16.msra.mxu0 0
  %71 = vmatprep.subr.bf16.mxu0 0
  %72 = vmatpush1.bf16.msra.mxu0 0
  %73 = vmatprep.subr.bf16.mxu0 0
  %74 = vmatpush1.bf16.msra.mxu0 0
  %75 = vmatprep.subr.bf16.mxu0 0
  %76 = vmatpush1.bf16.msra.mxu0 %v47
  %77 = vmatprep.subr.bf16.mxu0 0
  %78 = vmatpush1.bf16.msra.mxu0 %v46
  %79 = vmatprep.subr.bf16.mxu0 0
  %80 = vmatpush2.bf16.msra.mxu0 0
  %81 = vmatprep.subr.bf16.mxu0 0
  %82 = vmatpush2.bf16.msra.mxu0 0
  %83 = vmatprep.subr.bf16.mxu0 0
  %84 = vmatpush2.bf16.msra.mxu0 0
  %85 = vmatprep.subr.bf16.mxu0 0
  %86 = vmatpush2.bf16.msra.mxu0 0
  %87 = vmatprep.subr.bf16.mxu0 0
  %88 = vmatpush2.bf16.msra.mxu0 0
  %89 = vmatprep.subr.bf16.mxu0 0
  %90 = vmatpush2.bf16.msra.mxu0 0
  %91 = vmatprep.subr.bf16.mxu0 0
  %92 = vmatpush2.bf16.msra.mxu0 0
  %93 = vmatprep.subr.bf16.mxu0 0
  %94 = vmatpush2.bf16.msra.mxu0 0
  %95 = vmatprep.mubr.bf16.mxu0 0
  %96 = vmatmul.mubr.bf16.gmra.mxu0 %v52
  %v97 = vpop.f32.mrf.mxu0
  %v98 = vadd.f32 %v36, %v97
  %v99 = vpop.f32.mrf.mxu0
  %v100 = vpop.f32.mrf.mxu0
  %v101 = vadd.f32 %v36, %v100
  %v102 = vpop.f32.mrf.mxu0
  %103 = vmatprep.mubr.bf16.mxu0 0
  %104 = vmatmul.mubr.bf16.gmra.mxu0 %v55
  %v105 = vpop.f32.mrf.mxu0
  %v106 = vadd.f32 %v36, %v105
  %v107 = vpop.f32.mrf.mxu0
  %v108 = vpop.f32.mrf.mxu0
  %v109 = vadd.f32 %v36, %v108
  %v110 = vpop.f32.mrf.mxu0
  %111 = vmatprep.mubr.bf16.mxu0 0
  %112 = vmatmul.mubr.bf16.gmra.mxu0 %v58
  %v113 = vpop.f32.mrf.mxu0
  %v114 = vadd.f32 %v36, %v113
  %v115 = vpop.f32.mrf.mxu0
  %v116 = vpop.f32.mrf.mxu0
  %v117 = vadd.f32 %v36, %v116
  %v118 = vpop.f32.mrf.mxu0
  %119 = vmatprep.mubr.bf16.mxu0 0
  %120 = vmatmul.mubr.bf16.gmra.mxu0 %v61
  %v121 = vpop.f32.mrf.mxu0
  %v122 = vadd.f32 %v36, %v121
  %v123 = vpop.f32.mrf.mxu0
  %v124 = vpop.f32.mrf.mxu0
  %v125 = vadd.f32 %v36, %v124
  %v126 = vpop.f32.mrf.mxu0
  %127 = vdwg.mxu0
  %128 = vst [vmem:[%s3] sm:$0xff] %v98
  %129 = vst [vmem:[%s3 + $0x8] sm:$0xff] %v101
  %130 = vst [vmem:[%s3 + $0x10] sm:$0xff] %v106
  %131 = vst [vmem:[%s3 + $0x18] sm:$0xff] %v109
  %132 = vst [vmem:[%s3 + $0x20] sm:$0xff] %v114
  %133 = vst [vmem:[%s3 + $0x28] sm:$0xff] %v117
  %134 = vst [vmem:[%s3 + $0x30] sm:$0xff] %v122
  %135 = vst [vmem:[%s3 + $0x38] sm:$0xff] %v125
  // Predicated region
  $region14: #{cnn_xlstm_forward.10} parent=0 // pred_check
    _
  $region15: #{cnn_xlstm_forward.10} parent=0 // pred_check_branch
    %137 = sbr.rel (0) target = $region17
  $region16: #{cnn_xlstm_forward.10} parent=0 // pred_region
    _
  $region17: #{cnn_xlstm_forward.10} parent=0 // pred_fallthru
    _
  // Predicated region
  $region18: #{cnn_xlstm_forward.10} parent=0 // pred_check
    _
  $region19: #{cnn_xlstm_forward.10} parent=0 // pred_check_branch
    %139 = sbr.rel (0) target = $region21
  $region20: #{cnn_xlstm_forward.10} parent=0 // pred_region
    _
  $region21: #{cnn_xlstm_forward.10} parent=0 // pred_fallthru
    _

// kernel: cnn_xlstm_forward.11
$region0: #{cnn_xlstm_forward.11}
  #allocation0 [shape = 'u32[]', space=smem, size = 0x4, offset = 0x4, fixed_abs, tag = 'smem constant byte address 0x4 - core index']
  #allocation1 [shape = 'u32[144,128]{1,0:T(1,128)}', space=vmem, size = 0x12000, scoped, tag = 'internal scratch']
  %s0 = inlined_call_operand.vmem [shape: f32[8,8,128], index: 0, kind: input, shape index: {}]
  %s1 = inlined_call_operand.vmem [shape: bf16[32,128], index: 1, kind: input, shape index: {}]
  %s2 = inlined_call_operand.vmem [shape: f32[8,8,32], index: 2, kind: output, shape index: {0}]
  %s3 = inlined_call_operand.vmem [shape: f32[8,32], index: 3, kind: output, shape index: {1}]
  %s4 = inlined_call_operand.vmem [shape: f32[8,32], index: 4, kind: output, shape index: {2}]
  %5 = xla_tuple %s2, %s3, %s4
  %s6 = sld [smem:[#allocation0]]
  $region38: #{cnn_xlstm_forward.11} parent=0
    _
  %s8 = ssub.s32 1, %s6
  %s9 = scalar_select 0, %s8, %s6
  // Predicated region
  $region2: #{cnn_xlstm_forward.11} parent=0 // pred_check
    _
  $region3: #{cnn_xlstm_forward.11} parent=0 // pred_check_branch
    %11 = sbr.rel (0) target = $region5
  $region4: #{cnn_xlstm_forward.11} parent=0 // pred_region
    _
  $region5: #{cnn_xlstm_forward.11} parent=0 // pred_fallthru
    _
  // Predicated region
  $region6: #{cnn_xlstm_forward.11} parent=0 // pred_check
    _
  $region7: #{cnn_xlstm_forward.11} parent=0 // pred_check_branch
    %13 = sbr.rel (0) target = $region9
  $region8: #{cnn_xlstm_forward.11} parent=0 // pred_region
    _
  $region9: #{cnn_xlstm_forward.11} parent=0 // pred_fallthru
    _
  %p15 = scmp.eq.s32.totalorder 0, 0
  // Predicated region
  $region10: #{cnn_xlstm_forward.11} parent=0 // pred_check
    %p16 = pneg %p15
  $region11: #{cnn_xlstm_forward.11} parent=0 // pred_check_branch
    %18 = sbr.rel (%p16) target = $region13
  $region12: #{cnn_xlstm_forward.11} parent=0 // pred_region
    %vm19 = vcmask 261120
    %20 = vst.msk [vmem:[%s3] sm:$0xff] %vm19, 0.0
    %21 = vst.msk [vmem:[%s4] sm:$0xff] %vm19, 0.0
  $region13: #{cnn_xlstm_forward.11} parent=0 // pred_fallthru
    _
  %s22 = smul.u32 0, 8
  %s23 = ssub.s32 8, %s22
  %p24 = scmp.lt.s32.totalorder %s23, 8
  %s25 = scalar_select %p24, %s23, 8
  %v26 = vld [vmem:[%s1] sm:$0xf]
  %v27 = vld [vmem:[%s1 + $0x4] sm:$0xf]
  %v28 = vld [vmem:[%s1 + $0x8] sm:$0xf]
  %v29 = vld [vmem:[%s1 + $0xc] sm:$0xf]
  %v30 = vld [vmem:[%s3] sm:$0xff]
  %v31 = vld [vmem:[%s4] sm:$0xff]
  %v32 = vld [vmem:[%s0] sm:$0xff]
  %v33 = vpack.c.bf16 %v30, %v30
  %v38 = vunpack.c.l.b16 %v26
  %v39 = vunpack.c.l.b16 %v27
  %v40 = vunpack.c.l.b16 %v28
  %v41 = vunpack.c.l.b16 %v29
  %v42 = vpack.c.b16 %v39, %v38
  %v43 = vpack.c.b16 %v41, %v40
  %vm46 = vcmask 261120
  %v48 = vsel %vm46, %v33, 0
  %50 = vmatprep.subr.bf16.mxu0 0
  %51 = vmatpush1.bf16.msra.mxu0 0
  %52 = vmatprep.subr.bf16.mxu0 0
  %53 = vmatpush1.bf16.msra.mxu0 0
  %54 = vmatprep.subr.bf16.mxu0 0
  %55 = vmatpush1.bf16.msra.mxu0 0
  %56 = vmatprep.subr.bf16.mxu0 0
  %57 = vmatpush1.bf16.msra.mxu0 0
  %58 = vmatprep.subr.bf16.mxu0 0
  %59 = vmatpush1.bf16.msra.mxu0 0
  %60 = vmatprep.subr.bf16.mxu0 0
  %61 = vmatpush1.bf16.msra.mxu0 0
  %62 = vmatprep.subr.bf16.mxu0 0
  %63 = vmatpush1.bf16.msra.mxu0 %v43
  %64 = vmatprep.subr.bf16.mxu0 0
  %65 = vmatpush1.bf16.msra.mxu0 %v42
  %66 = vmatprep.subr.bf16.mxu0 0
  %67 = vmatpush2.bf16.msra.mxu0 0
  %68 = vmatprep.subr.bf16.mxu0 0
  %69 = vmatpush2.bf16.msra.mxu0 0
  %70 = vmatprep.subr.bf16.mxu0 0
  %71 = vmatpush2.bf16.msra.mxu0 0
  %72 = vmatprep.subr.bf16.mxu0 0
  %73 = vmatpush2.bf16.msra.mxu0 0
  %74 = vmatprep.subr.bf16.mxu0 0
  %75 = vmatpush2.bf16.msra.mxu0 0
  %76 = vmatprep.subr.bf16.mxu0 0
  %77 = vmatpush2.bf16.msra.mxu0 0
  %78 = vmatprep.subr.bf16.mxu0 0
  %79 = vmatpush2.bf16.msra.mxu0 0
  %80 = vmatprep.subr.bf16.mxu0 0
  %81 = vmatpush2.bf16.msra.mxu0 0
  %82 = vmatprep.mubr.bf16.mxu0 0
  %83 = vmatmul.mubr.bf16.gmra.mxu0 %v48
  %v84 = vpop.f32.mrf.mxu0
  %v85 = vadd.f32 0.0, %v84
  %v86 = vpop.f32.mrf.mxu0
  %v87 = vpop.f32.mrf.mxu0
  %v88 = vpop.f32.mrf.mxu0
  %89 = vdwg.mxu0
  %v90 = vadd.f32 %v32, %v85
  %v91 = vmul.f32 %v90, 1.442695
  %v92 = vpow.pop %v91
  %v93 = vtanh.pop %v90
  %v94 = vxor.u32 %v90, 2147483648
  %v95 = vmul.f32 %v94, 1.442695
  %v96 = vpow.pop %v95
  %v97 = vadd.f32 %v96, 1.0
  %v98 = vrcp.pop %v97
  %v99 = vmul.f32 1.0, %v98
  %101 = vrot.lane.b32.xlu0 %v31, 32
  %v102 = vpop.permute.xlu0 %101
  %v104 = vmul.f32 %v92, %v102
  %106 = vrot.lane.b32.xlu0 %v93, 64
  %v107 = vpop.permute.xlu0 %106
  %v109 = vmul.f32 %v92, %v107
  %111 = vrot.lane.b32.xlu0 %v109, 32
  %v112 = vpop.permute.xlu0 %111
  %v114 = vadd.f32 %v104, %v112
  %v115 = vtanh.pop %v114
  %117 = vrot.lane.b32.xlu0 %v115, 64
  %v118 = vpop.permute.xlu0 %117
  %v120 = vmul.f32 %v99, %v118
  %122 = vrot.lane.b32.xlu0 %v120, 32
  %v123 = vpop.permute.xlu0 %122
  %125 = vst.msk [vmem:[%s2] sm:$0xff] %vm46, %v123
  %p126 = scmp.gt.s32.totalorder %s25, 0
  %s127 = scalar_select %p126, 1, 0
  %v128 = vstv %s127
  %vm129 = vcmp.eq.s32.totalorder %v128, 1
  %131 = vrot.lane.b32.xlu0 %v30, 96
  %v132 = vpop.permute.xlu0 %131
  %v134 = vsel %vm129, %v120, %v132
  %v135 = vsel %vm129, %v114, %v102
  %s136 = scalar_lea.vmem %s0, 8
  %v137 = vld [vmem:[%s136] sm:$0xff]
  %v138 = vpack.c.bf16 %v134, %v134
  %140 = vrot.lane.b32.xlu0 %v138, 32
  %v141 = vpop.permute.xlu0 %140
  %v143 = vsel %vm46, %v141, 0
  %145 = vmatprep.subr.bf16.mxu0 0
  %146 = vmatpush1.bf16.msra.mxu0 0
  %147 = vmatprep.subr.bf16.mxu0 0
  %148 = vmatpush1.bf16.msra.mxu0 0
  %149 = vmatprep.subr.bf16.mxu0 0
  %150 = vmatpush1.bf16.msra.mxu0 0
  %151 = vmatprep.subr.bf16.mxu0 0
  %152 = vmatpush1.bf16.msra.mxu0 0
  %153 = vmatprep.subr.bf16.mxu0 0
  %154 = vmatpush1.bf16.msra.mxu0 0
  %155 = vmatprep.subr.bf16.mxu0 0
  %156 = vmatpush1.bf16.msra.mxu0 0
  %157 = vmatprep.subr.bf16.mxu0 0
  %158 = vmatpush1.bf16.msra.mxu0 %v43
  %159 = vmatprep.subr.bf16.mxu0 0
  %160 = vmatpush1.bf16.msra.mxu0 %v42
  %161 = vmatprep.subr.bf16.mxu0 0
  %162 = vmatpush2.bf16.msra.mxu0 0
  %163 = vmatprep.subr.bf16.mxu0 0
  %164 = vmatpush2.bf16.msra.mxu0 0
  %165 = vmatprep.subr.bf16.mxu0 0
  %166 = vmatpush2.bf16.msra.mxu0 0
  %167 = vmatprep.subr.bf16.mxu0 0
  %168 = vmatpush2.bf16.msra.mxu0 0
  %169 = vmatprep.subr.bf16.mxu0 0
  %170 = vmatpush2.bf16.msra.mxu0 0
  %171 = vmatprep.subr.bf16.mxu0 0
  %172 = vmatpush2.bf16.msra.mxu0 0
  %173 = vmatprep.subr.bf16.mxu0 0
  %174 = vmatpush2.bf16.msra.mxu0 0
  %175 = vmatprep.subr.bf16.mxu0 0
  %176 = vmatpush2.bf16.msra.mxu0 0
  %177 = vmatprep.mubr.bf16.mxu0 0
  %178 = vmatmul.mubr.bf16.gmra.mxu0 %v143
  %v179 = vpop.f32.mrf.mxu0
  %v180 = vadd.f32 0.0, %v179
  %v181 = vpop.f32.mrf.mxu0
  %v182 = vpop.f32.mrf.mxu0
  %v183 = vpop.f32.mrf.mxu0
  %184 = vdwg.mxu0
  %v185 = vadd.f32 %v137, %v180
  %v186 = vmul.f32 %v185, 1.442695
  %v187 = vpow.pop %v186
  %v188 = vtanh.pop %v185
  %v189 = vxor.u32 %v185, 2147483648
  %v190 = vmul.f32 %v189, 1.442695
  %v191 = vpow.pop %v190
  %v192 = vadd.f32 %v191, 1.0
  %v193 = vrcp.pop %v192
  %v194 = vmul.f32 1.0, %v193
  %v195 = vmul.f32 %v187, %v135
  %197 = vrot.lane.b32.xlu0 %v188, 64
  %v198 = vpop.permute.xlu0 %197
  %v200 = vmul.f32 %v187, %v198
  %202 = vrot.lane.b32.xlu0 %v200, 32
  %v203 = vpop.permute.xlu0 %202
  %v205 = vadd.f32 %v195, %v203
  %v206 = vtanh.pop %v205
  %208 = vrot.lane.b32.xlu0 %v206, 64
  %v209 = vpop.permute.xlu0 %208
  %v211 = vmul.f32 %v194, %v209
  %213 = vrot.lane.b32.xlu0 %v211, 32
  %v214 = vpop.permute.xlu0 %213
  %s216 = scalar_lea.vmem %s2, 8
  %217 = vst.msk [vmem:[%s216] sm:$0xff] %vm46, %v214
  %p218 = scmp.gt.s32.totalorder %s25, 1
  %s219 = scalar_select %p218, 1, 0
  %v220 = vstv %s219
  %vm221 = vcmp.eq.s32.totalorder %v220, 1
  %v222 = vsel %vm221, %v211, %v134
  %v223 = vsel %vm221, %v205, %v135
  %s224 = scalar_lea.vmem %s0, 16
  %v225 = vld [vmem:[%s224] sm:$0xff]
  %v226 = vpack.c.bf16 %v222, %v222
  %228 = vrot.lane.b32.xlu0 %v226, 32
  %v229 = vpop.permute.xlu0 %228
  %v231 = vsel %vm46, %v229, 0
  %233 = vmatprep.subr.bf16.mxu0 0
  %234 = vmatpush1.bf16.msra.mxu0 0
  %235 = vmatprep.subr.bf16.mxu0 0
  %236 = vmatpush1.bf16.msra.mxu0 0
  %237 = vmatprep.subr.bf16.mxu0 0
  %238 = vmatpush1.bf16.msra.mxu0 0
  %239 = vmatprep.subr.bf16.mxu0 0
  %240 = vmatpush1.bf16.msra.mxu0 0
  %241 = vmatprep.subr.bf16.mxu0 0
  %242 = vmatpush1.bf16.msra.mxu0 0
  %243 = vmatprep.subr.bf16.mxu0 0
  %244 = vmatpush1.bf16.msra.mxu0 0
  %245 = vmatprep.subr.bf16.mxu0 0
  %246 = vmatpush1.bf16.msra.mxu0 %v43
  %247 = vmatprep.subr.bf16.mxu0 0
  %248 = vmatpush1.bf16.msra.mxu0 %v42
  %249 = vmatprep.subr.bf16.mxu0 0
  %250 = vmatpush2.bf16.msra.mxu0 0
  %251 = vmatprep.subr.bf16.mxu0 0
  %252 = vmatpush2.bf16.msra.mxu0 0
  %253 = vmatprep.subr.bf16.mxu0 0
  %254 = vmatpush2.bf16.msra.mxu0 0
  %255 = vmatprep.subr.bf16.mxu0 0
  %256 = vmatpush2.bf16.msra.mxu0 0
  %257 = vmatprep.subr.bf16.mxu0 0
  %258 = vmatpush2.bf16.msra.mxu0 0
  %259 = vmatprep.subr.bf16.mxu0 0
  %260 = vmatpush2.bf16.msra.mxu0 0
  %261 = vmatprep.subr.bf16.mxu0 0
  %262 = vmatpush2.bf16.msra.mxu0 0
  %263 = vmatprep.subr.bf16.mxu0 0
  %264 = vmatpush2.bf16.msra.mxu0 0
  %265 = vmatprep.mubr.bf16.mxu0 0
  %266 = vmatmul.mubr.bf16.gmra.mxu0 %v231
  %v267 = vpop.f32.mrf.mxu0
  %v268 = vadd.f32 0.0, %v267
  %v269 = vpop.f32.mrf.mxu0
  %v270 = vpop.f32.mrf.mxu0
  %v271 = vpop.f32.mrf.mxu0
  %272 = vdwg.mxu0
  %v273 = vadd.f32 %v225, %v268
  %v274 = vmul.f32 %v273, 1.442695
  %v275 = vpow.pop %v274
  %v276 = vtanh.pop %v273
  %v277 = vxor.u32 %v273, 2147483648
  %v278 = vmul.f32 %v277, 1.442695
  %v279 = vpow.pop %v278
  %v280 = vadd.f32 %v279, 1.0
  %v281 = vrcp.pop %v280
  %v282 = vmul.f32 1.0, %v281
  %v283 = vmul.f32 %v275, %v223
  %285 = vrot.lane.b32.xlu0 %v276, 64
  %v286 = vpop.permute.xlu0 %285
  %v288 = vmul.f32 %v275, %v286
  %290 = vrot.lane.b32.xlu0 %v288, 32
  %v291 = vpop.permute.xlu0 %290
  %v293 = vadd.f32 %v283, %v291
  %v294 = vtanh.pop %v293
  %296 = vrot.lane.b32.xlu0 %v294, 64
  %v297 = vpop.permute.xlu0 %296
  %v299 = vmul.f32 %v282, %v297
  %301 = vrot.lane.b32.xlu0 %v299, 32
  %v302 = vpop.permute.xlu0 %301
  %s304 = scalar_lea.vmem %s2, 16
  %305 = vst.msk [vmem:[%s304] sm:$0xff] %vm46, %v302
  %p306 = scmp.gt.s32.totalorder %s25, 2
  %s307 = scalar_select %p306, 1, 0
  %v308 = vstv %s307
  %vm309 = vcmp.eq.s32.totalorder %v308, 1
  %v310 = vsel %vm309, %v299, %v222
  %v311 = vsel %vm309, %v293, %v223
  %s312 = scalar_lea.vmem %s0, 24
  %v313 = vld [vmem:[%s312] sm:$0xff]
  %v314 = vpack.c.bf16 %v310, %v310
  %316 = vrot.lane.b32.xlu0 %v314, 32
  %v317 = vpop.permute.xlu0 %316
  %v319 = vsel %vm46, %v317, 0
  %321 = vmatprep.subr.bf16.mxu0 0
  %322 = vmatpush1.bf16.msra.mxu0 0
  %323 = vmatprep.subr.bf16.mxu0 0
  %324 = vmatpush1.bf16.msra.mxu0 0
  %325 = vmatprep.subr.bf16.mxu0 0
  %326 = vmatpush1.bf16.msra.mxu0 0
  %327 = vmatprep.subr.bf16.mxu0 0
  %328 = vmatpush1.bf16.msra.mxu0 0
  %329 = vmatprep.subr.bf16.mxu0 0
  %330 = vmatpush1.bf16.msra.mxu0 0
  %331 = vmatprep.subr.bf16.mxu0 0
  %332 = vmatpush1.bf16.msra.mxu0 0
  %333 = vmatprep.subr.bf16.mxu0 0
  %334 = vmatpush1.bf16.msra.mxu0 %v43
  %335 = vmatprep.subr.bf16.mxu0 0
  %336 = vmatpush1.bf16.msra.mxu0 %v42
  %337 = vmatprep.subr.bf16.mxu0 0
  %338 = vmatpush2.bf16.msra.mxu0 0
  %339 = vmatprep.subr.bf16.mxu0 0
  %340 = vmatpush2.bf16.msra.mxu0 0
  %341 = vmatprep.subr.bf16.mxu0 0
  %342 = vmatpush2.bf16.msra.mxu0 0
  %343 = vmatprep.subr.bf16.mxu0 0
  %344 = vmatpush2.bf16.msra.mxu0 0
  %345 = vmatprep.subr.bf16.mxu0 0
  %346 = vmatpush2.bf16.msra.mxu0 0
  %347 = vmatprep.subr.bf16.mxu0 0
  %348 = vmatpush2.bf16.msra.mxu0 0
  %349 = vmatprep.subr.bf16.mxu0 0
  %350 = vmatpush2.bf16.msra.mxu0 0
  %351 = vmatprep.subr.bf16.mxu0 0
  %352 = vmatpush2.bf16.msra.mxu0 0
  %353 = vmatprep.mubr.bf16.mxu0 0
  %354 = vmatmul.mubr.bf16.gmra.mxu0 %v319
  %v355 = vpop.f32.mrf.mxu0
  %v356 = vadd.f32 0.0, %v355
  %v357 = vpop.f32.mrf.mxu0
  %v358 = vpop.f32.mrf.mxu0
  %v359 = vpop.f32.mrf.mxu0
  %360 = vdwg.mxu0
  %v361 = vadd.f32 %v313, %v356
  %v362 = vmul.f32 %v361, 1.442695
  %v363 = vpow.pop %v362
  %v364 = vtanh.pop %v361
  %v365 = vxor.u32 %v361, 2147483648
  %v366 = vmul.f32 %v365, 1.442695
  %v367 = vpow.pop %v366
  %v368 = vadd.f32 %v367, 1.0
  %v369 = vrcp.pop %v368
  %v370 = vmul.f32 1.0, %v369
  %v371 = vmul.f32 %v363, %v311
  %373 = vrot.lane.b32.xlu0 %v364, 64
  %v374 = vpop.permute.xlu0 %373
  %v376 = vmul.f32 %v363, %v374
  %378 = vrot.lane.b32.xlu0 %v376, 32
  %v379 = vpop.permute.xlu0 %378
  %v381 = vadd.f32 %v371, %v379
  %v382 = vtanh.pop %v381
  %384 = vrot.lane.b32.xlu0 %v382, 64
  %v385 = vpop.permute.xlu0 %384
  %v387 = vmul.f32 %v370, %v385
  %389 = vrot.lane.b32.xlu0 %v387, 32
  %v390 = vpop.permute.xlu0 %389
  %s392 = scalar_lea.vmem %s2, 24
  %393 = vst.msk [vmem:[%s392] sm:$0xff] %vm46, %v390
  %p394 = scmp.gt.s32.totalorder %s25, 3
  %s395 = scalar_select %p394, 1, 0
  %v396 = vstv %s395
  %vm397 = vcmp.eq.s32.totalorder %v396, 1
  %v398 = vsel %vm397, %v387, %v310
  %v399 = vsel %vm397, %v381, %v311
  %s400 = scalar_lea.vmem %s0, 32
  %v401 = vld [vmem:[%s400] sm:$0xff]
  %v402 = vpack.c.bf16 %v398, %v398
  %404 = vrot.lane.b32.xlu0 %v402, 32
  %v405 = vpop.permute.xlu0 %404
  %v407 = vsel %vm46, %v405, 0
  %409 = vmatprep.subr.bf16.mxu0 0
  %410 = vmatpush1.bf16.msra.mxu0 0
  %411 = vmatprep.subr.bf16.mxu0 0
  %412 = vmatpush1.bf16.msra.mxu0 0
  %413 = vmatprep.subr.bf16.mxu0 0
  %414 = vmatpush1.bf16.msra.mxu0 0
  %415 = vmatprep.subr.bf16.mxu0 0
  %416 = vmatpush1.bf16.msra.mxu0 0
  %417 = vmatprep.subr.bf16.mxu0 0
  %418 = vmatpush1.bf16.msra.mxu0 0
  %419 = vmatprep.subr.bf16.mxu0 0
  %420 = vmatpush1.bf16.msra.mxu0 0
  %421 = vmatprep.subr.bf16.mxu0 0
  %422 = vmatpush1.bf16.msra.mxu0 %v43
  %423 = vmatprep.subr.bf16.mxu0 0
  %424 = vmatpush1.bf16.msra.mxu0 %v42
  %425 = vmatprep.subr.bf16.mxu0 0
  %426 = vmatpush2.bf16.msra.mxu0 0
  %427 = vmatprep.subr.bf16.mxu0 0
  %428 = vmatpush2.bf16.msra.mxu0 0
  %429 = vmatprep.subr.bf16.mxu0 0
  %430 = vmatpush2.bf16.msra.mxu0 0
  %431 = vmatprep.subr.bf16.mxu0 0
  %432 = vmatpush2.bf16.msra.mxu0 0
  %433 = vmatprep.subr.bf16.mxu0 0
  %434 = vmatpush2.bf16.msra.mxu0 0
  %435 = vmatprep.subr.bf16.mxu0 0
  %436 = vmatpush2.bf16.msra.mxu0 0
  %437 = vmatprep.subr.bf16.mxu0 0
  %438 = vmatpush2.bf16.msra.mxu0 0
  %439 = vmatprep.subr.bf16.mxu0 0
  %440 = vmatpush2.bf16.msra.mxu0 0
  %441 = vmatprep.mubr.bf16.mxu0 0
  %442 = vmatmul.mubr.bf16.gmra.mxu0 %v407
  %v443 = vpop.f32.mrf.mxu0
  %v444 = vadd.f32 0.0, %v443
  %v445 = vpop.f32.mrf.mxu0
  %v446 = vpop.f32.mrf.mxu0
  %v447 = vpop.f32.mrf.mxu0
  %448 = vdwg.mxu0
  %v449 = vadd.f32 %v401, %v444
  %v450 = vmul.f32 %v449, 1.442695
  %v451 = vpow.pop %v450
  %v452 = vtanh.pop %v449
  %v453 = vxor.u32 %v449, 2147483648
  %v454 = vmul.f32 %v453, 1.442695
  %v455 = vpow.pop %v454
  %v456 = vadd.f32 %v455, 1.0
  %v457 = vrcp.pop %v456
  %v458 = vmul.f32 1.0, %v457
  %v459 = vmul.f32 %v451, %v399
  %461 = vrot.lane.b32.xlu0 %v452, 64
  %v462 = vpop.permute.xlu0 %461
  %v464 = vmul.f32 %v451, %v462
  %466 = vrot.lane.b32.xlu0 %v464, 32
  %v467 = vpop.permute.xlu0 %466
  %v469 = vadd.f32 %v459, %v467
  %v470 = vtanh.pop %v469
  %472 = vrot.lane.b32.xlu0 %v470, 64
  %v473 = vpop.permute.xlu0 %472
  %v475 = vmul.f32 %v458, %v473
  %477 = vrot.lane.b32.xlu0 %v475, 32
  %v478 = vpop.permute.xlu0 %477
  %s480 = scalar_lea.vmem %s2, 32
  %481 = vst.msk [vmem:[%s480] sm:$0xff] %vm46, %v478
  %p482 = scmp.gt.s32.totalorder %s25, 4
  %s483 = scalar_select %p482, 1, 0
  %v484 = vstv %s483
  %vm485 = vcmp.eq.s32.totalorder %v484, 1
  %v486 = vsel %vm485, %v475, %v398
  %v487 = vsel %vm485, %v469, %v399
  %s488 = scalar_lea.vmem %s0, 40
  %v489 = vld [vmem:[%s488] sm:$0xff]
  %v490 = vpack.c.bf16 %v486, %v486
  %492 = vrot.lane.b32.xlu0 %v490, 32
  %v493 = vpop.permute.xlu0 %492
  %v495 = vsel %vm46, %v493, 0
  %497 = vmatprep.subr.bf16.mxu0 0
  %498 = vmatpush1.bf16.msra.mxu0 0
  %499 = vmatprep.subr.bf16.mxu0 0
  %500 = vmatpush1.bf16.msra.mxu0 0
  %501 = vmatprep.subr.bf16.mxu0 0
  %502 = vmatpush1.bf16.msra.mxu0 0
  %503 = vmatprep.subr.bf16.mxu0 0
  %504 = vmatpush1.bf16.msra.mxu0 0
  %505 = vmatprep.subr.bf16.mxu0 0
  %506 = vmatpush1.bf16.msra.mxu0 0
  %507 = vmatprep.subr.bf16.mxu0 0
  %508 = vmatpush1.bf16.msra.mxu0 0
  %509 = vmatprep.subr.bf16.mxu0 0
  %510 = vmatpush1.bf16.msra.mxu0 %v43
  %511 = vmatprep.subr.bf16.mxu0 0
  %512 = vmatpush1.bf16.msra.mxu0 %v42
  %513 = vmatprep.subr.bf16.mxu0 0
  %514 = vmatpush2.bf16.msra.mxu0 0
  %515 = vmatprep.subr.bf16.mxu0 0
  %516 = vmatpush2.bf16.msra.mxu0 0
  %517 = vmatprep.subr.bf16.mxu0 0
  %518 = vmatpush2.bf16.msra.mxu0 0
  %519 = vmatprep.subr.bf16.mxu0 0
  %520 = vmatpush2.bf16.msra.mxu0 0
  %521 = vmatprep.subr.bf16.mxu0 0
  %522 = vmatpush2.bf16.msra.mxu0 0
  %523 = vmatprep.subr.bf16.mxu0 0
  %524 = vmatpush2.bf16.msra.mxu0 0
  %525 = vmatprep.subr.bf16.mxu0 0
  %526 = vmatpush2.bf16.msra.mxu0 0
  %527 = vmatprep.subr.bf16.mxu0 0
  %528 = vmatpush2.bf16.msra.mxu0 0
  %529 = vmatprep.mubr.bf16.mxu0 0
  %530 = vmatmul.mubr.bf16.gmra.mxu0 %v495
  %v531 = vpop.f32.mrf.mxu0
  %v532 = vadd.f32 0.0, %v531
  %v533 = vpop.f32.mrf.mxu0
  %v534 = vpop.f32.mrf.mxu0
  %v535 = vpop.f32.mrf.mxu0
  %536 = vdwg.mxu0
  %v537 = vadd.f32 %v489, %v532
  %v538 = vmul.f32 %v537, 1.442695
  %v539 = vpow.pop %v538
  %v540 = vtanh.pop %v537
  %v541 = vxor.u32 %v537, 2147483648
  %v542 = vmul.f32 %v541, 1.442695
  %v543 = vpow.pop %v542
  %v544 = vadd.f32 %v543, 1.0
  %v545 = vrcp.pop %v544
  %v546 = vmul.f32 1.0, %v545
  %v547 = vmul.f32 %v539, %v487
  %549 = vrot.lane.b32.xlu0 %v540, 64
  %v550 = vpop.permute.xlu0 %549
  %v552 = vmul.f32 %v539, %v550
  %554 = vrot.lane.b32.xlu0 %v552, 32
  %v555 = vpop.permute.xlu0 %554
  %v557 = vadd.f32 %v547, %v555
  %v558 = vtanh.pop %v557
  %560 = vrot.lane.b32.xlu0 %v558, 64
  %v561 = vpop.permute.xlu0 %560
  %v563 = vmul.f32 %v546, %v561
  %565 = vrot.lane.b32.xlu0 %v563, 32
  %v566 = vpop.permute.xlu0 %565
  %s568 = scalar_lea.vmem %s2, 40
  %569 = vst.msk [vmem:[%s568] sm:$0xff] %vm46, %v566
  %p570 = scmp.gt.s32.totalorder %s25, 5
  %s571 = scalar_select %p570, 1, 0
  %v572 = vstv %s571
  %vm573 = vcmp.eq.s32.totalorder %v572, 1
  %v574 = vsel %vm573, %v563, %v486
  %v575 = vsel %vm573, %v557, %v487
  %s576 = scalar_lea.vmem %s0, 48
  %v577 = vld [vmem:[%s576] sm:$0xff]
  %v578 = vpack.c.bf16 %v574, %v574
  %580 = vrot.lane.b32.xlu0 %v578, 32
  %v581 = vpop.permute.xlu0 %580
  %v583 = vsel %vm46, %v581, 0
  %585 = vmatprep.subr.bf16.mxu0 0
  %586 = vmatpush1.bf16.msra.mxu0 0
  %587 = vmatprep.subr.bf16.mxu0 0
  %588 = vmatpush1.bf16.msra.mxu0 0
  %589 = vmatprep.subr.bf16.mxu0 0
  %590 = vmatpush1.bf16.msra.mxu0 0
  %591 = vmatprep.subr.bf16.mxu0 0
  %592 = vmatpush1.bf16.msra.mxu0 0
  %593 = vmatprep.subr.bf16.mxu0 0
  %594 = vmatpush1.bf16.msra.mxu0 0
  %595 = vmatprep.subr.bf16.mxu0 0
  %596 = vmatpush1.bf16.msra.mxu0 0
  %597 = vmatprep.subr.bf16.mxu0 0
  %598 = vmatpush1.bf16.msra.mxu0 %v43
  %599 = vmatprep.subr.bf16.mxu0 0
  %600 = vmatpush1.bf16.msra.mxu0 %v42
  %601 = vmatprep.subr.bf16.mxu0 0
  %602 = vmatpush2.bf16.msra.mxu0 0
  %603 = vmatprep.subr.bf16.mxu0 0
  %604 = vmatpush2.bf16.msra.mxu0 0
  %605 = vmatprep.subr.bf16.mxu0 0
  %606 = vmatpush2.bf16.msra.mxu0 0
  %607 = vmatprep.subr.bf16.mxu0 0
  %608 = vmatpush2.bf16.msra.mxu0 0
  %609 = vmatprep.subr.bf16.mxu0 0
  %610 = vmatpush2.bf16.msra.mxu0 0
  %611 = vmatprep.subr.bf16.mxu0 0
  %612 = vmatpush2.bf16.msra.mxu0 0
  %613 = vmatprep.subr.bf16.mxu0 0
  %614 = vmatpush2.bf16.msra.mxu0 0
  %615 = vmatprep.subr.bf16.mxu0 0
  %616 = vmatpush2.bf16.msra.mxu0 0
  %617 = vmatprep.mubr.bf16.mxu0 0
  %618 = vmatmul.mubr.bf16.gmra.mxu0 %v583
  %v619 = vpop.f32.mrf.mxu0
  %v620 = vadd.f32 0.0, %v619
  %v621 = vpop.f32.mrf.mxu0
  %v622 = vpop.f32.mrf.mxu0
  %v623 = vpop.f32.mrf.mxu0
  %624 = vdwg.mxu0
  %v625 = vadd.f32 %v577, %v620
  %v626 = vmul.f32 %v625, 1.442695
  %v627 = vpow.pop %v626
  %v628 = vtanh.pop %v625
  %v629 = vxor.u32 %v625, 2147483648
  %v630 = vmul.f32 %v629, 1.442695
  %v631 = vpow.pop %v630
  %v632 = vadd.f32 %v631, 1.0
  %v633 = vrcp.pop %v632
  %v634 = vmul.f32 1.0, %v633
  %v635 = vmul.f32 %v627, %v575
  %637 = vrot.lane.b32.xlu0 %v628, 64
  %v638 = vpop.permute.xlu0 %637
  %v640 = vmul.f32 %v627, %v638
  %642 = vrot.lane.b32.xlu0 %v640, 32
  %v643 = vpop.permute.xlu0 %642
  %v645 = vadd.f32 %v635, %v643
  %v646 = vtanh.pop %v645
  %648 = vrot.lane.b32.xlu0 %v646, 64
  %v649 = vpop.permute.xlu0 %648
  %v651 = vmul.f32 %v634, %v649
  %653 = vrot.lane.b32.xlu0 %v651, 32
  %v654 = vpop.permute.xlu0 %653
  %s656 = scalar_lea.vmem %s2, 48
  %657 = vst.msk [vmem:[%s656] sm:$0xff] %vm46, %v654
  %p658 = scmp.gt.s32.totalorder %s25, 6
  %s659 = scalar_select %p658, 1, 0
  %v660 = vstv %s659
  %vm661 = vcmp.eq.s32.totalorder %v660, 1
  %v662 = vsel %vm661, %v651, %v574
  %v663 = vsel %vm661, %v645, %v575
  %s664 = scalar_lea.vmem %s0, 56
  %v665 = vld [vmem:[%s664] sm:$0xff]
  %v666 = vpack.c.bf16 %v662, %v662
  %668 = vrot.lane.b32.xlu0 %v666, 32
  %v669 = vpop.permute.xlu0 %668
  %v671 = vsel %vm46, %v669, 0
  %673 = vmatprep.subr.bf16.mxu0 0
  %674 = vmatpush1.bf16.msra.mxu0 0
  %675 = vmatprep.subr.bf16.mxu0 0
  %676 = vmatpush1.bf16.msra.mxu0 0
  %677 = vmatprep.subr.bf16.mxu0 0
  %678 = vmatpush1.bf16.msra.mxu0 0
  %679 = vmatprep.subr.bf16.mxu0 0
  %680 = vmatpush1.bf16.msra.mxu0 0
  %681 = vmatprep.subr.bf16.mxu0 0
  %682 = vmatpush1.bf16.msra.mxu0 0
  %683 = vmatprep.subr.bf16.mxu0 0
  %684 = vmatpush1.bf16.msra.mxu0 0
  %685 = vmatprep.subr.bf16.mxu0 0
  %686 = vmatpush1.bf16.msra.mxu0 %v43
  %687 = vmatprep.subr.bf16.mxu0 0
  %688 = vmatpush1.bf16.msra.mxu0 %v42
  %689 = vmatprep.subr.bf16.mxu0 0
  %690 = vmatpush2.bf16.msra.mxu0 0
  %691 = vmatprep.subr.bf16.mxu0 0
  %692 = vmatpush2.bf16.msra.mxu0 0
  %693 = vmatprep.subr.bf16.mxu0 0
  %694 = vmatpush2.bf16.msra.mxu0 0
  %695 = vmatprep.subr.bf16.mxu0 0
  %696 = vmatpush2.bf16.msra.mxu0 0
  %697 = vmatprep.subr.bf16.mxu0 0
  %698 = vmatpush2.bf16.msra.mxu0 0
  %699 = vmatprep.subr.bf16.mxu0 0
  %700 = vmatpush2.bf16.msra.mxu0 0
  %701 = vmatprep.subr.bf16.mxu0 0
  %702 = vmatpush2.bf16.msra.mxu0 0
  %703 = vmatprep.subr.bf16.mxu0 0
  %704 = vmatpush2.bf16.msra.mxu0 0
  %705 = vmatprep.mubr.bf16.mxu0 0
  %706 = vmatmul.mubr.bf16.gmra.mxu0 %v671
  %v707 = vpop.f32.mrf.mxu0
  %v708 = vadd.f32 0.0, %v707
  %v709 = vpop.f32.mrf.mxu0
  %v710 = vpop.f32.mrf.mxu0
  %v711 = vpop.f32.mrf.mxu0
  %712 = vdwg.mxu0
  %v713 = vadd.f32 %v665, %v708
  %v714 = vmul.f32 %v713, 1.442695
  %v715 = vpow.pop %v714
  %v716 = vtanh.pop %v713
  %v717 = vxor.u32 %v713, 2147483648
  %v718 = vmul.f32 %v717, 1.442695
  %v719 = vpow.pop %v718
  %v720 = vadd.f32 %v719, 1.0
  %v721 = vrcp.pop %v720
  %v722 = vmul.f32 1.0, %v721
  %v723 = vmul.f32 %v715, %v663
  %725 = vrot.lane.b32.xlu0 %v716, 64
  %v726 = vpop.permute.xlu0 %725
  %v728 = vmul.f32 %v715, %v726
  %730 = vrot.lane.b32.xlu0 %v728, 32
  %v731 = vpop.permute.xlu0 %730
  %v733 = vadd.f32 %v723, %v731
  %v734 = vtanh.pop %v733
  %736 = vrot.lane.b32.xlu0 %v734, 64
  %v737 = vpop.permute.xlu0 %736
  %v739 = vmul.f32 %v722, %v737
  %741 = vrot.lane.b32.xlu0 %v739, 32
  %v742 = vpop.permute.xlu0 %741
  %s744 = scalar_lea.vmem %s2, 56
  %745 = vst.msk [vmem:[%s744] sm:$0xff] %vm46, %v742
  %p746 = scmp.gt.s32.totalorder %s25, 7
  %s747 = scalar_select %p746, 1, 0
  %v748 = vstv %s747
  %vm749 = vcmp.eq.s32.totalorder %v748, 1
  %v750 = vsel %vm749, %v739, %v662
  %v751 = vsel %vm749, %v733, %v663
  %753 = vrot.lane.b32.xlu0 %v750, 32
  %v754 = vpop.permute.xlu0 %753
  %756 = vst.msk [vmem:[%s3] sm:$0xff] %vm46, %v754
  %758 = vrot.lane.b32.xlu0 %v751, 96
  %v759 = vpop.permute.xlu0 %758
  %761 = vst.msk [vmem:[%s4] sm:$0xff] %vm46, %v759
  // Predicated region
  $region14: #{cnn_xlstm_forward.11} parent=0 // pred_check
    _
  $region15: #{cnn_xlstm_forward.11} parent=0 // pred_check_branch
    %763 = sbr.rel (0) target = $region17
  $region16: #{cnn_xlstm_forward.11} parent=0 // pred_region
    _
  $region17: #{cnn_xlstm_forward.11} parent=0 // pred_fallthru
    _
  // Predicated region
  $region18: #{cnn_xlstm_forward.11} parent=0 // pred_check
    _
  $region19: #{cnn_xlstm_forward.11} parent=0 // pred_check_branch
    %765 = sbr.rel (0) target = $region21
  $region20: #{cnn_xlstm_forward.11} parent=0 // pred_region
    _
  $region21: #{cnn_xlstm_forward.11} parent=0 // pred_fallthru
    _
  // Predicated region
  $region22: #{cnn_xlstm_forward.11} parent=0 // pred_check
    _
  $region23: #{cnn_xlstm_forward.11} parent=0 // pred_check_branch
    %767 = sbr.rel (0) target = $region25
  $region24: #{cnn_xlstm_forward.11} parent=0 // pred_region
    _
  $region25: #{cnn_xlstm_forward.11} parent=0 // pred_fallthru
    _
  // Predicated region
  $region26: #{cnn_xlstm_forward.11} parent=0 // pred_check
    _
  $region27: #{cnn_xlstm_forward.11} parent=0 // pred_check_branch
    %769 = sbr.rel (0) target = $region29
  $region28: #{cnn_xlstm_forward.11} parent=0 // pred_region
    _
  $region29: #{cnn_xlstm_forward.11} parent=0 // pred_fallthru
    _
  // Predicated region
  $region30: #{cnn_xlstm_forward.11} parent=0 // pred_check
    _
  $region31: #{cnn_xlstm_forward.11} parent=0 // pred_check_branch
    %771 = sbr.rel (0) target = $region33
  $region32: #{cnn_xlstm_forward.11} parent=0 // pred_region
    _
  $region33: #{cnn_xlstm_forward.11} parent=0 // pred_fallthru
    _
  // Predicated region
  $region34: #{cnn_xlstm_forward.11} parent=0 // pred_check
    _
  $region35: #{cnn_xlstm_forward.11} parent=0 // pred_check_branch
    %773 = sbr.rel (0) target = $region37
  $region36: #{cnn_xlstm_forward.11} parent=0 // pred_region
    _
  $region37: #{cnn_xlstm_forward.11} parent=0 // pred_fallthru
    _

// kernel: cnn_xlstm_forward.13
$region0: #{cnn_xlstm_forward.13}
  #allocation0 [shape = 'u32[]', space=smem, size = 0x4, offset = 0x4, fixed_abs, tag = 'smem constant byte address 0x4 - core index']
  #allocation1 [shape = 'u32[144,128]{1,0:T(1,128)}', space=vmem, size = 0x12000, scoped, tag = 'internal scratch']
  %s0 = inlined_call_operand.vmem [shape: f32[8,8,128], index: 0, kind: input, shape index: {}]
  %s1 = inlined_call_operand.vmem [shape: bf16[32,128], index: 1, kind: input, shape index: {}]
  %s2 = inlined_call_operand.vmem [shape: f32[8,8,32], index: 2, kind: input, shape index: {}]
  %s3 = inlined_call_operand.vmem [shape: bf16[32,32], index: 3, kind: input, shape index: {}]
  %s4 = inlined_call_operand.vmem [shape: f32[1,32], index: 4, kind: input, shape index: {}]
  %s5 = inlined_call_operand.vmem [shape: f32[1,32], index: 5, kind: input, shape index: {}]
  %s6 = inlined_call_operand.vmem [shape: f32[1,32], index: 6, kind: input, shape index: {}]
  %s7 = inlined_call_operand.vmem [shape: f32[8,8,32], index: 7, kind: output, shape index: {0}]
  %s8 = inlined_call_operand.vmem [shape: f32[8,32], index: 8, kind: output, shape index: {1}]
  %s9 = inlined_call_operand.vmem [shape: f32[8,32], index: 9, kind: output, shape index: {2}]
  %10 = xla_tuple %s7, %s8, %s9
  %s11 = sld [smem:[#allocation0]]
  $region58: #{cnn_xlstm_forward.13} parent=0
    _
  %s13 = ssub.s32 1, %s11
  %s14 = scalar_select 0, %s13, %s11
  // Predicated region
  $region2: #{cnn_xlstm_forward.13} parent=0 // pred_check
    _
  $region3: #{cnn_xlstm_forward.13} parent=0 // pred_check_branch
    %16 = sbr.rel (0) target = $region5
  $region4: #{cnn_xlstm_forward.13} parent=0 // pred_region
    _
  $region5: #{cnn_xlstm_forward.13} parent=0 // pred_fallthru
    _
  // Predicated region
  $region6: #{cnn_xlstm_forward.13} parent=0 // pred_check
    _
  $region7: #{cnn_xlstm_forward.13} parent=0 // pred_check_branch
    %18 = sbr.rel (0) target = $region9
  $region8: #{cnn_xlstm_forward.13} parent=0 // pred_region
    _
  $region9: #{cnn_xlstm_forward.13} parent=0 // pred_fallthru
    _
  // Predicated region
  $region10: #{cnn_xlstm_forward.13} parent=0 // pred_check
    _
  $region11: #{cnn_xlstm_forward.13} parent=0 // pred_check_branch
    %20 = sbr.rel (0) target = $region13
  $region12: #{cnn_xlstm_forward.13} parent=0 // pred_region
    _
  $region13: #{cnn_xlstm_forward.13} parent=0 // pred_fallthru
    _
  // Predicated region
  $region14: #{cnn_xlstm_forward.13} parent=0 // pred_check
    _
  $region15: #{cnn_xlstm_forward.13} parent=0 // pred_check_branch
    %22 = sbr.rel (0) target = $region17
  $region16: #{cnn_xlstm_forward.13} parent=0 // pred_region
    _
  $region17: #{cnn_xlstm_forward.13} parent=0 // pred_fallthru
    _
  // Predicated region
  $region18: #{cnn_xlstm_forward.13} parent=0 // pred_check
    _
  $region19: #{cnn_xlstm_forward.13} parent=0 // pred_check_branch
    %24 = sbr.rel (0) target = $region21
  $region20: #{cnn_xlstm_forward.13} parent=0 // pred_region
    _
  $region21: #{cnn_xlstm_forward.13} parent=0 // pred_fallthru
    _
  // Predicated region
  $region22: #{cnn_xlstm_forward.13} parent=0 // pred_check
    _
  $region23: #{cnn_xlstm_forward.13} parent=0 // pred_check_branch
    %26 = sbr.rel (0) target = $region25
  $region24: #{cnn_xlstm_forward.13} parent=0 // pred_region
    _
  $region25: #{cnn_xlstm_forward.13} parent=0 // pred_fallthru
    _
  // Predicated region
  $region26: #{cnn_xlstm_forward.13} parent=0 // pred_check
    _
  $region27: #{cnn_xlstm_forward.13} parent=0 // pred_check_branch
    %28 = sbr.rel (0) target = $region29
  $region28: #{cnn_xlstm_forward.13} parent=0 // pred_region
    _
  $region29: #{cnn_xlstm_forward.13} parent=0 // pred_fallthru
    _
  %p30 = scmp.eq.s32.totalorder 0, 0
  // Predicated region
  $region30: #{cnn_xlstm_forward.13} parent=0 // pred_check
    %p31 = pneg %p30
  $region31: #{cnn_xlstm_forward.13} parent=0 // pred_check_branch
    %33 = sbr.rel (%p31) target = $region33
  $region32: #{cnn_xlstm_forward.13} parent=0 // pred_region
    %vm34 = vcmask 261120
    %35 = vst.msk [vmem:[%s8] sm:$0xff] %vm34, 0.0
    %36 = vst.msk [vmem:[%s9] sm:$0xff] %vm34, 0.0
  $region33: #{cnn_xlstm_forward.13} parent=0 // pred_fallthru
    _
  %s37 = smul.u32 0, 8
  %s38 = ssub.s32 8, %s37
  %p39 = scmp.lt.s32.totalorder %s38, 8
  %s40 = scalar_select %p39, %s38, 8
  %v41 = vld [vmem:[%s1] sm:$0xf]
  %v42 = vld [vmem:[%s1 + $0x4] sm:$0xf]
  %v43 = vld [vmem:[%s1 + $0x8] sm:$0xf]
  %v44 = vld [vmem:[%s1 + $0xc] sm:$0xf]
  %v45 = vld [vmem:[%s3] sm:$0xf]
  %v46 = vld [vmem:[%s3 + $0x4] sm:$0xf]
  %v47 = vld [vmem:[%s3 + $0x8] sm:$0xf]
  %v48 = vld [vmem:[%s3 + $0xc] sm:$0xf]
  %v49 = vld [vmem:[%s4] sm:$0x1]
  %v50 = vld [vmem:[%s5] sm:$0x1]
  %v51 = vld [vmem:[%s6] sm:$0x1]
  %v52 = vld [vmem:[%s8] sm:$0xff]
  %v53 = vld [vmem:[%s9] sm:$0xff]
  %v54 = vld [vmem:[%s0] sm:$0xff]
  %v55 = vpack.c.bf16 %v52, %v52
  %v60 = vunpack.c.l.b16 %v41
  %v61 = vunpack.c.l.b16 %v42
  %v62 = vunpack.c.l.b16 %v43
  %v63 = vunpack.c.l.b16 %v44
  %v64 = vpack.c.b16 %v61, %v60
  %v65 = vpack.c.b16 %v63, %v62
  %vm68 = vcmask 261120
  %v70 = vsel %vm68, %v55, 0
  %72 = vmatprep.subr.bf16.mxu0 0
  %73 = vmatpush1.bf16.msra.mxu0 0
  %74 = vmatprep.subr.bf16.mxu0 0
  %75 = vmatpush1.bf16.msra.mxu0 0
  %76 = vmatprep.subr.bf16.mxu0 0
  %77 = vmatpush1.bf16.msra.mxu0 0
  %78 = vmatprep.subr.bf16.mxu0 0
  %79 = vmatpush1.bf16.msra.mxu0 0
  %80 = vmatprep.subr.bf16.mxu0 0
  %81 = vmatpush1.bf16.msra.mxu0 0
  %82 = vmatprep.subr.bf16.mxu0 0
  %83 = vmatpush1.bf16.msra.mxu0 0
  %84 = vmatprep.subr.bf16.mxu0 0
  %85 = vmatpush1.bf16.msra.mxu0 %v65
  %86 = vmatprep.subr.bf16.mxu0 0
  %87 = vmatpush1.bf16.msra.mxu0 %v64
  %88 = vmatprep.subr.bf16.mxu0 0
  %89 = vmatpush2.bf16.msra.mxu0 0
  %90 = vmatprep.subr.bf16.mxu0 0
  %91 = vmatpush2.bf16.msra.mxu0 0
  %92 = vmatprep.subr.bf16.mxu0 0
  %93 = vmatpush2.bf16.msra.mxu0 0
  %94 = vmatprep.subr.bf16.mxu0 0
  %95 = vmatpush2.bf16.msra.mxu0 0
  %96 = vmatprep.subr.bf16.mxu0 0
  %97 = vmatpush2.bf16.msra.mxu0 0
  %98 = vmatprep.subr.bf16.mxu0 0
  %99 = vmatpush2.bf16.msra.mxu0 0
  %100 = vmatprep.subr.bf16.mxu0 0
  %101 = vmatpush2.bf16.msra.mxu0 0
  %102 = vmatprep.subr.bf16.mxu0 0
  %103 = vmatpush2.bf16.msra.mxu0 0
  %104 = vmatprep.mubr.bf16.mxu0 0
  %105 = vmatmul.mubr.bf16.gmra.mxu0 %v70
  %v106 = vpop.f32.mrf.mxu0
  %v107 = vadd.f32 0.0, %v106
  %v108 = vpop.f32.mrf.mxu0
  %v109 = vpop.f32.mrf.mxu0
  %v110 = vpop.f32.mrf.mxu0
  %111 = vdwg.mxu0
  %v112 = vadd.f32 %v54, %v107
  %v113 = vmul.f32 %v112, 1.442695
  %v114 = vpow.pop %v113
  %v115 = vtanh.pop %v112
  %v116 = vxor.u32 %v112, 2147483648
  %v117 = vmul.f32 %v116, 1.442695
  %v118 = vpow.pop %v117
  %v119 = vadd.f32 %v118, 1.0
  %v120 = vrcp.pop %v119
  %v121 = vmul.f32 1.0, %v120
  %123 = vrot.lane.b32.xlu0 %v53, 32
  %v124 = vpop.permute.xlu0 %123
  %v126 = vmul.f32 %v114, %v124
  %128 = vrot.lane.b32.xlu0 %v115, 64
  %v129 = vpop.permute.xlu0 %128
  %v131 = vmul.f32 %v114, %v129
  %133 = vrot.lane.b32.xlu0 %v131, 32
  %v134 = vpop.permute.xlu0 %133
  %v136 = vadd.f32 %v126, %v134
  %v137 = vtanh.pop %v136
  %139 = vrot.lane.b32.xlu0 %v137, 64
  %v140 = vpop.permute.xlu0 %139
  %v142 = vmul.f32 %v121, %v140
  %v143 = vld [vmem:[%s2] sm:$0xff]
  %v144 = vpack.c.bf16 %v142, %v142
  %v146 = vlaneseq
  %v147 = vshrl.u32 %v146, 7
  %v148 = vsub.s32 0, %v147
  %v149 = vrot.slane %v49, %v148
  %152 = vrot.lane.b32.xlu0 %v144, 32
  %v153 = vpop.permute.xlu0 %152
  %v158 = vunpack.c.l.b16 %v45
  %v159 = vunpack.c.l.b16 %v46
  %v160 = vunpack.c.l.b16 %v47
  %v161 = vunpack.c.l.b16 %v48
  %v162 = vpack.c.b16 %v159, %v158
  %v163 = vpack.c.b16 %v161, %v160
  %v167 = vsel %vm68, %v153, 0
  %169 = vmatprep.subr.bf16.mxu0 0
  %170 = vmatpush1.bf16.msra.mxu0 0
  %171 = vmatprep.subr.bf16.mxu0 0
  %172 = vmatpush1.bf16.msra.mxu0 0
  %173 = vmatprep.subr.bf16.mxu0 0
  %174 = vmatpush1.bf16.msra.mxu0 0
  %175 = vmatprep.subr.bf16.mxu0 0
  %176 = vmatpush1.bf16.msra.mxu0 0
  %177 = vmatprep.subr.bf16.mxu0 0
  %178 = vmatpush1.bf16.msra.mxu0 0
  %179 = vmatprep.subr.bf16.mxu0 0
  %180 = vmatpush1.bf16.msra.mxu0 0
  %181 = vmatprep.subr.bf16.mxu0 0
  %182 = vmatpush1.bf16.msra.mxu0 %v163
  %183 = vmatprep.subr.bf16.mxu0 0
  %184 = vmatpush1.bf16.msra.mxu0 %v162
  %185 = vmatprep.subr.bf16.mxu0 0
  %186 = vmatpush2.bf16.msra.mxu0 0
  %187 = vmatprep.subr.bf16.mxu0 0
  %188 = vmatpush2.bf16.msra.mxu0 0
  %189 = vmatprep.subr.bf16.mxu0 0
  %190 = vmatpush2.bf16.msra.mxu0 0
  %191 = vmatprep.subr.bf16.mxu0 0
  %192 = vmatpush2.bf16.msra.mxu0 0
  %193 = vmatprep.subr.bf16.mxu0 0
  %194 = vmatpush2.bf16.msra.mxu0 0
  %195 = vmatprep.subr.bf16.mxu0 0
  %196 = vmatpush2.bf16.msra.mxu0 0
  %197 = vmatprep.subr.bf16.mxu0 0
  %198 = vmatpush2.bf16.msra.mxu0 0
  %199 = vmatprep.subr.bf16.mxu0 0
  %200 = vmatpush2.bf16.msra.mxu0 0
  %201 = vmatprep.mubr.bf16.mxu0 0
  %202 = vmatmul.mubr.bf16.gmra.mxu0 %v167
  %v203 = vpop.f32.mrf.mxu0
  %v204 = vadd.f32 %v149, %v203
  %v205 = vpop.f32.mrf.mxu0
  %v206 = vpop.f32.mrf.mxu0
  %v207 = vpop.f32.mrf.mxu0
  %208 = vdwg.mxu0
  %v209 = vmul.f32 %v204, 0.5
  %v210 = vmul.f32 %v204, 0.044715
  %v211 = vmul.f32 %v210, %v204
  %v212 = vmul.f32 %v211, %v204
  %v213 = vadd.f32 %v204, %v212
  %v214 = vmul.f32 %v213, 0.7978846
  %v215 = vtanh.pop %v214
  %v216 = vadd.f32 %v215, 1.0
  %v217 = vmul.f32 %v209, %v216
  %v218 = vadd.f32 %v217, %v143
  %v219 = vsel %vm68, %v218, 0.0
  %220 = vadd.xlane.f32.xlu0 %v219
  %v221 = vpop.xlane.xlu0 %220
  %v222 = vrcp.pop 32.0
  %v223 = vmul.f32 %v221, %v222
  %v224 = vsub.f32 %v218, %v223
  %v225 = vmul.f32 %v224, %v224
  %v226 = vsel %vm68, %v225, 0.0
  %227 = vadd.xlane.f32.xlu0 %v226
  %v228 = vpop.xlane.xlu0 %227
  %v229 = vmul.f32 %v228, %v222
  %v230 = vadd.f32 %v229, 1e-05
  %v231 = vrsqrt.pop %v230
  %v232 = vmul.f32 %v224, %v231
  %v234 = vlaneseq
  %v235 = vshrl.u32 %v234, 7
  %v236 = vsub.s32 0, %v235
  %v237 = vrot.slane %v50, %v236
  %v239 = vmul.f32 %v232, %v237
  %v241 = vlaneseq
  %v242 = vshrl.u32 %v241, 7
  %v243 = vsub.s32 0, %v242
  %v244 = vrot.slane %v51, %v243
  %v246 = vadd.f32 %v239, %v244
  %247 = vst.msk [vmem:[%s7] sm:$0xff] %vm68, %v246
  %p248 = scmp.gt.s32.totalorder %s40, 0
  %s249 = scalar_select %p248, 1, 0
  %v250 = vstv %s249
  %vm251 = vcmp.eq.s32.totalorder %v250, 1
  %253 = vrot.lane.b32.xlu0 %v52, 96
  %v254 = vpop.permute.xlu0 %253
  %v256 = vsel %vm251, %v142, %v254
  %v257 = vsel %vm251, %v136, %v124
  %s258 = scalar_lea.vmem %s0, 8
  %v259 = vld [vmem:[%s258] sm:$0xff]
  %v260 = vpack.c.bf16 %v256, %v256
  %262 = vrot.lane.b32.xlu0 %v260, 32
  %v263 = vpop.permute.xlu0 %262
  %v265 = vsel %vm68, %v263, 0
  %267 = vmatprep.subr.bf16.mxu0 0
  %268 = vmatpush1.bf16.msra.mxu0 0
  %269 = vmatprep.subr.bf16.mxu0 0
  %270 = vmatpush1.bf16.msra.mxu0 0
  %271 = vmatprep.subr.bf16.mxu0 0
  %272 = vmatpush1.bf16.msra.mxu0 0
  %273 = vmatprep.subr.bf16.mxu0 0
  %274 = vmatpush1.bf16.msra.mxu0 0
  %275 = vmatprep.subr.bf16.mxu0 0
  %276 = vmatpush1.bf16.msra.mxu0 0
  %277 = vmatprep.subr.bf16.mxu0 0
  %278 = vmatpush1.bf16.msra.mxu0 0
  %279 = vmatprep.subr.bf16.mxu0 0
  %280 = vmatpush1.bf16.msra.mxu0 %v65
  %281 = vmatprep.subr.bf16.mxu0 0
  %282 = vmatpush1.bf16.msra.mxu0 %v64
  %283 = vmatprep.subr.bf16.mxu0 0
  %284 = vmatpush2.bf16.msra.mxu0 0
  %285 = vmatprep.subr.bf16.mxu0 0
  %286 = vmatpush2.bf16.msra.mxu0 0
  %287 = vmatprep.subr.bf16.mxu0 0
  %288 = vmatpush2.bf16.msra.mxu0 0
  %289 = vmatprep.subr.bf16.mxu0 0
  %290 = vmatpush2.bf16.msra.mxu0 0
  %291 = vmatprep.subr.bf16.mxu0 0
  %292 = vmatpush2.bf16.msra.mxu0 0
  %293 = vmatprep.subr.bf16.mxu0 0
  %294 = vmatpush2.bf16.msra.mxu0 0
  %295 = vmatprep.subr.bf16.mxu0 0
  %296 = vmatpush2.bf16.msra.mxu0 0
  %297 = vmatprep.subr.bf16.mxu0 0
  %298 = vmatpush2.bf16.msra.mxu0 0
  %299 = vmatprep.mubr.bf16.mxu0 0
  %300 = vmatmul.mubr.bf16.gmra.mxu0 %v265
  %v301 = vpop.f32.mrf.mxu0
  %v302 = vadd.f32 0.0, %v301
  %v303 = vpop.f32.mrf.mxu0
  %v304 = vpop.f32.mrf.mxu0
  %v305 = vpop.f32.mrf.mxu0
  %306 = vdwg.mxu0
  %v307 = vadd.f32 %v259, %v302
  %v308 = vmul.f32 %v307, 1.442695
  %v309 = vpow.pop %v308
  %v310 = vtanh.pop %v307
  %v311 = vxor.u32 %v307, 2147483648
  %v312 = vmul.f32 %v311, 1.442695
  %v313 = vpow.pop %v312
  %v314 = vadd.f32 %v313, 1.0
  %v315 = vrcp.pop %v314
  %v316 = vmul.f32 1.0, %v315
  %v317 = vmul.f32 %v309, %v257
  %319 = vrot.lane.b32.xlu0 %v310, 64
  %v320 = vpop.permute.xlu0 %319
  %v322 = vmul.f32 %v309, %v320
  %324 = vrot.lane.b32.xlu0 %v322, 32
  %v325 = vpop.permute.xlu0 %324
  %v327 = vadd.f32 %v317, %v325
  %v328 = vtanh.pop %v327
  %330 = vrot.lane.b32.xlu0 %v328, 64
  %v331 = vpop.permute.xlu0 %330
  %v333 = vmul.f32 %v316, %v331
  %s334 = scalar_lea.vmem %s2, 8
  %v335 = vld [vmem:[%s334] sm:$0xff]
  %v336 = vpack.c.bf16 %v333, %v333
  %338 = vrot.lane.b32.xlu0 %v336, 32
  %v339 = vpop.permute.xlu0 %338
  %v341 = vsel %vm68, %v339, 0
  %343 = vmatprep.subr.bf16.mxu0 0
  %344 = vmatpush1.bf16.msra.mxu0 0
  %345 = vmatprep.subr.bf16.mxu0 0
  %346 = vmatpush1.bf16.msra.mxu0 0
  %347 = vmatprep.subr.bf16.mxu0 0
  %348 = vmatpush1.bf16.msra.mxu0 0
  %349 = vmatprep.subr.bf16.mxu0 0
  %350 = vmatpush1.bf16.msra.mxu0 0
  %351 = vmatprep.subr.bf16.mxu0 0
  %352 = vmatpush1.bf16.msra.mxu0 0
  %353 = vmatprep.subr.bf16.mxu0 0
  %354 = vmatpush1.bf16.msra.mxu0 0
  %355 = vmatprep.subr.bf16.mxu0 0
  %356 = vmatpush1.bf16.msra.mxu0 %v163
  %357 = vmatprep.subr.bf16.mxu0 0
  %358 = vmatpush1.bf16.msra.mxu0 %v162
  %359 = vmatprep.subr.bf16.mxu0 0
  %360 = vmatpush2.bf16.msra.mxu0 0
  %361 = vmatprep.subr.bf16.mxu0 0
  %362 = vmatpush2.bf16.msra.mxu0 0
  %363 = vmatprep.subr.bf16.mxu0 0
  %364 = vmatpush2.bf16.msra.mxu0 0
  %365 = vmatprep.subr.bf16.mxu0 0
  %366 = vmatpush2.bf16.msra.mxu0 0
  %367 = vmatprep.subr.bf16.mxu0 0
  %368 = vmatpush2.bf16.msra.mxu0 0
  %369 = vmatprep.subr.bf16.mxu0 0
  %370 = vmatpush2.bf16.msra.mxu0 0
  %371 = vmatprep.subr.bf16.mxu0 0
  %372 = vmatpush2.bf16.msra.mxu0 0
  %373 = vmatprep.subr.bf16.mxu0 0
  %374 = vmatpush2.bf16.msra.mxu0 0
  %375 = vmatprep.mubr.bf16.mxu0 0
  %376 = vmatmul.mubr.bf16.gmra.mxu0 %v341
  %v377 = vpop.f32.mrf.mxu0
  %v378 = vadd.f32 %v149, %v377
  %v379 = vpop.f32.mrf.mxu0
  %v380 = vpop.f32.mrf.mxu0
  %v381 = vpop.f32.mrf.mxu0
  %382 = vdwg.mxu0
  %v383 = vmul.f32 %v378, 0.5
  %v384 = vmul.f32 %v378, 0.044715
  %v385 = vmul.f32 %v384, %v378
  %v386 = vmul.f32 %v385, %v378
  %v387 = vadd.f32 %v378, %v386
  %v388 = vmul.f32 %v387, 0.7978846
  %v389 = vtanh.pop %v388
  %v390 = vadd.f32 %v389, 1.0
  %v391 = vmul.f32 %v383, %v390
  %v392 = vadd.f32 %v391, %v335
  %v393 = vsel %vm68, %v392, 0.0
  %394 = vadd.xlane.f32.xlu0 %v393
  %v395 = vpop.xlane.xlu0 %394
  %v396 = vmul.f32 %v395, %v222
  %v397 = vsub.f32 %v392, %v396
  %v398 = vmul.f32 %v397, %v397
  %v399 = vsel %vm68, %v398, 0.0
  %400 = vadd.xlane.f32.xlu0 %v399
  %v401 = vpop.xlane.xlu0 %400
  %v402 = vmul.f32 %v401, %v222
  %v403 = vadd.f32 %v402, 1e-05
  %v404 = vrsqrt.pop %v403
  %v405 = vmul.f32 %v397, %v404
  %v406 = vmul.f32 %v405, %v237
  %v407 = vadd.f32 %v406, %v244
  %s408 = scalar_lea.vmem %s7, 8
  %409 = vst.msk [vmem:[%s408] sm:$0xff] %vm68, %v407
  %p410 = scmp.gt.s32.totalorder %s40, 1
  %s411 = scalar_select %p410, 1, 0
  %v412 = vstv %s411
  %vm413 = vcmp.eq.s32.totalorder %v412, 1
  %v414 = vsel %vm413, %v333, %v256
  %v415 = vsel %vm413, %v327, %v257
  %s416 = scalar_lea.vmem %s0, 16
  %v417 = vld [vmem:[%s416] sm:$0xff]
  %v418 = vpack.c.bf16 %v414, %v414
  %420 = vrot.lane.b32.xlu0 %v418, 32
  %v421 = vpop.permute.xlu0 %420
  %v423 = vsel %vm68, %v421, 0
  %425 = vmatprep.subr.bf16.mxu0 0
  %426 = vmatpush1.bf16.msra.mxu0 0
  %427 = vmatprep.subr.bf16.mxu0 0
  %428 = vmatpush1.bf16.msra.mxu0 0
  %429 = vmatprep.subr.bf16.mxu0 0
  %430 = vmatpush1.bf16.msra.mxu0 0
  %431 = vmatprep.subr.bf16.mxu0 0
  %432 = vmatpush1.bf16.msra.mxu0 0
  %433 = vmatprep.subr.bf16.mxu0 0
  %434 = vmatpush1.bf16.msra.mxu0 0
  %435 = vmatprep.subr.bf16.mxu0 0
  %436 = vmatpush1.bf16.msra.mxu0 0
  %437 = vmatprep.subr.bf16.mxu0 0
  %438 = vmatpush1.bf16.msra.mxu0 %v65
  %439 = vmatprep.subr.bf16.mxu0 0
  %440 = vmatpush1.bf16.msra.mxu0 %v64
  %441 = vmatprep.subr.bf16.mxu0 0
  %442 = vmatpush2.bf16.msra.mxu0 0
  %443 = vmatprep.subr.bf16.mxu0 0
  %444 = vmatpush2.bf16.msra.mxu0 0
  %445 = vmatprep.subr.bf16.mxu0 0
  %446 = vmatpush2.bf16.msra.mxu0 0
  %447 = vmatprep.subr.bf16.mxu0 0
  %448 = vmatpush2.bf16.msra.mxu0 0
  %449 = vmatprep.subr.bf16.mxu0 0
  %450 = vmatpush2.bf16.msra.mxu0 0
  %451 = vmatprep.subr.bf16.mxu0 0
  %452 = vmatpush2.bf16.msra.mxu0 0
  %453 = vmatprep.subr.bf16.mxu0 0
  %454 = vmatpush2.bf16.msra.mxu0 0
  %455 = vmatprep.subr.bf16.mxu0 0
  %456 = vmatpush2.bf16.msra.mxu0 0
  %457 = vmatprep.mubr.bf16.mxu0 0
  %458 = vmatmul.mubr.bf16.gmra.mxu0 %v423
  %v459 = vpop.f32.mrf.mxu0
  %v460 = vadd.f32 0.0, %v459
  %v461 = vpop.f32.mrf.mxu0
  %v462 = vpop.f32.mrf.mxu0
  %v463 = vpop.f32.mrf.mxu0
  %464 = vdwg.mxu0
  %v465 = vadd.f32 %v417, %v460
  %v466 = vmul.f32 %v465, 1.442695
  %v467 = vpow.pop %v466
  %v468 = vtanh.pop %v465
  %v469 = vxor.u32 %v465, 2147483648
  %v470 = vmul.f32 %v469, 1.442695
  %v471 = vpow.pop %v470
  %v472 = vadd.f32 %v471, 1.0
  %v473 = vrcp.pop %v472
  %v474 = vmul.f32 1.0, %v473
  %v475 = vmul.f32 %v467, %v415
  %477 = vrot.lane.b32.xlu0 %v468, 64
  %v478 = vpop.permute.xlu0 %477
  %v480 = vmul.f32 %v467, %v478
  %482 = vrot.lane.b32.xlu0 %v480, 32
  %v483 = vpop.permute.xlu0 %482
  %v485 = vadd.f32 %v475, %v483
  %v486 = vtanh.pop %v485
  %488 = vrot.lane.b32.xlu0 %v486, 64
  %v489 = vpop.permute.xlu0 %488
  %v491 = vmul.f32 %v474, %v489
  %s492 = scalar_lea.vmem %s2, 16
  %v493 = vld [vmem:[%s492] sm:$0xff]
  %v494 = vpack.c.bf16 %v491, %v491
  %496 = vrot.lane.b32.xlu0 %v494, 32
  %v497 = vpop.permute.xlu0 %496
  %v499 = vsel %vm68, %v497, 0
  %501 = vmatprep.subr.bf16.mxu0 0
  %502 = vmatpush1.bf16.msra.mxu0 0
  %503 = vmatprep.subr.bf16.mxu0 0
  %504 = vmatpush1.bf16.msra.mxu0 0
  %505 = vmatprep.subr.bf16.mxu0 0
  %506 = vmatpush1.bf16.msra.mxu0 0
  %507 = vmatprep.subr.bf16.mxu0 0
  %508 = vmatpush1.bf16.msra.mxu0 0
  %509 = vmatprep.subr.bf16.mxu0 0
  %510 = vmatpush1.bf16.msra.mxu0 0
  %511 = vmatprep.subr.bf16.mxu0 0
  %512 = vmatpush1.bf16.msra.mxu0 0
  %513 = vmatprep.subr.bf16.mxu0 0
  %514 = vmatpush1.bf16.msra.mxu0 %v163
  %515 = vmatprep.subr.bf16.mxu0 0
  %516 = vmatpush1.bf16.msra.mxu0 %v162
  %517 = vmatprep.subr.bf16.mxu0 0
  %518 = vmatpush2.bf16.msra.mxu0 0
  %519 = vmatprep.subr.bf16.mxu0 0
  %520 = vmatpush2.bf16.msra.mxu0 0
  %521 = vmatprep.subr.bf16.mxu0 0
  %522 = vmatpush2.bf16.msra.mxu0 0
  %523 = vmatprep.subr.bf16.mxu0 0
  %524 = vmatpush2.bf16.msra.mxu0 0
  %525 = vmatprep.subr.bf16.mxu0 0
  %526 = vmatpush2.bf16.msra.mxu0 0
  %527 = vmatprep.subr.bf16.mxu0 0
  %528 = vmatpush2.bf16.msra.mxu0 0
  %529 = vmatprep.subr.bf16.mxu0 0
  %530 = vmatpush2.bf16.msra.mxu0 0
  %531 = vmatprep.subr.bf16.mxu0 0
  %532 = vmatpush2.bf16.msra.mxu0 0
  %533 = vmatprep.mubr.bf16.mxu0 0
  %534 = vmatmul.mubr.bf16.gmra.mxu0 %v499
  %v535 = vpop.f32.mrf.mxu0
  %v536 = vadd.f32 %v149, %v535
  %v537 = vpop.f32.mrf.mxu0
  %v538 = vpop.f32.mrf.mxu0
  %v539 = vpop.f32.mrf.mxu0
  %540 = vdwg.mxu0
  %v541 = vmul.f32 %v536, 0.5
  %v542 = vmul.f32 %v536, 0.044715
  %v543 = vmul.f32 %v542, %v536
  %v544 = vmul.f32 %v543, %v536
  %v545 = vadd.f32 %v536, %v544
  %v546 = vmul.f32 %v545, 0.7978846
  %v547 = vtanh.pop %v546
  %v548 = vadd.f32 %v547, 1.0
  %v549 = vmul.f32 %v541, %v548
  %v550 = vadd.f32 %v549, %v493
  %v551 = vsel %vm68, %v550, 0.0
  %552 = vadd.xlane.f32.xlu0 %v551
  %v553 = vpop.xlane.xlu0 %552
  %v554 = vmul.f32 %v553, %v222
  %v555 = vsub.f32 %v550, %v554
  %v556 = vmul.f32 %v555, %v555
  %v557 = vsel %vm68, %v556, 0.0
  %558 = vadd.xlane.f32.xlu0 %v557
  %v559 = vpop.xlane.xlu0 %558
  %v560 = vmul.f32 %v559, %v222
  %v561 = vadd.f32 %v560, 1e-05
  %v562 = vrsqrt.pop %v561
  %v563 = vmul.f32 %v555, %v562
  %v564 = vmul.f32 %v563, %v237
  %v565 = vadd.f32 %v564, %v244
  %s566 = scalar_lea.vmem %s7, 16
  %567 = vst.msk [vmem:[%s566] sm:$0xff] %vm68, %v565
  %p568 = scmp.gt.s32.totalorder %s40, 2
  %s569 = scalar_select %p568, 1, 0
  %v570 = vstv %s569
  %vm571 = vcmp.eq.s32.totalorder %v570, 1
  %v572 = vsel %vm571, %v491, %v414
  %v573 = vsel %vm571, %v485, %v415
  %s574 = scalar_lea.vmem %s0, 24
  %v575 = vld [vmem:[%s574] sm:$0xff]
  %v576 = vpack.c.bf16 %v572, %v572
  %578 = vrot.lane.b32.xlu0 %v576, 32
  %v579 = vpop.permute.xlu0 %578
  %v581 = vsel %vm68, %v579, 0
  %583 = vmatprep.subr.bf16.mxu0 0
  %584 = vmatpush1.bf16.msra.mxu0 0
  %585 = vmatprep.subr.bf16.mxu0 0
  %586 = vmatpush1.bf16.msra.mxu0 0
  %587 = vmatprep.subr.bf16.mxu0 0
  %588 = vmatpush1.bf16.msra.mxu0 0
  %589 = vmatprep.subr.bf16.mxu0 0
  %590 = vmatpush1.bf16.msra.mxu0 0
  %591 = vmatprep.subr.bf16.mxu0 0
  %592 = vmatpush1.bf16.msra.mxu0 0
  %593 = vmatprep.subr.bf16.mxu0 0
  %594 = vmatpush1.bf16.msra.mxu0 0
  %595 = vmatprep.subr.bf16.mxu0 0
  %596 = vmatpush1.bf16.msra.mxu0 %v65
  %597 = vmatprep.subr.bf16.mxu0 0
  %598 = vmatpush1.bf16.msra.mxu0 %v64
  %599 = vmatprep.subr.bf16.mxu0 0
  %600 = vmatpush2.bf16.msra.mxu0 0
  %601 = vmatprep.subr.bf16.mxu0 0
  %602 = vmatpush2.bf16.msra.mxu0 0
  %603 = vmatprep.subr.bf16.mxu0 0
  %604 = vmatpush2.bf16.msra.mxu0 0
  %605 = vmatprep.subr.bf16.mxu0 0
  %606 = vmatpush2.bf16.msra.mxu0 0
  %607 = vmatprep.subr.bf16.mxu0 0
  %608 = vmatpush2.bf16.msra.mxu0 0
  %609 = vmatprep.subr.bf16.mxu0 0
  %610 = vmatpush2.bf16.msra.mxu0 0
  %611 = vmatprep.subr.bf16.mxu0 0
  %612 = vmatpush2.bf16.msra.mxu0 0
  %613 = vmatprep.subr.bf16.mxu0 0
  %614 = vmatpush2.bf16.msra.mxu0 0
  %615 = vmatprep.mubr.bf16.mxu0 0
  %616 = vmatmul.mubr.bf16.gmra.mxu0 %v581
  %v617 = vpop.f32.mrf.mxu0
  %v618 = vadd.f32 0.0, %v617
  %v619 = vpop.f32.mrf.mxu0
  %v620 = vpop.f32.mrf.mxu0
  %v621 = vpop.f32.mrf.mxu0
  %622 = vdwg.mxu0
  %v623 = vadd.f32 %v575, %v618
  %v624 = vmul.f32 %v623, 1.442695
  %v625 = vpow.pop %v624
  %v626 = vtanh.pop %v623
  %v627 = vxor.u32 %v623, 2147483648
  %v628 = vmul.f32 %v627, 1.442695
  %v629 = vpow.pop %v628
  %v630 = vadd.f32 %v629, 1.0
  %v631 = vrcp.pop %v630
  %v632 = vmul.f32 1.0, %v631
  %v633 = vmul.f32 %v625, %v573
  %635 = vrot.lane.b32.xlu0 %v626, 64
  %v636 = vpop.permute.xlu0 %635
  %v638 = vmul.f32 %v625, %v636
  %640 = vrot.lane.b32.xlu0 %v638, 32
  %v641 = vpop.permute.xlu0 %640
  %v643 = vadd.f32 %v633, %v641
  %v644 = vtanh.pop %v643
  %646 = vrot.lane.b32.xlu0 %v644, 64
  %v647 = vpop.permute.xlu0 %646
  %v649 = vmul.f32 %v632, %v647
  %s650 = scalar_lea.vmem %s2, 24
  %v651 = vld [vmem:[%s650] sm:$0xff]
  %v652 = vpack.c.bf16 %v649, %v649
  %654 = vrot.lane.b32.xlu0 %v652, 32
  %v655 = vpop.permute.xlu0 %654
  %v657 = vsel %vm68, %v655, 0
  %659 = vmatprep.subr.bf16.mxu0 0
  %660 = vmatpush1.bf16.msra.mxu0 0
  %661 = vmatprep.subr.bf16.mxu0 0
  %662 = vmatpush1.bf16.msra.mxu0 0
  %663 = vmatprep.subr.bf16.mxu0 0
  %664 = vmatpush1.bf16.msra.mxu0 0
  %665 = vmatprep.subr.bf16.mxu0 0
  %666 = vmatpush1.bf16.msra.mxu0 0
  %667 = vmatprep.subr.bf16.mxu0 0
  %668 = vmatpush1.bf16.msra.mxu0 0
  %669 = vmatprep.subr.bf16.mxu0 0
  %670 = vmatpush1.bf16.msra.mxu0 0
  %671 = vmatprep.subr.bf16.mxu0 0
  %672 = vmatpush1.bf16.msra.mxu0 %v163
  %673 = vmatprep.subr.bf16.mxu0 0
  %674 = vmatpush1.bf16.msra.mxu0 %v162
  %675 = vmatprep.subr.bf16.mxu0 0
  %676 = vmatpush2.bf16.msra.mxu0 0
  %677 = vmatprep.subr.bf16.mxu0 0
  %678 = vmatpush2.bf16.msra.mxu0 0
  %679 = vmatprep.subr.bf16.mxu0 0
  %680 = vmatpush2.bf16.msra.mxu0 0
  %681 = vmatprep.subr.bf16.mxu0 0
  %682 = vmatpush2.bf16.msra.mxu0 0
  %683 = vmatprep.subr.bf16.mxu0 0
  %684 = vmatpush2.bf16.msra.mxu0 0
  %685 = vmatprep.subr.bf16.mxu0 0
  %686 = vmatpush2.bf16.msra.mxu0 0
  %687 = vmatprep.subr.bf16.mxu0 0
  %688 = vmatpush2.bf16.msra.mxu0 0
  %689 = vmatprep.subr.bf16.mxu0 0
  %690 = vmatpush2.bf16.msra.mxu0 0
  %691 = vmatprep.mubr.bf16.mxu0 0
  %692 = vmatmul.mubr.bf16.gmra.mxu0 %v657
  %v693 = vpop.f32.mrf.mxu0
  %v694 = vadd.f32 %v149, %v693
  %v695 = vpop.f32.mrf.mxu0
  %v696 = vpop.f32.mrf.mxu0
  %v697 = vpop.f32.mrf.mxu0
  %698 = vdwg.mxu0
  %v699 = vmul.f32 %v694, 0.5
  %v700 = vmul.f32 %v694, 0.044715
  %v701 = vmul.f32 %v700, %v694
  %v702 = vmul.f32 %v701, %v694
  %v703 = vadd.f32 %v694, %v702
  %v704 = vmul.f32 %v703, 0.7978846
  %v705 = vtanh.pop %v704
  %v706 = vadd.f32 %v705, 1.0
  %v707 = vmul.f32 %v699, %v706
  %v708 = vadd.f32 %v707, %v651
  %v709 = vsel %vm68, %v708, 0.0
  %710 = vadd.xlane.f32.xlu0 %v709
  %v711 = vpop.xlane.xlu0 %710
  %v712 = vmul.f32 %v711, %v222
  %v713 = vsub.f32 %v708, %v712
  %v714 = vmul.f32 %v713, %v713
  %v715 = vsel %vm68, %v714, 0.0
  %716 = vadd.xlane.f32.xlu0 %v715
  %v717 = vpop.xlane.xlu0 %716
  %v718 = vmul.f32 %v717, %v222
  %v719 = vadd.f32 %v718, 1e-05
  %v720 = vrsqrt.pop %v719
  %v721 = vmul.f32 %v713, %v720
  %v722 = vmul.f32 %v721, %v237
  %v723 = vadd.f32 %v722, %v244
  %s724 = scalar_lea.vmem %s7, 24
  %725 = vst.msk [vmem:[%s724] sm:$0xff] %vm68, %v723
  %p726 = scmp.gt.s32.totalorder %s40, 3
  %s727 = scalar_select %p726, 1, 0
  %v728 = vstv %s727
  %vm729 = vcmp.eq.s32.totalorder %v728, 1
  %v730 = vsel %vm729, %v649, %v572
  %v731 = vsel %vm729, %v643, %v573
  %s732 = scalar_lea.vmem %s0, 32
  %v733 = vld [vmem:[%s732] sm:$0xff]
  %v734 = vpack.c.bf16 %v730, %v730
  %736 = vrot.lane.b32.xlu0 %v734, 32
  %v737 = vpop.permute.xlu0 %736
  %v739 = vsel %vm68, %v737, 0
  %741 = vmatprep.subr.bf16.mxu0 0
  %742 = vmatpush1.bf16.msra.mxu0 0
  %743 = vmatprep.subr.bf16.mxu0 0
  %744 = vmatpush1.bf16.msra.mxu0 0
  %745 = vmatprep.subr.bf16.mxu0 0
  %746 = vmatpush1.bf16.msra.mxu0 0
  %747 = vmatprep.subr.bf16.mxu0 0
  %748 = vmatpush1.bf16.msra.mxu0 0
  %749 = vmatprep.subr.bf16.mxu0 0
  %750 = vmatpush1.bf16.msra.mxu0 0
  %751 = vmatprep.subr.bf16.mxu0 0
  %752 = vmatpush1.bf16.msra.mxu0 0
  %753 = vmatprep.subr.bf16.mxu0 0
  %754 = vmatpush1.bf16.msra.mxu0 %v65
  %755 = vmatprep.subr.bf16.mxu0 0
  %756 = vmatpush1.bf16.msra.mxu0 %v64
  %757 = vmatprep.subr.bf16.mxu0 0
  %758 = vmatpush2.bf16.msra.mxu0 0
  %759 = vmatprep.subr.bf16.mxu0 0
  %760 = vmatpush2.bf16.msra.mxu0 0
  %761 = vmatprep.subr.bf16.mxu0 0
  %762 = vmatpush2.bf16.msra.mxu0 0
  %763 = vmatprep.subr.bf16.mxu0 0
  %764 = vmatpush2.bf16.msra.mxu0 0
  %765 = vmatprep.subr.bf16.mxu0 0
  %766 = vmatpush2.bf16.msra.mxu0 0
  %767 = vmatprep.subr.bf16.mxu0 0
  %768 = vmatpush2.bf16.msra.mxu0 0
  %769 = vmatprep.subr.bf16.mxu0 0
  %770 = vmatpush2.bf16.msra.mxu0 0
  %771 = vmatprep.subr.bf16.mxu0 0
  %772 = vmatpush2.bf16.msra.mxu0 0
  %773 = vmatprep.mubr.bf16.mxu0 0
  %774 = vmatmul.mubr.bf16.gmra.mxu0 %v739
  %v775 = vpop.f32.mrf.mxu0
  %v776 = vadd.f32 0.0, %v775
  %v777 = vpop.f32.mrf.mxu0
  %v778 = vpop.f32.mrf.mxu0
  %v779 = vpop.f32.mrf.mxu0
  %780 = vdwg.mxu0
  %v781 = vadd.f32 %v733, %v776
  %v782 = vmul.f32 %v781, 1.442695
  %v783 = vpow.pop %v782
  %v784 = vtanh.pop %v781
  %v785 = vxor.u32 %v781, 2147483648
  %v786 = vmul.f32 %v785, 1.442695
  %v787 = vpow.pop %v786
  %v788 = vadd.f32 %v787, 1.0
  %v789 = vrcp.pop %v788
  %v790 = vmul.f32 1.0, %v789
  %v791 = vmul.f32 %v783, %v731
  %793 = vrot.lane.b32.xlu0 %v784, 64
  %v794 = vpop.permute.xlu0 %793
  %v796 = vmul.f32 %v783, %v794
  %798 = vrot.lane.b32.xlu0 %v796, 32
  %v799 = vpop.permute.xlu0 %798
  %v801 = vadd.f32 %v791, %v799
  %v802 = vtanh.pop %v801
  %804 = vrot.lane.b32.xlu0 %v802, 64
  %v805 = vpop.permute.xlu0 %804
  %v807 = vmul.f32 %v790, %v805
  %s808 = scalar_lea.vmem %s2, 32
  %v809 = vld [vmem:[%s808] sm:$0xff]
  %v810 = vpack.c.bf16 %v807, %v807
  %812 = vrot.lane.b32.xlu0 %v810, 32
  %v813 = vpop.permute.xlu0 %812
  %v815 = vsel %vm68, %v813, 0
  %817 = vmatprep.subr.bf16.mxu0 0
  %818 = vmatpush1.bf16.msra.mxu0 0
  %819 = vmatprep.subr.bf16.mxu0 0
  %820 = vmatpush1.bf16.msra.mxu0 0
  %821 = vmatprep.subr.bf16.mxu0 0
  %822 = vmatpush1.bf16.msra.mxu0 0
  %823 = vmatprep.subr.bf16.mxu0 0
  %824 = vmatpush1.bf16.msra.mxu0 0
  %825 = vmatprep.subr.bf16.mxu0 0
  %826 = vmatpush1.bf16.msra.mxu0 0
  %827 = vmatprep.subr.bf16.mxu0 0
  %828 = vmatpush1.bf16.msra.mxu0 0
  %829 = vmatprep.subr.bf16.mxu0 0
  %830 = vmatpush1.bf16.msra.mxu0 %v163
  %831 = vmatprep.subr.bf16.mxu0 0
  %832 = vmatpush1.bf16.msra.mxu0 %v162
  %833 = vmatprep.subr.bf16.mxu0 0
  %834 = vmatpush2.bf16.msra.mxu0 0
  %835 = vmatprep.subr.bf16.mxu0 0
  %836 = vmatpush2.bf16.msra.mxu0 0
  %837 = vmatprep.subr.bf16.mxu0 0
  %838 = vmatpush2.bf16.msra.mxu0 0
  %839 = vmatprep.subr.bf16.mxu0 0
  %840 = vmatpush2.bf16.msra.mxu0 0
  %841 = vmatprep.subr.bf16.mxu0 0
  %842 = vmatpush2.bf16.msra.mxu0 0
  %843 = vmatprep.subr.bf16.mxu0 0
  %844 = vmatpush2.bf16.msra.mxu0 0
  %845 = vmatprep.subr.bf16.mxu0 0
  %846 = vmatpush2.bf16.msra.mxu0 0
  %847 = vmatprep.subr.bf16.mxu0 0
  %848 = vmatpush2.bf16.msra.mxu0 0
  %849 = vmatprep.mubr.bf16.mxu0 0
  %850 = vmatmul.mubr.bf16.gmra.mxu0 %v815
  %v851 = vpop.f32.mrf.mxu0
  %v852 = vadd.f32 %v149, %v851
  %v853 = vpop.f32.mrf.mxu0
  %v854 = vpop.f32.mrf.mxu0
  %v855 = vpop.f32.mrf.mxu0
  %856 = vdwg.mxu0
  %v857 = vmul.f32 %v852, 0.5
  %v858 = vmul.f32 %v852, 0.044715
  %v859 = vmul.f32 %v858, %v852
  %v860 = vmul.f32 %v859, %v852
  %v861 = vadd.f32 %v852, %v860
  %v862 = vmul.f32 %v861, 0.7978846
  %v863 = vtanh.pop %v862
  %v864 = vadd.f32 %v863, 1.0
  %v865 = vmul.f32 %v857, %v864
  %v866 = vadd.f32 %v865, %v809
  %v867 = vsel %vm68, %v866, 0.0
  %868 = vadd.xlane.f32.xlu0 %v867
  %v869 = vpop.xlane.xlu0 %868
  %v870 = vmul.f32 %v869, %v222
  %v871 = vsub.f32 %v866, %v870
  %v872 = vmul.f32 %v871, %v871
  %v873 = vsel %vm68, %v872, 0.0
  %874 = vadd.xlane.f32.xlu0 %v873
  %v875 = vpop.xlane.xlu0 %874
  %v876 = vmul.f32 %v875, %v222
  %v877 = vadd.f32 %v876, 1e-05
  %v878 = vrsqrt.pop %v877
  %v879 = vmul.f32 %v871, %v878
  %v880 = vmul.f32 %v879, %v237
  %v881 = vadd.f32 %v880, %v244
  %s882 = scalar_lea.vmem %s7, 32
  %883 = vst.msk [vmem:[%s882] sm:$0xff] %vm68, %v881
  %p884 = scmp.gt.s32.totalorder %s40, 4
  %s885 = scalar_select %p884, 1, 0
  %v886 = vstv %s885
  %vm887 = vcmp.eq.s32.totalorder %v886, 1
  %v888 = vsel %vm887, %v807, %v730
  %v889 = vsel %vm887, %v801, %v731
  %s890 = scalar_lea.vmem %s0, 40
  %v891 = vld [vmem:[%s890] sm:$0xff]
  %v892 = vpack.c.bf16 %v888, %v888
  %894 = vrot.lane.b32.xlu0 %v892, 32
  %v895 = vpop.permute.xlu0 %894
  %v897 = vsel %vm68, %v895, 0
  %899 = vmatprep.subr.bf16.mxu0 0
  %900 = vmatpush1.bf16.msra.mxu0 0
  %901 = vmatprep.subr.bf16.mxu0 0
  %902 = vmatpush1.bf16.msra.mxu0 0
  %903 = vmatprep.subr.bf16.mxu0 0
  %904 = vmatpush1.bf16.msra.mxu0 0
  %905 = vmatprep.subr.bf16.mxu0 0
  %906 = vmatpush1.bf16.msra.mxu0 0
  %907 = vmatprep.subr.bf16.mxu0 0
  %908 = vmatpush1.bf16.msra.mxu0 0
  %909 = vmatprep.subr.bf16.mxu0 0
  %910 = vmatpush1.bf16.msra.mxu0 0
  %911 = vmatprep.subr.bf16.mxu0 0
  %912 = vmatpush1.bf16.msra.mxu0 %v65
  %913 = vmatprep.subr.bf16.mxu0 0
  %914 = vmatpush1.bf16.msra.mxu0 %v64
  %915 = vmatprep.subr.bf16.mxu0 0
  %916 = vmatpush2.bf16.msra.mxu0 0
  %917 = vmatprep.subr.bf16.mxu0 0
  %918 = vmatpush2.bf16.msra.mxu0 0
  %919 = vmatprep.subr.bf16.mxu0 0
  %920 = vmatpush2.bf16.msra.mxu0 0
  %921 = vmatprep.subr.bf16.mxu0 0
  %922 = vmatpush2.bf16.msra.mxu0 0
  %923 = vmatprep.subr.bf16.mxu0 0
  %924 = vmatpush2.bf16.msra.mxu0 0
  %925 = vmatprep.subr.bf16.mxu0 0
  %926 = vmatpush2.bf16.msra.mxu0 0
  %927 = vmatprep.subr.bf16.mxu0 0
  %928 = vmatpush2.bf16.msra.mxu0 0
  %929 = vmatprep.subr.bf16.mxu0 0
  %930 = vmatpush2.bf16.msra.mxu0 0
  %931 = vmatprep.mubr.bf16.mxu0 0
  %932 = vmatmul.mubr.bf16.gmra.mxu0 %v897
  %v933 = vpop.f32.mrf.mxu0
  %v934 = vadd.f32 0.0, %v933
  %v935 = vpop.f32.mrf.mxu0
  %v936 = vpop.f32.mrf.mxu0
  %v937 = vpop.f32.mrf.mxu0
  %938 = vdwg.mxu0
  %v939 = vadd.f32 %v891, %v934
  %v940 = vmul.f32 %v939, 1.442695
  %v941 = vpow.pop %v940
  %v942 = vtanh.pop %v939
  %v943 = vxor.u32 %v939, 2147483648
  %v944 = vmul.f32 %v943, 1.442695
  %v945 = vpow.pop %v944
  %v946 = vadd.f32 %v945, 1.0
  %v947 = vrcp.pop %v946
  %v948 = vmul.f32 1.0, %v947
  %v949 = vmul.f32 %v941, %v889
  %951 = vrot.lane.b32.xlu0 %v942, 64
  %v952 = vpop.permute.xlu0 %951
  %v954 = vmul.f32 %v941, %v952
  %956 = vrot.lane.b32.xlu0 %v954, 32
  %v957 = vpop.permute.xlu0 %956
  %v959 = vadd.f32 %v949, %v957
  %v960 = vtanh.pop %v959
  %962 = vrot.lane.b32.xlu0 %v960, 64
  %v963 = vpop.permute.xlu0 %962
  %v965 = vmul.f32 %v948, %v963
  %s966 = scalar_lea.vmem %s2, 40
  %v967 = vld [vmem:[%s966] sm:$0xff]
  %v968 = vpack.c.bf16 %v965, %v965
  %970 = vrot.lane.b32.xlu0 %v968, 32
  %v971 = vpop.permute.xlu0 %970
  %v973 = vsel %vm68, %v971, 0
  %975 = vmatprep.subr.bf16.mxu0 0
  %976 = vmatpush1.bf16.msra.mxu0 0
  %977 = vmatprep.subr.bf16.mxu0 0
  %978 = vmatpush1.bf16.msra.mxu0 0
  %979 = vmatprep.subr.bf16.mxu0 0
  %980 = vmatpush1.bf16.msra.mxu0 0
  %981 = vmatprep.subr.bf16.mxu0 0
  %982 = vmatpush1.bf16.msra.mxu0 0
  %983 = vmatprep.subr.bf16.mxu0 0
  %984 = vmatpush1.bf16.msra.mxu0 0
  %985 = vmatprep.subr.bf16.mxu0 0
  %986 = vmatpush1.bf16.msra.mxu0 0
  %987 = vmatprep.subr.bf16.mxu0 0
  %988 = vmatpush1.bf16.msra.mxu0 %v163
  %989 = vmatprep.subr.bf16.mxu0 0
  %990 = vmatpush1.bf16.msra.mxu0 %v162
  %991 = vmatprep.subr.bf16.mxu0 0
  %992 = vmatpush2.bf16.msra.mxu0 0
  %993 = vmatprep.subr.bf16.mxu0 0
  %994 = vmatpush2.bf16.msra.mxu0 0
  %995 = vmatprep.subr.bf16.mxu0 0
  %996 = vmatpush2.bf16.msra.mxu0 0
  %997 = vmatprep.subr.bf16.mxu0 0
  %998 = vmatpush2.bf16.msra.mxu0 0
  %999 = vmatprep.subr.bf16.mxu0 0
  %1000 = vmatpush2.bf16.msra.mxu0 0
  %1001 = vmatprep.subr.bf16.mxu0 0
  %1002 = vmatpush2.bf16.msra.mxu0 0
  %1003 = vmatprep.subr.bf16.mxu0 0
  %1004 = vmatpush2.bf16.msra.mxu0 0
  %1005 = vmatprep.subr.bf16.mxu0 0
  %1006 = vmatpush2.bf16.msra.mxu0 0
  %1007 = vmatprep.mubr.bf16.mxu0 0
  %1008 = vmatmul.mubr.bf16.gmra.mxu0 %v973
  %v1009 = vpop.f32.mrf.mxu0
  %v1010 = vadd.f32 %v149, %v1009
  %v1011 = vpop.f32.mrf.mxu0
  %v1012 = vpop.f32.mrf.mxu0
  %v1013 = vpop.f32.mrf.mxu0
  %1014 = vdwg.mxu0
  %v1015 = vmul.f32 %v1010, 0.5
  %v1016 = vmul.f32 %v1010, 0.044715
  %v1017 = vmul.f32 %v1016, %v1010
  %v1018 = vmul.f32 %v1017, %v1010
  %v1019 = vadd.f32 %v1010, %v1018
  %v1020 = vmul.f32 %v1019, 0.7978846
  %v1021 = vtanh.pop %v1020
  %v1022 = vadd.f32 %v1021, 1.0
  %v1023 = vmul.f32 %v1015, %v1022
  %v1024 = vadd.f32 %v1023, %v967
  %v1025 = vsel %vm68, %v1024, 0.0
  %1026 = vadd.xlane.f32.xlu0 %v1025
  %v1027 = vpop.xlane.xlu0 %1026
  %v1028 = vmul.f32 %v1027, %v222
  %v1029 = vsub.f32 %v1024, %v1028
  %v1030 = vmul.f32 %v1029, %v1029
  %v1031 = vsel %vm68, %v1030, 0.0
  %1032 = vadd.xlane.f32.xlu0 %v1031
  %v1033 = vpop.xlane.xlu0 %1032
  %v1034 = vmul.f32 %v1033, %v222
  %v1035 = vadd.f32 %v1034, 1e-05
  %v1036 = vrsqrt.pop %v1035
  %v1037 = vmul.f32 %v1029, %v1036
  %v1038 = vmul.f32 %v1037, %v237
  %v1039 = vadd.f32 %v1038, %v244
  %s1040 = scalar_lea.vmem %s7, 40
  %1041 = vst.msk [vmem:[%s1040] sm:$0xff] %vm68, %v1039
  %p1042 = scmp.gt.s32.totalorder %s40, 5
  %s1043 = scalar_select %p1042, 1, 0
  %v1044 = vstv %s1043
  %vm1045 = vcmp.eq.s32.totalorder %v1044, 1
  %v1046 = vsel %vm1045, %v965, %v888
  %v1047 = vsel %vm1045, %v959, %v889
  %s1048 = scalar_lea.vmem %s0, 48
  %v1049 = vld [vmem:[%s1048] sm:$0xff]
  %v1050 = vpack.c.bf16 %v1046, %v1046
  %1052 = vrot.lane.b32.xlu0 %v1050, 32
  %v1053 = vpop.permute.xlu0 %1052
  %v1055 = vsel %vm68, %v1053, 0
  %1057 = vmatprep.subr.bf16.mxu0 0
  %1058 = vmatpush1.bf16.msra.mxu0 0
  %1059 = vmatprep.subr.bf16.mxu0 0
  %1060 = vmatpush1.bf16.msra.mxu0 0
  %1061 = vmatprep.subr.bf16.mxu0 0
  %1062 = vmatpush1.bf16.msra.mxu0 0
  %1063 = vmatprep.subr.bf16.mxu0 0
  %1064 = vmatpush1.bf16.msra.mxu0 0
  %1065 = vmatprep.subr.bf16.mxu0 0
  %1066 = vmatpush1.bf16.msra.mxu0 0
  %1067 = vmatprep.subr.bf16.mxu0 0
  %1068 = vmatpush1.bf16.msra.mxu0 0
  %1069 = vmatprep.subr.bf16.mxu0 0
  %1070 = vmatpush1.bf16.msra.mxu0 %v65
  %1071 = vmatprep.subr.bf16.mxu0 0
  %1072 = vmatpush1.bf16.msra.mxu0 %v64
  %1073 = vmatprep.subr.bf16.mxu0 0
  %1074 = vmatpush2.bf16.msra.mxu0 0
  %1075 = vmatprep.subr.bf16.mxu0 0
  %1076 = vmatpush2.bf16.msra.mxu0 0
  %1077 = vmatprep.subr.bf16.mxu0 0
  %1078 = vmatpush2.bf16.msra.mxu0 0
  %1079 = vmatprep.subr.bf16.mxu0 0
  %1080 = vmatpush2.bf16.msra.mxu0 0
  %1081 = vmatprep.subr.bf16.mxu0 0
  %1082 = vmatpush2.bf16.msra.mxu0 0
  %1083 = vmatprep.subr.bf16.mxu0 0
  %1084 = vmatpush2.bf16.msra.mxu0 0
  %1085 = vmatprep.subr.bf16.mxu0 0
  %1086 = vmatpush2.bf16.msra.mxu0 0
  %1087 = vmatprep.subr.bf16.mxu0 0
  %1088 = vmatpush2.bf16.msra.mxu0 0
  %1089 = vmatprep.mubr.bf16.mxu0 0
  %1090 = vmatmul.mubr.bf16.gmra.mxu0 %v1055
  %v1091 = vpop.f32.mrf.mxu0
  %v1092 = vadd.f32 0.0, %v1091
  %v1093 = vpop.f32.mrf.mxu0
  %v1094 = vpop.f32.mrf.mxu0
  %v1095 = vpop.f32.mrf.mxu0
  %1096 = vdwg.mxu0
  %v1097 = vadd.f32 %v1049, %v1092
  %v1098 = vmul.f32 %v1097, 1.442695
  %v1099 = vpow.pop %v1098
  %v1100 = vtanh.pop %v1097
  %v1101 = vxor.u32 %v1097, 2147483648
  %v1102 = vmul.f32 %v1101, 1.442695
  %v1103 = vpow.pop %v1102
  %v1104 = vadd.f32 %v1103, 1.0
  %v1105 = vrcp.pop %v1104
  %v1106 = vmul.f32 1.0, %v1105
  %v1107 = vmul.f32 %v1099, %v1047
  %1109 = vrot.lane.b32.xlu0 %v1100, 64
  %v1110 = vpop.permute.xlu0 %1109
  %v1112 = vmul.f32 %v1099, %v1110
  %1114 = vrot.lane.b32.xlu0 %v1112, 32
  %v1115 = vpop.permute.xlu0 %1114
  %v1117 = vadd.f32 %v1107, %v1115
  %v1118 = vtanh.pop %v1117
  %1120 = vrot.lane.b32.xlu0 %v1118, 64
  %v1121 = vpop.permute.xlu0 %1120
  %v1123 = vmul.f32 %v1106, %v1121
  %s1124 = scalar_lea.vmem %s2, 48
  %v1125 = vld [vmem:[%s1124] sm:$0xff]
  %v1126 = vpack.c.bf16 %v1123, %v1123
  %1128 = vrot.lane.b32.xlu0 %v1126, 32
  %v1129 = vpop.permute.xlu0 %1128
  %v1131 = vsel %vm68, %v1129, 0
  %1133 = vmatprep.subr.bf16.mxu0 0
  %1134 = vmatpush1.bf16.msra.mxu0 0
  %1135 = vmatprep.subr.bf16.mxu0 0
  %1136 = vmatpush1.bf16.msra.mxu0 0
  %1137 = vmatprep.subr.bf16.mxu0 0
  %1138 = vmatpush1.bf16.msra.mxu0 0
  %1139 = vmatprep.subr.bf16.mxu0 0
  %1140 = vmatpush1.bf16.msra.mxu0 0
  %1141 = vmatprep.subr.bf16.mxu0 0
  %1142 = vmatpush1.bf16.msra.mxu0 0
  %1143 = vmatprep.subr.bf16.mxu0 0
  %1144 = vmatpush1.bf16.msra.mxu0 0
  %1145 = vmatprep.subr.bf16.mxu0 0
  %1146 = vmatpush1.bf16.msra.mxu0 %v163
  %1147 = vmatprep.subr.bf16.mxu0 0
  %1148 = vmatpush1.bf16.msra.mxu0 %v162
  %1149 = vmatprep.subr.bf16.mxu0 0
  %1150 = vmatpush2.bf16.msra.mxu0 0
  %1151 = vmatprep.subr.bf16.mxu0 0
  %1152 = vmatpush2.bf16.msra.mxu0 0
  %1153 = vmatprep.subr.bf16.mxu0 0
  %1154 = vmatpush2.bf16.msra.mxu0 0
  %1155 = vmatprep.subr.bf16.mxu0 0
  %1156 = vmatpush2.bf16.msra.mxu0 0
  %1157 = vmatprep.subr.bf16.mxu0 0
  %1158 = vmatpush2.bf16.msra.mxu0 0
  %1159 = vmatprep.subr.bf16.mxu0 0
  %1160 = vmatpush2.bf16.msra.mxu0 0
  %1161 = vmatprep.subr.bf16.mxu0 0
  %1162 = vmatpush2.bf16.msra.mxu0 0
  %1163 = vmatprep.subr.bf16.mxu0 0
  %1164 = vmatpush2.bf16.msra.mxu0 0
  %1165 = vmatprep.mubr.bf16.mxu0 0
  %1166 = vmatmul.mubr.bf16.gmra.mxu0 %v1131
  %v1167 = vpop.f32.mrf.mxu0
  %v1168 = vadd.f32 %v149, %v1167
  %v1169 = vpop.f32.mrf.mxu0
  %v1170 = vpop.f32.mrf.mxu0
  %v1171 = vpop.f32.mrf.mxu0
  %1172 = vdwg.mxu0
  %v1173 = vmul.f32 %v1168, 0.5
  %v1174 = vmul.f32 %v1168, 0.044715
  %v1175 = vmul.f32 %v1174, %v1168
  %v1176 = vmul.f32 %v1175, %v1168
  %v1177 = vadd.f32 %v1168, %v1176
  %v1178 = vmul.f32 %v1177, 0.7978846
  %v1179 = vtanh.pop %v1178
  %v1180 = vadd.f32 %v1179, 1.0
  %v1181 = vmul.f32 %v1173, %v1180
  %v1182 = vadd.f32 %v1181, %v1125
  %v1183 = vsel %vm68, %v1182, 0.0
  %1184 = vadd.xlane.f32.xlu0 %v1183
  %v1185 = vpop.xlane.xlu0 %1184
  %v1186 = vmul.f32 %v1185, %v222
  %v1187 = vsub.f32 %v1182, %v1186
  %v1188 = vmul.f32 %v1187, %v1187
  %v1189 = vsel %vm68, %v1188, 0.0
  %1190 = vadd.xlane.f32.xlu0 %v1189
  %v1191 = vpop.xlane.xlu0 %1190
  %v1192 = vmul.f32 %v1191, %v222
  %v1193 = vadd.f32 %v1192, 1e-05
  %v1194 = vrsqrt.pop %v1193
  %v1195 = vmul.f32 %v1187, %v1194
  %v1196 = vmul.f32 %v1195, %v237
  %v1197 = vadd.f32 %v1196, %v244
  %s1198 = scalar_lea.vmem %s7, 48
  %1199 = vst.msk [vmem:[%s1198] sm:$0xff] %vm68, %v1197
  %p1200 = scmp.gt.s32.totalorder %s40, 6
  %s1201 = scalar_select %p1200, 1, 0
  %v1202 = vstv %s1201
  %vm1203 = vcmp.eq.s32.totalorder %v1202, 1
  %v1204 = vsel %vm1203, %v1123, %v1046
  %v1205 = vsel %vm1203, %v1117, %v1047
  %s1206 = scalar_lea.vmem %s0, 56
  %v1207 = vld [vmem:[%s1206] sm:$0xff]
  %v1208 = vpack.c.bf16 %v1204, %v1204
  %1210 = vrot.lane.b32.xlu0 %v1208, 32
  %v1211 = vpop.permute.xlu0 %1210
  %v1213 = vsel %vm68, %v1211, 0
  %1215 = vmatprep.subr.bf16.mxu0 0
  %1216 = vmatpush1.bf16.msra.mxu0 0
  %1217 = vmatprep.subr.bf16.mxu0 0
  %1218 = vmatpush1.bf16.msra.mxu0 0
  %1219 = vmatprep.subr.bf16.mxu0 0
  %1220 = vmatpush1.bf16.msra.mxu0 0
  %1221 = vmatprep.subr.bf16.mxu0 0
  %1222 = vmatpush1.bf16.msra.mxu0 0
  %1223 = vmatprep.subr.bf16.mxu0 0
  %1224 = vmatpush1.bf16.msra.mxu0 0
  %1225 = vmatprep.subr.bf16.mxu0 0
  %1226 = vmatpush1.bf16.msra.mxu0 0
  %1227 = vmatprep.subr.bf16.mxu0 0
  %1228 = vmatpush1.bf16.msra.mxu0 %v65
  %1229 = vmatprep.subr.bf16.mxu0 0
  %1230 = vmatpush1.bf16.msra.mxu0 %v64
  %1231 = vmatprep.subr.bf16.mxu0 0
  %1232 = vmatpush2.bf16.msra.mxu0 0
  %1233 = vmatprep.subr.bf16.mxu0 0
  %1234 = vmatpush2.bf16.msra.mxu0 0
  %1235 = vmatprep.subr.bf16.mxu0 0
  %1236 = vmatpush2.bf16.msra.mxu0 0
  %1237 = vmatprep.subr.bf16.mxu0 0
  %1238 = vmatpush2.bf16.msra.mxu0 0
  %1239 = vmatprep.subr.bf16.mxu0 0
  %1240 = vmatpush2.bf16.msra.mxu0 0
  %1241 = vmatprep.subr.bf16.mxu0 0
  %1242 = vmatpush2.bf16.msra.mxu0 0
  %1243 = vmatprep.subr.bf16.mxu0 0
  %1244 = vmatpush2.bf16.msra.mxu0 0
  %1245 = vmatprep.subr.bf16.mxu0 0
  %1246 = vmatpush2.bf16.msra.mxu0 0
  %1247 = vmatprep.mubr.bf16.mxu0 0
  %1248 = vmatmul.mubr.bf16.gmra.mxu0 %v1213
  %v1249 = vpop.f32.mrf.mxu0
  %v1250 = vadd.f32 0.0, %v1249
  %v1251 = vpop.f32.mrf.mxu0
  %v1252 = vpop.f32.mrf.mxu0
  %v1253 = vpop.f32.mrf.mxu0
  %1254 = vdwg.mxu0
  %v1255 = vadd.f32 %v1207, %v1250
  %v1256 = vmul.f32 %v1255, 1.442695
  %v1257 = vpow.pop %v1256
  %v1258 = vtanh.pop %v1255
  %v1259 = vxor.u32 %v1255, 2147483648
  %v1260 = vmul.f32 %v1259, 1.442695
  %v1261 = vpow.pop %v1260
  %v1262 = vadd.f32 %v1261, 1.0
  %v1263 = vrcp.pop %v1262
  %v1264 = vmul.f32 1.0, %v1263
  %v1265 = vmul.f32 %v1257, %v1205
  %1267 = vrot.lane.b32.xlu0 %v1258, 64
  %v1268 = vpop.permute.xlu0 %1267
  %v1270 = vmul.f32 %v1257, %v1268
  %1272 = vrot.lane.b32.xlu0 %v1270, 32
  %v1273 = vpop.permute.xlu0 %1272
  %v1275 = vadd.f32 %v1265, %v1273
  %v1276 = vtanh.pop %v1275
  %1278 = vrot.lane.b32.xlu0 %v1276, 64
  %v1279 = vpop.permute.xlu0 %1278
  %v1281 = vmul.f32 %v1264, %v1279
  %s1282 = scalar_lea.vmem %s2, 56
  %v1283 = vld [vmem:[%s1282] sm:$0xff]
  %v1284 = vpack.c.bf16 %v1281, %v1281
  %1286 = vrot.lane.b32.xlu0 %v1284, 32
  %v1287 = vpop.permute.xlu0 %1286
  %v1289 = vsel %vm68, %v1287, 0
  %1291 = vmatprep.subr.bf16.mxu0 0
  %1292 = vmatpush1.bf16.msra.mxu0 0
  %1293 = vmatprep.subr.bf16.mxu0 0
  %1294 = vmatpush1.bf16.msra.mxu0 0
  %1295 = vmatprep.subr.bf16.mxu0 0
  %1296 = vmatpush1.bf16.msra.mxu0 0
  %1297 = vmatprep.subr.bf16.mxu0 0
  %1298 = vmatpush1.bf16.msra.mxu0 0
  %1299 = vmatprep.subr.bf16.mxu0 0
  %1300 = vmatpush1.bf16.msra.mxu0 0
  %1301 = vmatprep.subr.bf16.mxu0 0
  %1302 = vmatpush1.bf16.msra.mxu0 0
  %1303 = vmatprep.subr.bf16.mxu0 0
  %1304 = vmatpush1.bf16.msra.mxu0 %v163
  %1305 = vmatprep.subr.bf16.mxu0 0
  %1306 = vmatpush1.bf16.msra.mxu0 %v162
  %1307 = vmatprep.subr.bf16.mxu0 0
  %1308 = vmatpush2.bf16.msra.mxu0 0
  %1309 = vmatprep.subr.bf16.mxu0 0
  %1310 = vmatpush2.bf16.msra.mxu0 0
  %1311 = vmatprep.subr.bf16.mxu0 0
  %1312 = vmatpush2.bf16.msra.mxu0 0
  %1313 = vmatprep.subr.bf16.mxu0 0
  %1314 = vmatpush2.bf16.msra.mxu0 0
  %1315 = vmatprep.subr.bf16.mxu0 0
  %1316 = vmatpush2.bf16.msra.mxu0 0
  %1317 = vmatprep.subr.bf16.mxu0 0
  %1318 = vmatpush2.bf16.msra.mxu0 0
  %1319 = vmatprep.subr.bf16.mxu0 0
  %1320 = vmatpush2.bf16.msra.mxu0 0
  %1321 = vmatprep.subr.bf16.mxu0 0
  %1322 = vmatpush2.bf16.msra.mxu0 0
  %1323 = vmatprep.mubr.bf16.mxu0 0
  %1324 = vmatmul.mubr.bf16.gmra.mxu0 %v1289
  %v1325 = vpop.f32.mrf.mxu0
  %v1326 = vadd.f32 %v149, %v1325
  %v1327 = vpop.f32.mrf.mxu0
  %v1328 = vpop.f32.mrf.mxu0
  %v1329 = vpop.f32.mrf.mxu0
  %1330 = vdwg.mxu0
  %v1331 = vmul.f32 %v1326, 0.5
  %v1332 = vmul.f32 %v1326, 0.044715
  %v1333 = vmul.f32 %v1332, %v1326
  %v1334 = vmul.f32 %v1333, %v1326
  %v1335 = vadd.f32 %v1326, %v1334
  %v1336 = vmul.f32 %v1335, 0.7978846
  %v1337 = vtanh.pop %v1336
  %v1338 = vadd.f32 %v1337, 1.0
  %v1339 = vmul.f32 %v1331, %v1338
  %v1340 = vadd.f32 %v1339, %v1283
  %v1341 = vsel %vm68, %v1340, 0.0
  %1342 = vadd.xlane.f32.xlu0 %v1341
  %v1343 = vpop.xlane.xlu0 %1342
  %v1344 = vmul.f32 %v1343, %v222
  %v1345 = vsub.f32 %v1340, %v1344
  %v1346 = vmul.f32 %v1345, %v1345
  %v1347 = vsel %vm68, %v1346, 0.0
  %1348 = vadd.xlane.f32.xlu0 %v1347
  %v1349 = vpop.xlane.xlu0 %1348
  %v1350 = vmul.f32 %v1349, %v222
  %v1351 = vadd.f32 %v1350, 1e-05
  %v1352 = vrsqrt.pop %v1351
  %v1353 = vmul.f32 %v1345, %v1352
  %v1354 = vmul.f32 %v1353, %v237
  %v1355 = vadd.f32 %v1354, %v244
  %s1356 = scalar_lea.vmem %s7, 56
  %1357 = vst.msk [vmem:[%s1356] sm:$0xff] %vm68, %v1355
  %p1358 = scmp.gt.s32.totalorder %s40, 7
  %s1359 = scalar_select %p1358, 1, 0
  %v1360 = vstv %s1359
  %vm1361 = vcmp.eq.s32.totalorder %v1360, 1
  %v1362 = vsel %vm1361, %v1281, %v1204
  %v1363 = vsel %vm1361, %v1275, %v1205
  %1365 = vrot.lane.b32.xlu0 %v1362, 32
  %v1366 = vpop.permute.xlu0 %1365
  %1368 = vst.msk [vmem:[%s8] sm:$0xff] %vm68, %v1366
  %1370 = vrot.lane.b32.xlu0 %v1363, 96
  %v1371 = vpop.permute.xlu0 %1370
  %1373 = vst.msk [vmem:[%s9] sm:$0xff] %vm68, %v1371
  // Predicated region
  $region34: #{cnn_xlstm_forward.13} parent=0 // pred_check
    _
  $region35: #{cnn_xlstm_forward.13} parent=0 // pred_check_branch
    %1375 = sbr.rel (0) target = $region37
  $region36: #{cnn_xlstm_forward.13} parent=0 // pred_region
    _
  $region37: #{cnn_xlstm_forward.13} parent=0 // pred_fallthru
    _
  // Predicated region
  $region38: #{cnn_xlstm_forward.13} parent=0 // pred_check
    _
  $region39: #{cnn_xlstm_forward.13} parent=0 // pred_check_branch
    %1377 = sbr.rel (0) target = $region41
  $region40: #{cnn_xlstm_forward.13} parent=0 // pred_region
    _
  $region41: #{cnn_xlstm_forward.13} parent=0 // pred_fallthru
    _
  // Predicated region
  $region42: #{cnn_xlstm_forward.13} parent=0 // pred_check
    _
  $region43: #{cnn_xlstm_forward.13} parent=0 // pred_check_branch
    %1379 = sbr.rel (0) target = $region45
  $region44: #{cnn_xlstm_forward.13} parent=0 // pred_region
    _
  $region45: #{cnn_xlstm_forward.13} parent=0 // pred_fallthru
    _
  // Predicated region
  $region46: #{cnn_xlstm_forward.13} parent=0 // pred_check
    _
  $region47: #{cnn_xlstm_forward.13} parent=0 // pred_check_branch
    %1381 = sbr.rel (0) target = $region49
  $region48: #{cnn_xlstm_forward.13} parent=0 // pred_region
    _
  $region49: #{cnn_xlstm_forward.13} parent=0 // pred_fallthru
    _
  // Predicated region
  $region50: #{cnn_xlstm_forward.13} parent=0 // pred_check
    _
  $region51: #{cnn_xlstm_forward.13} parent=0 // pred_check_branch
    %1383 = sbr.rel (0) target = $region53
  $region52: #{cnn_xlstm_forward.13} parent=0 // pred_region
    _
  $region53: #{cnn_xlstm_forward.13} parent=0 // pred_fallthru
    _
  // Predicated region
  $region54: #{cnn_xlstm_forward.13} parent=0 // pred_check
    _
  $region55: #{cnn_xlstm_forward.13} parent=0 // pred_check_branch
    %1385 = sbr.rel (0) target = $region57
  $region56: #{cnn_xlstm_forward.13} parent=0 // pred_region
    _
  $region57: #{cnn_xlstm_forward.13} parent=0 // pred_fallthru
    _

// kernel: cnn_xlstm_forward.17
$region0: #{cnn_xlstm_forward.17}
  #allocation0 [shape = 'u32[]', space=smem, size = 0x4, offset = 0x4, fixed_abs, tag = 'smem constant byte address 0x4 - core index']
  #allocation1 [shape = 'u32[144,128]{1,0:T(1,128)}', space=vmem, size = 0x12000, scoped, tag = 'internal scratch']
  #allocation2 [shape = 'f32[1,1]{1,0:T(1,128)S(1)}', space=vmem, size = 0x200, scoped, tag = 'scoped memory for cnn_xlstm_forward.17']
  %s0 = inlined_call_operand.vmem [shape: f32[8,8,128], index: 0, kind: input, shape index: {}]
  %s1 = inlined_call_operand.vmem [shape: bf16[32,128], index: 1, kind: input, shape index: {}]
  %s2 = inlined_call_operand.vmem [shape: f32[8,8,32], index: 2, kind: input, shape index: {}]
  %s3 = inlined_call_operand.vmem [shape: bf16[32,32], index: 3, kind: input, shape index: {}]
  %s4 = inlined_call_operand.vmem [shape: f32[1,32], index: 4, kind: input, shape index: {}]
  %s5 = inlined_call_operand.vmem [shape: f32[1,32], index: 5, kind: input, shape index: {}]
  %s6 = inlined_call_operand.vmem [shape: f32[1,32], index: 6, kind: input, shape index: {}]
  %s7 = inlined_call_operand.vmem [shape: bf16[32,1], index: 7, kind: input, shape index: {}]
  %s8 = inlined_call_operand.<no memory space> [shape: f32[1,1], index: 8, kind: input, shape index: {}]
  %s9 = inlined_call_operand.vmem [shape: f32[8,1], index: 9, kind: output, shape index: {0}]
  %s10 = inlined_call_operand.vmem [shape: f32[8,32], index: 10, kind: output, shape index: {1}]
  %s11 = inlined_call_operand.vmem [shape: f32[8,32], index: 11, kind: output, shape index: {2}]
  %12 = xla_tuple %s9, %s10, %s11
  %s13 = sld [smem:[#allocation0]]
  $region70: #{cnn_xlstm_forward.17} parent=0
    _
  %s15 = ssub.s32 1, %s13
  %s16 = scalar_select 0, %s15, %s13
  %v17 = vstv %s8
  %18 = vst [vmem:[#allocation2] sm:$0x1] %v17
  // Predicated region
  $region2: #{cnn_xlstm_forward.17} parent=0 // pred_check
    _
  $region3: #{cnn_xlstm_forward.17} parent=0 // pred_check_branch
    %20 = sbr.rel (0) target = $region5
  $region4: #{cnn_xlstm_forward.17} parent=0 // pred_region
    _
  $region5: #{cnn_xlstm_forward.17} parent=0 // pred_fallthru
    _
  // Predicated region
  $region6: #{cnn_xlstm_forward.17} parent=0 // pred_check
    _
  $region7: #{cnn_xlstm_forward.17} parent=0 // pred_check_branch
    %22 = sbr.rel (0) target = $region9
  $region8: #{cnn_xlstm_forward.17} parent=0 // pred_region
    _
  $region9: #{cnn_xlstm_forward.17} parent=0 // pred_fallthru
    _
  // Predicated region
  $region10: #{cnn_xlstm_forward.17} parent=0 // pred_check
    _
  $region11: #{cnn_xlstm_forward.17} parent=0 // pred_check_branch
    %24 = sbr.rel (0) target = $region13
  $region12: #{cnn_xlstm_forward.17} parent=0 // pred_region
    %s25 = scalar_lea.vmem %s2, 56
  $region13: #{cnn_xlstm_forward.17} parent=0 // pred_fallthru
    _
  // Predicated region
  $region14: #{cnn_xlstm_forward.17} parent=0 // pred_check
    _
  $region15: #{cnn_xlstm_forward.17} parent=0 // pred_check_branch
    %27 = sbr.rel (0) target = $region17
  $region16: #{cnn_xlstm_forward.17} parent=0 // pred_region
    _
  $region17: #{cnn_xlstm_forward.17} parent=0 // pred_fallthru
    _
  // Predicated region
  $region18: #{cnn_xlstm_forward.17} parent=0 // pred_check
    _
  $region19: #{cnn_xlstm_forward.17} parent=0 // pred_check_branch
    %29 = sbr.rel (0) target = $region21
  $region20: #{cnn_xlstm_forward.17} parent=0 // pred_region
    _
  $region21: #{cnn_xlstm_forward.17} parent=0 // pred_fallthru
    _
  // Predicated region
  $region22: #{cnn_xlstm_forward.17} parent=0 // pred_check
    _
  $region23: #{cnn_xlstm_forward.17} parent=0 // pred_check_branch
    %31 = sbr.rel (0) target = $region25
  $region24: #{cnn_xlstm_forward.17} parent=0 // pred_region
    _
  $region25: #{cnn_xlstm_forward.17} parent=0 // pred_fallthru
    _
  // Predicated region
  $region26: #{cnn_xlstm_forward.17} parent=0 // pred_check
    _
  $region27: #{cnn_xlstm_forward.17} parent=0 // pred_check_branch
    %33 = sbr.rel (0) target = $region29
  $region28: #{cnn_xlstm_forward.17} parent=0 // pred_region
    _
  $region29: #{cnn_xlstm_forward.17} parent=0 // pred_fallthru
    _
  // Predicated region
  $region30: #{cnn_xlstm_forward.17} parent=0 // pred_check
    _
  $region31: #{cnn_xlstm_forward.17} parent=0 // pred_check_branch
    %35 = sbr.rel (0) target = $region33
  $region32: #{cnn_xlstm_forward.17} parent=0 // pred_region
    _
  $region33: #{cnn_xlstm_forward.17} parent=0 // pred_fallthru
    _
  // Predicated region
  $region34: #{cnn_xlstm_forward.17} parent=0 // pred_check
    _
  $region35: #{cnn_xlstm_forward.17} parent=0 // pred_check_branch
    %37 = sbr.rel (0) target = $region37
  $region36: #{cnn_xlstm_forward.17} parent=0 // pred_region
    _
  $region37: #{cnn_xlstm_forward.17} parent=0 // pred_fallthru
    _
  %s38 = scalar_lea.vmem %s2, 56
  %s39 = scalar_lea.vmem %s2, 56
  %p41 = scmp.eq.s32.totalorder 0, 0
  // Predicated region
  $region38: #{cnn_xlstm_forward.17} parent=0 // pred_check
    %p42 = pneg %p41
  $region39: #{cnn_xlstm_forward.17} parent=0 // pred_check_branch
    %44 = sbr.rel (%p42) target = $region41
  $region40: #{cnn_xlstm_forward.17} parent=0 // pred_region
    %vm45 = vcmask 261120
    %46 = vst.msk [vmem:[%s10] sm:$0xff] %vm45, 0.0
    %47 = vst.msk [vmem:[%s11] sm:$0xff] %vm45, 0.0
  $region41: #{cnn_xlstm_forward.17} parent=0 // pred_fallthru
    _
  %s48 = smul.u32 0, 8
  %s49 = ssub.s32 8, %s48
  %p50 = scmp.lt.s32.totalorder %s49, 8
  %s51 = scalar_select %p50, %s49, 8
  %v52 = vld [vmem:[%s1] sm:$0xf]
  %v53 = vld [vmem:[%s1 + $0x4] sm:$0xf]
  %v54 = vld [vmem:[%s1 + $0x8] sm:$0xf]
  %v55 = vld [vmem:[%s1 + $0xc] sm:$0xf]
  %v56 = vld [vmem:[%s10] sm:$0xff]
  %v57 = vld [vmem:[%s11] sm:$0xff]
  %v58 = vld [vmem:[%s0] sm:$0xff]
  %v59 = vpack.c.bf16 %v56, %v56
  %v64 = vunpack.c.l.b16 %v52
  %v65 = vunpack.c.l.b16 %v53
  %v66 = vunpack.c.l.b16 %v54
  %v67 = vunpack.c.l.b16 %v55
  %v68 = vpack.c.b16 %v65, %v64
  %v69 = vpack.c.b16 %v67, %v66
  %vm72 = vcmask 261120
  %v74 = vsel %vm72, %v59, 0
  %76 = vmatprep.subr.bf16.mxu0 0
  %77 = vmatpush1.bf16.msra.mxu0 0
  %78 = vmatprep.subr.bf16.mxu0 0
  %79 = vmatpush1.bf16.msra.mxu0 0
  %80 = vmatprep.subr.bf16.mxu0 0
  %81 = vmatpush1.bf16.msra.mxu0 0
  %82 = vmatprep.subr.bf16.mxu0 0
  %83 = vmatpush1.bf16.msra.mxu0 0
  %84 = vmatprep.subr.bf16.mxu0 0
  %85 = vmatpush1.bf16.msra.mxu0 0
  %86 = vmatprep.subr.bf16.mxu0 0
  %87 = vmatpush1.bf16.msra.mxu0 0
  %88 = vmatprep.subr.bf16.mxu0 0
  %89 = vmatpush1.bf16.msra.mxu0 %v69
  %90 = vmatprep.subr.bf16.mxu0 0
  %91 = vmatpush1.bf16.msra.mxu0 %v68
  %92 = vmatprep.subr.bf16.mxu0 0
  %93 = vmatpush2.bf16.msra.mxu0 0
  %94 = vmatprep.subr.bf16.mxu0 0
  %95 = vmatpush2.bf16.msra.mxu0 0
  %96 = vmatprep.subr.bf16.mxu0 0
  %97 = vmatpush2.bf16.msra.mxu0 0
  %98 = vmatprep.subr.bf16.mxu0 0
  %99 = vmatpush2.bf16.msra.mxu0 0
  %100 = vmatprep.subr.bf16.mxu0 0
  %101 = vmatpush2.bf16.msra.mxu0 0
  %102 = vmatprep.subr.bf16.mxu0 0
  %103 = vmatpush2.bf16.msra.mxu0 0
  %104 = vmatprep.subr.bf16.mxu0 0
  %105 = vmatpush2.bf16.msra.mxu0 0
  %106 = vmatprep.subr.bf16.mxu0 0
  %107 = vmatpush2.bf16.msra.mxu0 0
  %108 = vmatprep.mubr.bf16.mxu0 0
  %109 = vmatmul.mubr.bf16.gmra.mxu0 %v74
  %v110 = vpop.f32.mrf.mxu0
  %v111 = vadd.f32 0.0, %v110
  %v112 = vpop.f32.mrf.mxu0
  %v113 = vpop.f32.mrf.mxu0
  %v114 = vpop.f32.mrf.mxu0
  %115 = vdwg.mxu0
  %v116 = vadd.f32 %v58, %v111
  %v117 = vmul.f32 %v116, 1.442695
  %v118 = vpow.pop %v117
  %v119 = vtanh.pop %v116
  %v120 = vxor.u32 %v116, 2147483648
  %v121 = vmul.f32 %v120, 1.442695
  %v122 = vpow.pop %v121
  %v123 = vadd.f32 %v122, 1.0
  %v124 = vrcp.pop %v123
  %v125 = vmul.f32 1.0, %v124
  %127 = vrot.lane.b32.xlu0 %v57, 32
  %v128 = vpop.permute.xlu0 %127
  %v130 = vmul.f32 %v118, %v128
  %132 = vrot.lane.b32.xlu0 %v119, 64
  %v133 = vpop.permute.xlu0 %132
  %v135 = vmul.f32 %v118, %v133
  %137 = vrot.lane.b32.xlu0 %v135, 32
  %v138 = vpop.permute.xlu0 %137
  %v140 = vadd.f32 %v130, %v138
  %v141 = vtanh.pop %v140
  %143 = vrot.lane.b32.xlu0 %v141, 64
  %v144 = vpop.permute.xlu0 %143
  %v146 = vmul.f32 %v125, %v144
  %p147 = scmp.gt.s32.totalorder %s51, 0
  %s148 = scalar_select %p147, 1, 0
  %v149 = vstv %s148
  %vm150 = vcmp.eq.s32.totalorder %v149, 1
  %152 = vrot.lane.b32.xlu0 %v56, 96
  %v153 = vpop.permute.xlu0 %152
  %v155 = vsel %vm150, %v146, %v153
  %v156 = vsel %vm150, %v140, %v128
  %s157 = scalar_lea.vmem %s0, 8
  %v158 = vld [vmem:[%s157] sm:$0xff]
  %v159 = vpack.c.bf16 %v155, %v155
  %161 = vrot.lane.b32.xlu0 %v159, 32
  %v162 = vpop.permute.xlu0 %161
  %v164 = vsel %vm72, %v162, 0
  %166 = vmatprep.subr.bf16.mxu0 0
  %167 = vmatpush1.bf16.msra.mxu0 0
  %168 = vmatprep.subr.bf16.mxu0 0
  %169 = vmatpush1.bf16.msra.mxu0 0
  %170 = vmatprep.subr.bf16.mxu0 0
  %171 = vmatpush1.bf16.msra.mxu0 0
  %172 = vmatprep.subr.bf16.mxu0 0
  %173 = vmatpush1.bf16.msra.mxu0 0
  %174 = vmatprep.subr.bf16.mxu0 0
  %175 = vmatpush1.bf16.msra.mxu0 0
  %176 = vmatprep.subr.bf16.mxu0 0
  %177 = vmatpush1.bf16.msra.mxu0 0
  %178 = vmatprep.subr.bf16.mxu0 0
  %179 = vmatpush1.bf16.msra.mxu0 %v69
  %180 = vmatprep.subr.bf16.mxu0 0
  %181 = vmatpush1.bf16.msra.mxu0 %v68
  %182 = vmatprep.subr.bf16.mxu0 0
  %183 = vmatpush2.bf16.msra.mxu0 0
  %184 = vmatprep.subr.bf16.mxu0 0
  %185 = vmatpush2.bf16.msra.mxu0 0
  %186 = vmatprep.subr.bf16.mxu0 0
  %187 = vmatpush2.bf16.msra.mxu0 0
  %188 = vmatprep.subr.bf16.mxu0 0
  %189 = vmatpush2.bf16.msra.mxu0 0
  %190 = vmatprep.subr.bf16.mxu0 0
  %191 = vmatpush2.bf16.msra.mxu0 0
  %192 = vmatprep.subr.bf16.mxu0 0
  %193 = vmatpush2.bf16.msra.mxu0 0
  %194 = vmatprep.subr.bf16.mxu0 0
  %195 = vmatpush2.bf16.msra.mxu0 0
  %196 = vmatprep.subr.bf16.mxu0 0
  %197 = vmatpush2.bf16.msra.mxu0 0
  %198 = vmatprep.mubr.bf16.mxu0 0
  %199 = vmatmul.mubr.bf16.gmra.mxu0 %v164
  %v200 = vpop.f32.mrf.mxu0
  %v201 = vadd.f32 0.0, %v200
  %v202 = vpop.f32.mrf.mxu0
  %v203 = vpop.f32.mrf.mxu0
  %v204 = vpop.f32.mrf.mxu0
  %205 = vdwg.mxu0
  %v206 = vadd.f32 %v158, %v201
  %v207 = vmul.f32 %v206, 1.442695
  %v208 = vpow.pop %v207
  %v209 = vtanh.pop %v206
  %v210 = vxor.u32 %v206, 2147483648
  %v211 = vmul.f32 %v210, 1.442695
  %v212 = vpow.pop %v211
  %v213 = vadd.f32 %v212, 1.0
  %v214 = vrcp.pop %v213
  %v215 = vmul.f32 1.0, %v214
  %v216 = vmul.f32 %v208, %v156
  %218 = vrot.lane.b32.xlu0 %v209, 64
  %v219 = vpop.permute.xlu0 %218
  %v221 = vmul.f32 %v208, %v219
  %223 = vrot.lane.b32.xlu0 %v221, 32
  %v224 = vpop.permute.xlu0 %223
  %v226 = vadd.f32 %v216, %v224
  %v227 = vtanh.pop %v226
  %229 = vrot.lane.b32.xlu0 %v227, 64
  %v230 = vpop.permute.xlu0 %229
  %v232 = vmul.f32 %v215, %v230
  %p233 = scmp.gt.s32.totalorder %s51, 1
  %s234 = scalar_select %p233, 1, 0
  %v235 = vstv %s234
  %vm236 = vcmp.eq.s32.totalorder %v235, 1
  %v237 = vsel %vm236, %v232, %v155
  %v238 = vsel %vm236, %v226, %v156
  %s239 = scalar_lea.vmem %s0, 16
  %v240 = vld [vmem:[%s239] sm:$0xff]
  %v241 = vpack.c.bf16 %v237, %v237
  %243 = vrot.lane.b32.xlu0 %v241, 32
  %v244 = vpop.permute.xlu0 %243
  %v246 = vsel %vm72, %v244, 0
  %248 = vmatprep.subr.bf16.mxu0 0
  %249 = vmatpush1.bf16.msra.mxu0 0
  %250 = vmatprep.subr.bf16.mxu0 0
  %251 = vmatpush1.bf16.msra.mxu0 0
  %252 = vmatprep.subr.bf16.mxu0 0
  %253 = vmatpush1.bf16.msra.mxu0 0
  %254 = vmatprep.subr.bf16.mxu0 0
  %255 = vmatpush1.bf16.msra.mxu0 0
  %256 = vmatprep.subr.bf16.mxu0 0
  %257 = vmatpush1.bf16.msra.mxu0 0
  %258 = vmatprep.subr.bf16.mxu0 0
  %259 = vmatpush1.bf16.msra.mxu0 0
  %260 = vmatprep.subr.bf16.mxu0 0
  %261 = vmatpush1.bf16.msra.mxu0 %v69
  %262 = vmatprep.subr.bf16.mxu0 0
  %263 = vmatpush1.bf16.msra.mxu0 %v68
  %264 = vmatprep.subr.bf16.mxu0 0
  %265 = vmatpush2.bf16.msra.mxu0 0
  %266 = vmatprep.subr.bf16.mxu0 0
  %267 = vmatpush2.bf16.msra.mxu0 0
  %268 = vmatprep.subr.bf16.mxu0 0
  %269 = vmatpush2.bf16.msra.mxu0 0
  %270 = vmatprep.subr.bf16.mxu0 0
  %271 = vmatpush2.bf16.msra.mxu0 0
  %272 = vmatprep.subr.bf16.mxu0 0
  %273 = vmatpush2.bf16.msra.mxu0 0
  %274 = vmatprep.subr.bf16.mxu0 0
  %275 = vmatpush2.bf16.msra.mxu0 0
  %276 = vmatprep.subr.bf16.mxu0 0
  %277 = vmatpush2.bf16.msra.mxu0 0
  %278 = vmatprep.subr.bf16.mxu0 0
  %279 = vmatpush2.bf16.msra.mxu0 0
  %280 = vmatprep.mubr.bf16.mxu0 0
  %281 = vmatmul.mubr.bf16.gmra.mxu0 %v246
  %v282 = vpop.f32.mrf.mxu0
  %v283 = vadd.f32 0.0, %v282
  %v284 = vpop.f32.mrf.mxu0
  %v285 = vpop.f32.mrf.mxu0
  %v286 = vpop.f32.mrf.mxu0
  %287 = vdwg.mxu0
  %v288 = vadd.f32 %v240, %v283
  %v289 = vmul.f32 %v288, 1.442695
  %v290 = vpow.pop %v289
  %v291 = vtanh.pop %v288
  %v292 = vxor.u32 %v288, 2147483648
  %v293 = vmul.f32 %v292, 1.442695
  %v294 = vpow.pop %v293
  %v295 = vadd.f32 %v294, 1.0
  %v296 = vrcp.pop %v295
  %v297 = vmul.f32 1.0, %v296
  %v298 = vmul.f32 %v290, %v238
  %300 = vrot.lane.b32.xlu0 %v291, 64
  %v301 = vpop.permute.xlu0 %300
  %v303 = vmul.f32 %v290, %v301
  %305 = vrot.lane.b32.xlu0 %v303, 32
  %v306 = vpop.permute.xlu0 %305
  %v308 = vadd.f32 %v298, %v306
  %v309 = vtanh.pop %v308
  %311 = vrot.lane.b32.xlu0 %v309, 64
  %v312 = vpop.permute.xlu0 %311
  %v314 = vmul.f32 %v297, %v312
  %p315 = scmp.gt.s32.totalorder %s51, 2
  %s316 = scalar_select %p315, 1, 0
  %v317 = vstv %s316
  %vm318 = vcmp.eq.s32.totalorder %v317, 1
  %v319 = vsel %vm318, %v314, %v237
  %v320 = vsel %vm318, %v308, %v238
  %s321 = scalar_lea.vmem %s0, 24
  %v322 = vld [vmem:[%s321] sm:$0xff]
  %v323 = vpack.c.bf16 %v319, %v319
  %325 = vrot.lane.b32.xlu0 %v323, 32
  %v326 = vpop.permute.xlu0 %325
  %v328 = vsel %vm72, %v326, 0
  %330 = vmatprep.subr.bf16.mxu0 0
  %331 = vmatpush1.bf16.msra.mxu0 0
  %332 = vmatprep.subr.bf16.mxu0 0
  %333 = vmatpush1.bf16.msra.mxu0 0
  %334 = vmatprep.subr.bf16.mxu0 0
  %335 = vmatpush1.bf16.msra.mxu0 0
  %336 = vmatprep.subr.bf16.mxu0 0
  %337 = vmatpush1.bf16.msra.mxu0 0
  %338 = vmatprep.subr.bf16.mxu0 0
  %339 = vmatpush1.bf16.msra.mxu0 0
  %340 = vmatprep.subr.bf16.mxu0 0
  %341 = vmatpush1.bf16.msra.mxu0 0
  %342 = vmatprep.subr.bf16.mxu0 0
  %343 = vmatpush1.bf16.msra.mxu0 %v69
  %344 = vmatprep.subr.bf16.mxu0 0
  %345 = vmatpush1.bf16.msra.mxu0 %v68
  %346 = vmatprep.subr.bf16.mxu0 0
  %347 = vmatpush2.bf16.msra.mxu0 0
  %348 = vmatprep.subr.bf16.mxu0 0
  %349 = vmatpush2.bf16.msra.mxu0 0
  %350 = vmatprep.subr.bf16.mxu0 0
  %351 = vmatpush2.bf16.msra.mxu0 0
  %352 = vmatprep.subr.bf16.mxu0 0
  %353 = vmatpush2.bf16.msra.mxu0 0
  %354 = vmatprep.subr.bf16.mxu0 0
  %355 = vmatpush2.bf16.msra.mxu0 0
  %356 = vmatprep.subr.bf16.mxu0 0
  %357 = vmatpush2.bf16.msra.mxu0 0
  %358 = vmatprep.subr.bf16.mxu0 0
  %359 = vmatpush2.bf16.msra.mxu0 0
  %360 = vmatprep.subr.bf16.mxu0 0
  %361 = vmatpush2.bf16.msra.mxu0 0
  %362 = vmatprep.mubr.bf16.mxu0 0
  %363 = vmatmul.mubr.bf16.gmra.mxu0 %v328
  %v364 = vpop.f32.mrf.mxu0
  %v365 = vadd.f32 0.0, %v364
  %v366 = vpop.f32.mrf.mxu0
  %v367 = vpop.f32.mrf.mxu0
  %v368 = vpop.f32.mrf.mxu0
  %369 = vdwg.mxu0
  %v370 = vadd.f32 %v322, %v365
  %v371 = vmul.f32 %v370, 1.442695
  %v372 = vpow.pop %v371
  %v373 = vtanh.pop %v370
  %v374 = vxor.u32 %v370, 2147483648
  %v375 = vmul.f32 %v374, 1.442695
  %v376 = vpow.pop %v375
  %v377 = vadd.f32 %v376, 1.0
  %v378 = vrcp.pop %v377
  %v379 = vmul.f32 1.0, %v378
  %v380 = vmul.f32 %v372, %v320
  %382 = vrot.lane.b32.xlu0 %v373, 64
  %v383 = vpop.permute.xlu0 %382
  %v385 = vmul.f32 %v372, %v383
  %387 = vrot.lane.b32.xlu0 %v385, 32
  %v388 = vpop.permute.xlu0 %387
  %v390 = vadd.f32 %v380, %v388
  %v391 = vtanh.pop %v390
  %393 = vrot.lane.b32.xlu0 %v391, 64
  %v394 = vpop.permute.xlu0 %393
  %v396 = vmul.f32 %v379, %v394
  %p397 = scmp.gt.s32.totalorder %s51, 3
  %s398 = scalar_select %p397, 1, 0
  %v399 = vstv %s398
  %vm400 = vcmp.eq.s32.totalorder %v399, 1
  %v401 = vsel %vm400, %v396, %v319
  %v402 = vsel %vm400, %v390, %v320
  %s403 = scalar_lea.vmem %s0, 32
  %v404 = vld [vmem:[%s403] sm:$0xff]
  %v405 = vpack.c.bf16 %v401, %v401
  %407 = vrot.lane.b32.xlu0 %v405, 32
  %v408 = vpop.permute.xlu0 %407
  %v410 = vsel %vm72, %v408, 0
  %412 = vmatprep.subr.bf16.mxu0 0
  %413 = vmatpush1.bf16.msra.mxu0 0
  %414 = vmatprep.subr.bf16.mxu0 0
  %415 = vmatpush1.bf16.msra.mxu0 0
  %416 = vmatprep.subr.bf16.mxu0 0
  %417 = vmatpush1.bf16.msra.mxu0 0
  %418 = vmatprep.subr.bf16.mxu0 0
  %419 = vmatpush1.bf16.msra.mxu0 0
  %420 = vmatprep.subr.bf16.mxu0 0
  %421 = vmatpush1.bf16.msra.mxu0 0
  %422 = vmatprep.subr.bf16.mxu0 0
  %423 = vmatpush1.bf16.msra.mxu0 0
  %424 = vmatprep.subr.bf16.mxu0 0
  %425 = vmatpush1.bf16.msra.mxu0 %v69
  %426 = vmatprep.subr.bf16.mxu0 0
  %427 = vmatpush1.bf16.msra.mxu0 %v68
  %428 = vmatprep.subr.bf16.mxu0 0
  %429 = vmatpush2.bf16.msra.mxu0 0
  %430 = vmatprep.subr.bf16.mxu0 0
  %431 = vmatpush2.bf16.msra.mxu0 0
  %432 = vmatprep.subr.bf16.mxu0 0
  %433 = vmatpush2.bf16.msra.mxu0 0
  %434 = vmatprep.subr.bf16.mxu0 0
  %435 = vmatpush2.bf16.msra.mxu0 0
  %436 = vmatprep.subr.bf16.mxu0 0
  %437 = vmatpush2.bf16.msra.mxu0 0
  %438 = vmatprep.subr.bf16.mxu0 0
  %439 = vmatpush2.bf16.msra.mxu0 0
  %440 = vmatprep.subr.bf16.mxu0 0
  %441 = vmatpush2.bf16.msra.mxu0 0
  %442 = vmatprep.subr.bf16.mxu0 0
  %443 = vmatpush2.bf16.msra.mxu0 0
  %444 = vmatprep.mubr.bf16.mxu0 0
  %445 = vmatmul.mubr.bf16.gmra.mxu0 %v410
  %v446 = vpop.f32.mrf.mxu0
  %v447 = vadd.f32 0.0, %v446
  %v448 = vpop.f32.mrf.mxu0
  %v449 = vpop.f32.mrf.mxu0
  %v450 = vpop.f32.mrf.mxu0
  %451 = vdwg.mxu0
  %v452 = vadd.f32 %v404, %v447
  %v453 = vmul.f32 %v452, 1.442695
  %v454 = vpow.pop %v453
  %v455 = vtanh.pop %v452
  %v456 = vxor.u32 %v452, 2147483648
  %v457 = vmul.f32 %v456, 1.442695
  %v458 = vpow.pop %v457
  %v459 = vadd.f32 %v458, 1.0
  %v460 = vrcp.pop %v459
  %v461 = vmul.f32 1.0, %v460
  %v462 = vmul.f32 %v454, %v402
  %464 = vrot.lane.b32.xlu0 %v455, 64
  %v465 = vpop.permute.xlu0 %464
  %v467 = vmul.f32 %v454, %v465
  %469 = vrot.lane.b32.xlu0 %v467, 32
  %v470 = vpop.permute.xlu0 %469
  %v472 = vadd.f32 %v462, %v470
  %v473 = vtanh.pop %v472
  %475 = vrot.lane.b32.xlu0 %v473, 64
  %v476 = vpop.permute.xlu0 %475
  %v478 = vmul.f32 %v461, %v476
  %p479 = scmp.gt.s32.totalorder %s51, 4
  %s480 = scalar_select %p479, 1, 0
  %v481 = vstv %s480
  %vm482 = vcmp.eq.s32.totalorder %v481, 1
  %v483 = vsel %vm482, %v478, %v401
  %v484 = vsel %vm482, %v472, %v402
  %s485 = scalar_lea.vmem %s0, 40
  %v486 = vld [vmem:[%s485] sm:$0xff]
  %v487 = vpack.c.bf16 %v483, %v483
  %489 = vrot.lane.b32.xlu0 %v487, 32
  %v490 = vpop.permute.xlu0 %489
  %v492 = vsel %vm72, %v490, 0
  %494 = vmatprep.subr.bf16.mxu0 0
  %495 = vmatpush1.bf16.msra.mxu0 0
  %496 = vmatprep.subr.bf16.mxu0 0
  %497 = vmatpush1.bf16.msra.mxu0 0
  %498 = vmatprep.subr.bf16.mxu0 0
  %499 = vmatpush1.bf16.msra.mxu0 0
  %500 = vmatprep.subr.bf16.mxu0 0
  %501 = vmatpush1.bf16.msra.mxu0 0
  %502 = vmatprep.subr.bf16.mxu0 0
  %503 = vmatpush1.bf16.msra.mxu0 0
  %504 = vmatprep.subr.bf16.mxu0 0
  %505 = vmatpush1.bf16.msra.mxu0 0
  %506 = vmatprep.subr.bf16.mxu0 0
  %507 = vmatpush1.bf16.msra.mxu0 %v69
  %508 = vmatprep.subr.bf16.mxu0 0
  %509 = vmatpush1.bf16.msra.mxu0 %v68
  %510 = vmatprep.subr.bf16.mxu0 0
  %511 = vmatpush2.bf16.msra.mxu0 0
  %512 = vmatprep.subr.bf16.mxu0 0
  %513 = vmatpush2.bf16.msra.mxu0 0
  %514 = vmatprep.subr.bf16.mxu0 0
  %515 = vmatpush2.bf16.msra.mxu0 0
  %516 = vmatprep.subr.bf16.mxu0 0
  %517 = vmatpush2.bf16.msra.mxu0 0
  %518 = vmatprep.subr.bf16.mxu0 0
  %519 = vmatpush2.bf16.msra.mxu0 0
  %520 = vmatprep.subr.bf16.mxu0 0
  %521 = vmatpush2.bf16.msra.mxu0 0
  %522 = vmatprep.subr.bf16.mxu0 0
  %523 = vmatpush2.bf16.msra.mxu0 0
  %524 = vmatprep.subr.bf16.mxu0 0
  %525 = vmatpush2.bf16.msra.mxu0 0
  %526 = vmatprep.mubr.bf16.mxu0 0
  %527 = vmatmul.mubr.bf16.gmra.mxu0 %v492
  %v528 = vpop.f32.mrf.mxu0
  %v529 = vadd.f32 0.0, %v528
  %v530 = vpop.f32.mrf.mxu0
  %v531 = vpop.f32.mrf.mxu0
  %v532 = vpop.f32.mrf.mxu0
  %533 = vdwg.mxu0
  %v534 = vadd.f32 %v486, %v529
  %v535 = vmul.f32 %v534, 1.442695
  %v536 = vpow.pop %v535
  %v537 = vtanh.pop %v534
  %v538 = vxor.u32 %v534, 2147483648
  %v539 = vmul.f32 %v538, 1.442695
  %v540 = vpow.pop %v539
  %v541 = vadd.f32 %v540, 1.0
  %v542 = vrcp.pop %v541
  %v543 = vmul.f32 1.0, %v542
  %v544 = vmul.f32 %v536, %v484
  %546 = vrot.lane.b32.xlu0 %v537, 64
  %v547 = vpop.permute.xlu0 %546
  %v549 = vmul.f32 %v536, %v547
  %551 = vrot.lane.b32.xlu0 %v549, 32
  %v552 = vpop.permute.xlu0 %551
  %v554 = vadd.f32 %v544, %v552
  %v555 = vtanh.pop %v554
  %557 = vrot.lane.b32.xlu0 %v555, 64
  %v558 = vpop.permute.xlu0 %557
  %v560 = vmul.f32 %v543, %v558
  %p561 = scmp.gt.s32.totalorder %s51, 5
  %s562 = scalar_select %p561, 1, 0
  %v563 = vstv %s562
  %vm564 = vcmp.eq.s32.totalorder %v563, 1
  %v565 = vsel %vm564, %v560, %v483
  %v566 = vsel %vm564, %v554, %v484
  %s567 = scalar_lea.vmem %s0, 48
  %v568 = vld [vmem:[%s567] sm:$0xff]
  %v569 = vpack.c.bf16 %v565, %v565
  %571 = vrot.lane.b32.xlu0 %v569, 32
  %v572 = vpop.permute.xlu0 %571
  %v574 = vsel %vm72, %v572, 0
  %576 = vmatprep.subr.bf16.mxu0 0
  %577 = vmatpush1.bf16.msra.mxu0 0
  %578 = vmatprep.subr.bf16.mxu0 0
  %579 = vmatpush1.bf16.msra.mxu0 0
  %580 = vmatprep.subr.bf16.mxu0 0
  %581 = vmatpush1.bf16.msra.mxu0 0
  %582 = vmatprep.subr.bf16.mxu0 0
  %583 = vmatpush1.bf16.msra.mxu0 0
  %584 = vmatprep.subr.bf16.mxu0 0
  %585 = vmatpush1.bf16.msra.mxu0 0
  %586 = vmatprep.subr.bf16.mxu0 0
  %587 = vmatpush1.bf16.msra.mxu0 0
  %588 = vmatprep.subr.bf16.mxu0 0
  %589 = vmatpush1.bf16.msra.mxu0 %v69
  %590 = vmatprep.subr.bf16.mxu0 0
  %591 = vmatpush1.bf16.msra.mxu0 %v68
  %592 = vmatprep.subr.bf16.mxu0 0
  %593 = vmatpush2.bf16.msra.mxu0 0
  %594 = vmatprep.subr.bf16.mxu0 0
  %595 = vmatpush2.bf16.msra.mxu0 0
  %596 = vmatprep.subr.bf16.mxu0 0
  %597 = vmatpush2.bf16.msra.mxu0 0
  %598 = vmatprep.subr.bf16.mxu0 0
  %599 = vmatpush2.bf16.msra.mxu0 0
  %600 = vmatprep.subr.bf16.mxu0 0
  %601 = vmatpush2.bf16.msra.mxu0 0
  %602 = vmatprep.subr.bf16.mxu0 0
  %603 = vmatpush2.bf16.msra.mxu0 0
  %604 = vmatprep.subr.bf16.mxu0 0
  %605 = vmatpush2.bf16.msra.mxu0 0
  %606 = vmatprep.subr.bf16.mxu0 0
  %607 = vmatpush2.bf16.msra.mxu0 0
  %608 = vmatprep.mubr.bf16.mxu0 0
  %609 = vmatmul.mubr.bf16.gmra.mxu0 %v574
  %v610 = vpop.f32.mrf.mxu0
  %v611 = vadd.f32 0.0, %v610
  %v612 = vpop.f32.mrf.mxu0
  %v613 = vpop.f32.mrf.mxu0
  %v614 = vpop.f32.mrf.mxu0
  %615 = vdwg.mxu0
  %v616 = vadd.f32 %v568, %v611
  %v617 = vmul.f32 %v616, 1.442695
  %v618 = vpow.pop %v617
  %v619 = vtanh.pop %v616
  %v620 = vxor.u32 %v616, 2147483648
  %v621 = vmul.f32 %v620, 1.442695
  %v622 = vpow.pop %v621
  %v623 = vadd.f32 %v622, 1.0
  %v624 = vrcp.pop %v623
  %v625 = vmul.f32 1.0, %v624
  %v626 = vmul.f32 %v618, %v566
  %628 = vrot.lane.b32.xlu0 %v619, 64
  %v629 = vpop.permute.xlu0 %628
  %v631 = vmul.f32 %v618, %v629
  %633 = vrot.lane.b32.xlu0 %v631, 32
  %v634 = vpop.permute.xlu0 %633
  %v636 = vadd.f32 %v626, %v634
  %v637 = vtanh.pop %v636
  %639 = vrot.lane.b32.xlu0 %v637, 64
  %v640 = vpop.permute.xlu0 %639
  %v642 = vmul.f32 %v625, %v640
  %p643 = scmp.gt.s32.totalorder %s51, 6
  %s644 = scalar_select %p643, 1, 0
  %v645 = vstv %s644
  %vm646 = vcmp.eq.s32.totalorder %v645, 1
  %v647 = vsel %vm646, %v642, %v565
  %v648 = vsel %vm646, %v636, %v566
  %s649 = scalar_lea.vmem %s0, 56
  %v650 = vld [vmem:[%s649] sm:$0xff]
  %v651 = vpack.c.bf16 %v647, %v647
  %653 = vrot.lane.b32.xlu0 %v651, 32
  %v654 = vpop.permute.xlu0 %653
  %v656 = vsel %vm72, %v654, 0
  %658 = vmatprep.subr.bf16.mxu0 0
  %659 = vmatpush1.bf16.msra.mxu0 0
  %660 = vmatprep.subr.bf16.mxu0 0
  %661 = vmatpush1.bf16.msra.mxu0 0
  %662 = vmatprep.subr.bf16.mxu0 0
  %663 = vmatpush1.bf16.msra.mxu0 0
  %664 = vmatprep.subr.bf16.mxu0 0
  %665 = vmatpush1.bf16.msra.mxu0 0
  %666 = vmatprep.subr.bf16.mxu0 0
  %667 = vmatpush1.bf16.msra.mxu0 0
  %668 = vmatprep.subr.bf16.mxu0 0
  %669 = vmatpush1.bf16.msra.mxu0 0
  %670 = vmatprep.subr.bf16.mxu0 0
  %671 = vmatpush1.bf16.msra.mxu0 %v69
  %672 = vmatprep.subr.bf16.mxu0 0
  %673 = vmatpush1.bf16.msra.mxu0 %v68
  %674 = vmatprep.subr.bf16.mxu0 0
  %675 = vmatpush2.bf16.msra.mxu0 0
  %676 = vmatprep.subr.bf16.mxu0 0
  %677 = vmatpush2.bf16.msra.mxu0 0
  %678 = vmatprep.subr.bf16.mxu0 0
  %679 = vmatpush2.bf16.msra.mxu0 0
  %680 = vmatprep.subr.bf16.mxu0 0
  %681 = vmatpush2.bf16.msra.mxu0 0
  %682 = vmatprep.subr.bf16.mxu0 0
  %683 = vmatpush2.bf16.msra.mxu0 0
  %684 = vmatprep.subr.bf16.mxu0 0
  %685 = vmatpush2.bf16.msra.mxu0 0
  %686 = vmatprep.subr.bf16.mxu0 0
  %687 = vmatpush2.bf16.msra.mxu0 0
  %688 = vmatprep.subr.bf16.mxu0 0
  %689 = vmatpush2.bf16.msra.mxu0 0
  %690 = vmatprep.mubr.bf16.mxu0 0
  %691 = vmatmul.mubr.bf16.gmra.mxu0 %v656
  %v692 = vpop.f32.mrf.mxu0
  %v693 = vadd.f32 0.0, %v692
  %v694 = vpop.f32.mrf.mxu0
  %v695 = vpop.f32.mrf.mxu0
  %v696 = vpop.f32.mrf.mxu0
  %697 = vdwg.mxu0
  %v698 = vadd.f32 %v650, %v693
  %v699 = vmul.f32 %v698, 1.442695
  %v700 = vpow.pop %v699
  %v701 = vtanh.pop %v698
  %v702 = vxor.u32 %v698, 2147483648
  %v703 = vmul.f32 %v702, 1.442695
  %v704 = vpow.pop %v703
  %v705 = vadd.f32 %v704, 1.0
  %v706 = vrcp.pop %v705
  %v707 = vmul.f32 1.0, %v706
  %v708 = vmul.f32 %v700, %v648
  %710 = vrot.lane.b32.xlu0 %v701, 64
  %v711 = vpop.permute.xlu0 %710
  %v713 = vmul.f32 %v700, %v711
  %715 = vrot.lane.b32.xlu0 %v713, 32
  %v716 = vpop.permute.xlu0 %715
  %v718 = vadd.f32 %v708, %v716
  %v719 = vtanh.pop %v718
  %721 = vrot.lane.b32.xlu0 %v719, 64
  %v722 = vpop.permute.xlu0 %721
  %v724 = vmul.f32 %v707, %v722
  %p725 = scmp.gt.s32.totalorder %s51, 7
  %s726 = scalar_select %p725, 1, 0
  %v727 = vstv %s726
  %vm728 = vcmp.eq.s32.totalorder %v727, 1
  %v729 = vsel %vm728, %v724, %v647
  %v730 = vsel %vm728, %v718, %v648
  %732 = vrot.lane.b32.xlu0 %v729, 32
  %v733 = vpop.permute.xlu0 %732
  %735 = vst.msk [vmem:[%s10] sm:$0xff] %vm72, %v733
  %737 = vrot.lane.b32.xlu0 %v730, 96
  %v738 = vpop.permute.xlu0 %737
  %740 = vst.msk [vmem:[%s11] sm:$0xff] %vm72, %v738
  // Predicated region
  $region42: #{cnn_xlstm_forward.17} parent=0 // pred_check
    %p741 = pneg %p41
  $region43: #{cnn_xlstm_forward.17} parent=0 // pred_check_branch
    %743 = sbr.rel (%p741) target = $region45
  $region44: #{cnn_xlstm_forward.17} parent=0 // pred_region
    %v744 = vld [vmem:[%s39] sm:$0xff]
    %v745 = vld [vmem:[%s3] sm:$0xf]
    %v746 = vld [vmem:[%s3 + $0x4] sm:$0xf]
    %v747 = vld [vmem:[%s3 + $0x8] sm:$0xf]
    %v748 = vld [vmem:[%s3 + $0xc] sm:$0xf]
    %v749 = vld [vmem:[%s4] sm:$0x1]
    %v750 = vld [vmem:[%s5] sm:$0x1]
    %v751 = vld [vmem:[%s6] sm:$0x1]
    %v752 = vpack.c.bf16 %v729, %v729
    %v754 = vlaneseq
    %v755 = vshrl.u32 %v754, 7
    %v756 = vsub.s32 0, %v755
    %v757 = vrot.slane %v749, %v756
    %760 = vrot.lane.b32.xlu0 %v752, 32
    %v761 = vpop.permute.xlu0 %760
    %v766 = vunpack.c.l.b16 %v745
    %v767 = vunpack.c.l.b16 %v746
    %v768 = vunpack.c.l.b16 %v747
    %v769 = vunpack.c.l.b16 %v748
    %v770 = vpack.c.b16 %v767, %v766
    %v771 = vpack.c.b16 %v769, %v768
    %v775 = vsel %vm72, %v761, 0
    %777 = vmatprep.subr.bf16.mxu0 0
    %778 = vmatpush1.bf16.msra.mxu0 0
    %779 = vmatprep.subr.bf16.mxu0 0
    %780 = vmatpush1.bf16.msra.mxu0 0
    %781 = vmatprep.subr.bf16.mxu0 0
    %782 = vmatpush1.bf16.msra.mxu0 0
    %783 = vmatprep.subr.bf16.mxu0 0
    %784 = vmatpush1.bf16.msra.mxu0 0
    %785 = vmatprep.subr.bf16.mxu0 0
    %786 = vmatpush1.bf16.msra.mxu0 0
    %787 = vmatprep.subr.bf16.mxu0 0
    %788 = vmatpush1.bf16.msra.mxu0 0
    %789 = vmatprep.subr.bf16.mxu0 0
    %790 = vmatpush1.bf16.msra.mxu0 %v771
    %791 = vmatprep.subr.bf16.mxu0 0
    %792 = vmatpush1.bf16.msra.mxu0 %v770
    %793 = vmatprep.subr.bf16.mxu0 0
    %794 = vmatpush2.bf16.msra.mxu0 0
    %795 = vmatprep.subr.bf16.mxu0 0
    %796 = vmatpush2.bf16.msra.mxu0 0
    %797 = vmatprep.subr.bf16.mxu0 0
    %798 = vmatpush2.bf16.msra.mxu0 0
    %799 = vmatprep.subr.bf16.mxu0 0
    %800 = vmatpush2.bf16.msra.mxu0 0
    %801 = vmatprep.subr.bf16.mxu0 0
    %802 = vmatpush2.bf16.msra.mxu0 0
    %803 = vmatprep.subr.bf16.mxu0 0
    %804 = vmatpush2.bf16.msra.mxu0 0
    %805 = vmatprep.subr.bf16.mxu0 0
    %806 = vmatpush2.bf16.msra.mxu0 0
    %807 = vmatprep.subr.bf16.mxu0 0
    %808 = vmatpush2.bf16.msra.mxu0 0
    %809 = vmatprep.mubr.bf16.mxu0 0
    %810 = vmatmul.mubr.bf16.gmra.mxu0 %v775
    %v811 = vpop.f32.mrf.mxu0
    %v812 = vadd.f32 %v757, %v811
    %v813 = vpop.f32.mrf.mxu0
    %v814 = vpop.f32.mrf.mxu0
    %v815 = vpop.f32.mrf.mxu0
    %816 = vdwg.mxu0
    %v817 = vmul.f32 %v812, 0.5
    %v818 = vmul.f32 %v812, 0.044715
    %v819 = vmul.f32 %v818, %v812
    %v820 = vmul.f32 %v819, %v812
    %v821 = vadd.f32 %v812, %v820
    %v822 = vmul.f32 %v821, 0.7978846
    %v823 = vtanh.pop %v822
    %v824 = vadd.f32 %v823, 1.0
    %v825 = vmul.f32 %v817, %v824
    %v826 = vadd.f32 %v825, %v744
    %v827 = vsel %vm72, %v826, 0.0
    %828 = vadd.xlane.f32.xlu0 %v827
    %v829 = vpop.xlane.xlu0 %828
    %v830 = vrcp.pop 32.0
    %v831 = vmul.f32 %v829, %v830
    %v832 = vsub.f32 %v826, %v831
    %v833 = vmul.f32 %v832, %v832
    %v834 = vsel %vm72, %v833, 0.0
    %835 = vadd.xlane.f32.xlu0 %v834
    %v836 = vpop.xlane.xlu0 %835
    %v837 = vmul.f32 %v836, %v830
    %v838 = vadd.f32 %v837, 1e-05
    %v839 = vrsqrt.pop %v838
    %v840 = vmul.f32 %v832, %v839
    %v842 = vlaneseq
    %v843 = vshrl.u32 %v842, 7
    %v844 = vsub.s32 0, %v843
    %v845 = vrot.slane %v750, %v844
    %v847 = vmul.f32 %v840, %v845
    %v849 = vlaneseq
    %v850 = vshrl.u32 %v849, 7
    %v851 = vsub.s32 0, %v850
    %v852 = vrot.slane %v751, %v851
    %v854 = vadd.f32 %v847, %v852
    %v855 = vmul.f32 %v854, 0.5
    %v856 = vmul.f32 %v854, 0.044715
    %v857 = vmul.f32 %v856, %v854
    %v858 = vmul.f32 %v857, %v854
    %v859 = vadd.f32 %v854, %v858
    %v860 = vmul.f32 %v859, 0.7978846
    %v861 = vtanh.pop %v860
    %v862 = vadd.f32 %v861, 1.0
    %v863 = vmul.f32 %v855, %v862
    %v864 = vpack.c.bf16 %v863, %v863
    %v865 = vld [vmem:[%s7] sm:$0xf]
    %v866 = vld [vmem:[%s7 + $0x4] sm:$0xf]
    %v867 = vld [vmem:[%s7 + $0x8] sm:$0xf]
    %v868 = vld [vmem:[%s7 + $0xc] sm:$0xf]
    %v869 = vld [vmem:[#allocation2] sm:$0x1]
    %v871 = vlaneseq
    %v872 = vshrl.u32 %v871, 7
    %v873 = vsub.s32 0, %v872
    %v874 = vrot.slane %v869, %v873
    %v880 = vunpack.c.l.b16 %v865
    %v881 = vunpack.c.l.b16 %v866
    %v882 = vunpack.c.l.b16 %v867
    %v883 = vunpack.c.l.b16 %v868
    %v884 = vpack.c.b16 %v881, %v880
    %v885 = vpack.c.b16 %v883, %v882
    %v889 = vsel %vm72, %v864, 0
    %891 = vmatprep.subr.bf16.mxu0 0
    %892 = vmatpush1.bf16.msra.mxu0 0
    %893 = vmatprep.subr.bf16.mxu0 0
    %894 = vmatpush1.bf16.msra.mxu0 0
    %895 = vmatprep.subr.bf16.mxu0 0
    %896 = vmatpush1.bf16.msra.mxu0 0
    %897 = vmatprep.subr.bf16.mxu0 0
    %898 = vmatpush1.bf16.msra.mxu0 0
    %899 = vmatprep.subr.bf16.mxu0 0
    %900 = vmatpush1.bf16.msra.mxu0 0
    %901 = vmatprep.subr.bf16.mxu0 0
    %902 = vmatpush1.bf16.msra.mxu0 0
    %903 = vmatprep.subr.bf16.mxu0 0
    %904 = vmatpush1.bf16.msra.mxu0 %v885
    %905 = vmatprep.subr.bf16.mxu0 0
    %906 = vmatpush1.bf16.msra.mxu0 %v884
    %907 = vmatprep.subr.bf16.mxu0 0
    %908 = vmatpush2.bf16.msra.mxu0 0
    %909 = vmatprep.subr.bf16.mxu0 0
    %910 = vmatpush2.bf16.msra.mxu0 0
    %911 = vmatprep.subr.bf16.mxu0 0
    %912 = vmatpush2.bf16.msra.mxu0 0
    %913 = vmatprep.subr.bf16.mxu0 0
    %914 = vmatpush2.bf16.msra.mxu0 0
    %915 = vmatprep.subr.bf16.mxu0 0
    %916 = vmatpush2.bf16.msra.mxu0 0
    %917 = vmatprep.subr.bf16.mxu0 0
    %918 = vmatpush2.bf16.msra.mxu0 0
    %919 = vmatprep.subr.bf16.mxu0 0
    %920 = vmatpush2.bf16.msra.mxu0 0
    %921 = vmatprep.subr.bf16.mxu0 0
    %922 = vmatpush2.bf16.msra.mxu0 0
    %923 = vmatprep.mubr.bf16.mxu0 0
    %924 = vmatmul.mubr.bf16.gmra.mxu0 %v889
    %v925 = vpop.f32.mrf.mxu0
    %v926 = vadd.f32 %v874, %v925
    %v927 = vpop.f32.mrf.mxu0
    %v928 = vpop.f32.mrf.mxu0
    %v929 = vpop.f32.mrf.mxu0
    %930 = vdwg.mxu0
    %v931 = vxor.u32 %v926, 2147483648
    %v932 = vmul.f32 %v931, 1.442695
    %v933 = vpow.pop %v932
    %v934 = vadd.f32 %v933, 1.0
    %v935 = vrcp.pop %v934
    %v936 = vmul.f32 1.0, %v935
    %vm937 = vcmask 7168
    %938 = vst.msk [vmem:[%s9] sm:$0xff] %vm937, %v936
  $region45: #{cnn_xlstm_forward.17} parent=0 // pred_fallthru
    _
  // Predicated region
  $region46: #{cnn_xlstm_forward.17} parent=0 // pred_check
    _
  $region47: #{cnn_xlstm_forward.17} parent=0 // pred_check_branch
    %940 = sbr.rel (0) target = $region49
  $region48: #{cnn_xlstm_forward.17} parent=0 // pred_region
    _
  $region49: #{cnn_xlstm_forward.17} parent=0 // pred_fallthru
    _
  // Predicated region
  $region50: #{cnn_xlstm_forward.17} parent=0 // pred_check
    _
  $region51: #{cnn_xlstm_forward.17} parent=0 // pred_check_branch
    %942 = sbr.rel (0) target = $region53
  $region52: #{cnn_xlstm_forward.17} parent=0 // pred_region
    _
  $region53: #{cnn_xlstm_forward.17} parent=0 // pred_fallthru
    _
  // Predicated region
  $region54: #{cnn_xlstm_forward.17} parent=0 // pred_check
    _
  $region55: #{cnn_xlstm_forward.17} parent=0 // pred_check_branch
    %944 = sbr.rel (0) target = $region57
  $region56: #{cnn_xlstm_forward.17} parent=0 // pred_region
    _
  $region57: #{cnn_xlstm_forward.17} parent=0 // pred_fallthru
    _
  // Predicated region
  $region58: #{cnn_xlstm_forward.17} parent=0 // pred_check
    _
  $region59: #{cnn_xlstm_forward.17} parent=0 // pred_check_branch
    %946 = sbr.rel (0) target = $region61
  $region60: #{cnn_xlstm_forward.17} parent=0 // pred_region
    _
  $region61: #{cnn_xlstm_forward.17} parent=0 // pred_fallthru
    _
  // Predicated region
  $region62: #{cnn_xlstm_forward.17} parent=0 // pred_check
    _
  $region63: #{cnn_xlstm_forward.17} parent=0 // pred_check_branch
    %948 = sbr.rel (0) target = $region65
  $region64: #{cnn_xlstm_forward.17} parent=0 // pred_region
    _
  $region65: #{cnn_xlstm_forward.17} parent=0 // pred_fallthru
    _
  // Predicated region
  $region66: #{cnn_xlstm_forward.17} parent=0 // pred_check
    _
  $region67: #{cnn_xlstm_forward.17} parent=0 // pred_check_branch
    %950 = sbr.rel (0) target = $region69
  $region68: #{cnn_xlstm_forward.17} parent=0 // pred_region
    _
  $region69: #{cnn_xlstm_forward.17} parent=0 // pred_fallthru
    _

</llo_original>
